<compile_context>
chip_gen: v7x
topology: tpu7x:2x2x1
jax: 0.10.0
libtpu: 0.0.40
codegen_flags: <defaults>
</compile_context>

<pallas_src>
import functools

import jax
import jax.numpy as jnp
from jax import lax
from jax.experimental import pallas as pl
from jax.experimental.pallas import tpu as pltpu

# ----------------------------- configuration --------------------------------
N_CLS = 2          # two prompts: "Good photo..", "Bad photo.."
N_CTX = 8          # number of learnable "X" context tokens (CLIP-IQA uses 16)
SEQ = 32           # context length (CLIP uses 77)
DIM = 64           # transformer width
HEADS = 4
HEAD_DIM = DIM // HEADS
HIDDEN = 4 * DIM
LAYERS = 2
PROJ = 64          # text_projection output dim
NAME_LENS = [3, 3]
LN_EPS = 1e-5
NEG_INF = -1e9
N_TOK = N_CLS * SEQ            # both prompts packed along the row (M) axis

assert N_CLS == 2   # the simplified in-kernel attention mask assumes 2 packed classes


def _layernorm(x, w, b):
    mu = jnp.mean(x, axis=-1, keepdims=True)
    var = jnp.mean((x - mu) ** 2, axis=-1, keepdims=True)
    return (x - mu) * lax.rsqrt(var + LN_EPS) * w + b


# ----------------------- fused text-encoder kernel ---------------------------
def fused_text_encoder_kernel(
        eot_ref,                       # scalar prefetch: (N_CLS,) int32 in SMEM
        x_ref,                         # (N_TOK, DIM) f32   packed prompts (+pos emb)
        ln1w_ref, ln1b_ref,            # (1, DIM) f32                      [per layer]
        wq_ref, wk_ref, wv_ref,        # (DIM, DIM) bf16                   [per layer]
        bq_ref, bk_ref, bv_ref,        # (1, DIM) f32                      [per layer]
        wo_ref, bo_ref,                # (DIM, DIM) bf16 / (1, DIM) f32    [per layer]
        ln2w_ref, ln2b_ref,            # (1, DIM) f32                      [per layer]
        wfc_ref, bfc_ref,              # (DIM, HIDDEN) bf16 / (1, HIDDEN)  [per layer]
        wpr_ref, bpr_ref,              # (HIDDEN, DIM) bf16 / (1, DIM)     [per layer]
        lnfw_ref, lnfb_ref,            # (1, DIM) f32
        tproj_ref,                     # (DIM, PROJ) bf16
        o_ref,                         # (N_CLS, PROJ) f32
        x_sc, mask_sc):                # VMEM scratch: activations / additive mask
    f32 = jnp.float32
    bf16 = jnp.bfloat16
    l = pl.program_id(0)

    # ---- layer-0 prologue: load activations, build additive attention mask ----
    @pl.when(l == 0)
    def _prologue():
        x_sc[...] = x_ref[...]
        row = lax.broadcasted_iota(jnp.int32, (N_TOK, N_TOK), 0)
        col = lax.broadcasted_iota(jnp.int32, (N_TOK, N_TOK), 1)
        # causal + class-block-diagonal, specialised to N_CLS == 2 packed in rows
        masked = (col > row) | ((row >= SEQ) & (col < SEQ))
        mask_sc[...] = jnp.where(masked, NEG_INF, 0.0).astype(f32)

    x = x_sc[...]                                          # (N_TOK, DIM) f32
    mask_bias = mask_sc[...]
    scale = 1.0 / (HEAD_DIM ** 0.5)
    lane = lax.broadcasted_iota(jnp.int32, (1, DIM), 1)

    # ---- multi-head self attention (pre-LN); all matmuls lane-dense 64-wide ----
    h = _layernorm(x, ln1w_ref[...], ln1b_ref[...])
    hb = h.astype(bf16)
    q = jnp.dot(hb, wq_ref[...], preferred_element_type=f32) + bq_ref[...]
    k = jnp.dot(hb, wk_ref[...], preferred_element_type=f32) + bk_ref[...]
    v = jnp.dot(hb, wv_ref[...], preferred_element_type=f32) + bv_ref[...]
    q = q * scale
    kb = k.astype(bf16)

    # Per-head attention via lane masks (no 16-lane slices, no per-head weights):
    #   s_h        = (q . hm_h) @ k^T          == q_h @ k_h^T
    #   sum_h p_h @ (v . hm_h)                 == concat_h(p_h @ v_h)
    attn = None
    for hh in range(HEADS):
        hm = ((lane >= hh * HEAD_DIM) & (lane < (hh + 1) * HEAD_DIM)).astype(f32)
        s = lax.dot_general((q * hm).astype(bf16), kb, (((1,), (1,)), ((), ())),
                            preferred_element_type=f32) + mask_bias
        s = s - jnp.max(s, axis=-1, keepdims=True)
        p = jnp.exp(s)
        p = p * pl.reciprocal(jnp.sum(p, axis=-1, keepdims=True), approx=True)
        contrib = jnp.dot(p.astype(bf16), (v * hm).astype(bf16),
                          preferred_element_type=f32)
        attn = contrib if attn is None else attn + contrib
    # single full-width output projection (concat_h(o_h) @ Wo)
    attn = jnp.dot(attn.astype(bf16), wo_ref[...], preferred_element_type=f32) + bo_ref[...]
    x = x + attn

    # ---- MLP (QuickGELU, as in OpenAI CLIP) ----
    h2 = _layernorm(x, ln2w_ref[...], ln2b_ref[...])
    u = jnp.dot(h2.astype(bf16), wfc_ref[...], preferred_element_type=f32) + bfc_ref[...]
    u = u * jax.nn.sigmoid(1.702 * u)
    u = jnp.dot(u.astype(bf16), wpr_ref[...], preferred_element_type=f32) + bpr_ref[...]
    x = x + u
    x_sc[...] = x

    # ---- last-layer epilogue: EOT gather + ln_final + text projection ----
    @pl.when(l == LAYERS - 1)
    def _epilogue():
        r = lax.broadcasted_iota(jnp.int32, (N_CLS, N_TOK), 0)
        c = lax.broadcasted_iota(jnp.int32, (N_CLS, N_TOK), 1)
        target = jnp.zeros((N_CLS, N_TOK), jnp.int32)
        for i in range(N_CLS):
            target = jnp.where(r == i, eot_ref[i] + i * SEQ, target)
        onehot = (c == target).astype(f32)                       # (N_CLS, N_TOK)
        eot_rows = jnp.dot(onehot, x, preferred_element_type=f32)  # (N_CLS, DIM)
        eot_rows = _layernorm(eot_rows, lnfw_ref[...], lnfb_ref[...])
        o_ref[...] = jnp.dot(eot_rows.astype(bf16), tproj_ref[...],
                             preferred_element_type=f32)


def fused_text_encoder(x_packed, eot_idx, kp):
    """x_packed: (N_TOK, DIM) f32; eot_idx: (N_CLS,) int32; kp: packed weights."""
    args = [
        x_packed,
        kp['ln1_w'], kp['ln1_b'],
        kp['wq'], kp['wk'], kp['wv'],
        kp['bq'], kp['bk'], kp['bv'],
        kp['wo'], kp['bo'],
        kp['ln2_w'], kp['ln2_b'],
        kp['wfc'], kp['bfc'],
        kp['wpr'], kp['bpr'],
        kp['lnf_w'], kp['lnf_b'],
        kp['tproj'],
    ]

    def const_spec(a):
        return pl.BlockSpec(a.shape, lambda l, eot, _n=a.ndim: (0,) * _n)

    def layer_spec(a):  # (LAYERS, ...) -> per-layer block, layer dim squeezed
        return pl.BlockSpec((None,) + a.shape[1:],
                            lambda l, eot, _n=a.ndim - 1: (l,) + (0,) * _n)

    per_layer = ['ln1_w', 'ln1_b', 'wq', 'wk', 'wv', 'bq', 'bk', 'bv',
                 'wo', 'bo', 'ln2_w', 'ln2_b', 'wfc', 'bfc', 'wpr', 'bpr']
    in_specs = ([const_spec(x_packed)]
                + [layer_spec(kp[n]) for n in per_layer]
                + [const_spec(kp[n]) for n in ['lnf_w', 'lnf_b', 'tproj']])

    # advisory cost estimate so XLA schedules the surrounding glue ops sensibly
    per_layer_flops = (3 * 2 * N_TOK * DIM * DIM            # Q/K/V projections
                       + 2 * HEADS * 2 * N_TOK * N_TOK * DIM  # scores + P@V
                       + 2 * N_TOK * DIM * DIM               # output projection
                       + 2 * 2 * N_TOK * DIM * HIDDEN)       # MLP
    flops = LAYERS * per_layer_flops + 2 * N_CLS * N_TOK * DIM + 2 * N_CLS * DIM * PROJ
    transcendentals = LAYERS * (HEADS * N_TOK * N_TOK + N_TOK * HIDDEN)
    bytes_accessed = int(sum(a.size * jnp.dtype(a.dtype).itemsize for a in args)
                         + eot_idx.size * 4 + N_CLS * PROJ * 4)

    return pl.pallas_call(
        fused_text_encoder_kernel,
        out_shape=jax.ShapeDtypeStruct((N_CLS, PROJ), jnp.float32),
        grid_spec=pltpu.PrefetchScalarGridSpec(
            num_scalar_prefetch=1,            # eot_idx -> SMEM
            grid=(LAYERS,),                   # pipeline layer l+1 weights behind layer l
            in_specs=in_specs,
            out_specs=pl.BlockSpec((N_CLS, PROJ), lambda l, eot: (0, 0)),
            scratch_shapes=[pltpu.VMEM((N_TOK, DIM), jnp.float32),     # activations
                            pltpu.VMEM((N_TOK, N_TOK), jnp.float32)],  # additive mask
        ),
        compiler_params=pltpu.CompilerParams(dimension_semantics=("arbitrary",)),
        cost_estimate=pl.CostEstimate(flops=int(flops),
                                      transcendentals=int(transcendentals),
                                      bytes_accessed=bytes_accessed),
    )(eot_idx, *args)


# ------------------------------ glue (plain JAX) ----------------------------
def get_prompts_with_middle_class(ctx, token_prefix, token_suffix):
    """Exact re-implementation of PromptLearner.get_prompts_with_middel_class."""
    half = N_CTX // 2
    prompts = []
    for i in range(N_CLS):
        name_len = NAME_LENS[i]
        prefix_i = token_prefix[i:i + 1, :, :]
        class_i = token_suffix[i:i + 1, :name_len, :]
        suffix_i = token_suffix[i:i + 1, name_len:, :]
        ctx_i_half1 = ctx[i:i + 1, :half, :]
        ctx_i_half2 = ctx[i:i + 1, half:, :]
        prompts.append(jnp.concatenate(
            [prefix_i, ctx_i_half1, class_i, ctx_i_half2, suffix_i], axis=1))
    return jnp.concatenate(prompts, axis=0)


def make_tokenized_prompts():
    # synthetic stand-in for clip.tokenize: SOT, n_ctx "X"s, class tokens, ".", EOT, pad
    rows = []
    for name_len in NAME_LENS:
        row = [49406] + [343] * N_CTX + list(range(400, 400 + name_len)) + [269] + [49407]
        row = row + [0] * (SEQ - len(row))
        rows.append(row)
    return jnp.array(rows, dtype=jnp.int32)


def init_params(key):
    """Synthetic params in standard PyTorch (out, in) layouts."""
    ks = list(jax.random.split(key, 2 + 8 * LAYERS + 1))
    kit = iter(ks)
    p = {}
    p['init_embedding'] = 0.02 * jax.random.normal(next(kit), (N_CLS, SEQ, DIM), jnp.float32)
    p['pos_emb'] = 0.01 * jax.random.normal(next(kit), (SEQ, DIM), jnp.float32)
    layers = []
    for _ in range(LAYERS):
        layers.append(dict(
            ln1_w=jnp.ones((DIM,), jnp.float32), ln1_b=jnp.zeros((DIM,), jnp.float32),
            wqkv=0.02 * jax.random.normal(next(kit), (3 * DIM, DIM), jnp.float32),
            bqkv=0.01 * jax.random.normal(next(kit), (3 * DIM,), jnp.float32),
            wo=0.02 * jax.random.normal(next(kit), (DIM, DIM), jnp.float32),
            bo=0.01 * jax.random.normal(next(kit), (DIM,), jnp.float32),
            ln2_w=jnp.ones((DIM,), jnp.float32), ln2_b=jnp.zeros((DIM,), jnp.float32),
            wfc=0.02 * jax.random.normal(next(kit), (HIDDEN, DIM), jnp.float32),
            bfc=0.01 * jax.random.normal(next(kit), (HIDDEN,), jnp.float32),
            wproj=0.02 * jax.random.normal(next(kit), (DIM, HIDDEN), jnp.float32),
            bproj=0.01 * jax.random.normal(next(kit), (DIM,), jnp.float32),
        ))
    p['layers'] = layers
    p['lnf_w'] = jnp.ones((DIM,), jnp.float32)
    p['lnf_b'] = jnp.zeros((DIM,), jnp.float32)
    p['text_projection'] = 0.02 * jax.random.normal(next(kit), (DIM, PROJ), jnp.float32)
    return p


def pack_params(p):
    """One-time repack: (in, out) layouts, layer-stacked, lane-dense, bf16 weights."""
    bf16, f32 = jnp.bfloat16, jnp.float32
    wq, wk, wv, bq, bk, bv = [], [], [], [], [], []
    wo, bo, ln1w, ln1b, ln2w, ln2b = [], [], [], [], [], []
    wfc, bfc, wpr, bpr = [], [], [], []
    for L in p['layers']:
        wqkv_t = L['wqkv'].T                               # (DIM, 3*DIM): x @ W.T layout
        wq.append(wqkv_t[:, :DIM]); wk.append(wqkv_t[:, DIM:2 * DIM]); wv.append(wqkv_t[:, 2 * DIM:])
        bq.append(L['bqkv'][:DIM][None])
        bk.append(L['bqkv'][DIM:2 * DIM][None])
        bv.append(L['bqkv'][2 * DIM:][None])
        wo.append(L['wo'].T); bo.append(L['bo'][None])
        ln1w.append(L['ln1_w'][None]); ln1b.append(L['ln1_b'][None])
        ln2w.append(L['ln2_w'][None]); ln2b.append(L['ln2_b'][None])
        wfc.append(L['wfc'].T); bfc.append(L['bfc'][None])          # (DIM, HIDDEN)
        wpr.append(L['wproj'].T); bpr.append(L['bproj'][None])      # (HIDDEN, DIM)
    stk = lambda xs, dt: jnp.stack(xs).astype(dt)
    return dict(
        ln1_w=stk(ln1w, f32), ln1_b=stk(ln1b, f32),
        wq=stk(wq, bf16), wk=stk(wk, bf16), wv=stk(wv, bf16),
        bq=stk(bq, f32), bk=stk(bk, f32), bv=stk(bv, f32),
        wo=stk(wo, bf16), bo=stk(bo, f32),
        ln2_w=stk(ln2w, f32), ln2_b=stk(ln2b, f32),
        wfc=stk(wfc, bf16), bfc=stk(bfc, f32),
        wpr=stk(wpr, bf16), bpr=stk(bpr, f32),
        lnf_w=p['lnf_w'][None].astype(f32), lnf_b=p['lnf_b'][None].astype(f32),
        tproj=p['text_projection'].astype(bf16),
    )


def prompt_learner_forward(params, kp, tokenized_prompts):
    init_emb = params['init_embedding']
    ctx = init_emb[:, 1:1 + N_CTX]                 # learnable ctx (nn.Parameter)
    token_prefix = init_emb[:, :1, :]
    token_suffix = init_emb[:, 1 + N_CTX:, :]
    prompts = get_prompts_with_middle_class(ctx, token_prefix, token_suffix)  # (N, L, D)
    x = (prompts + params['pos_emb'][None, :, :]).reshape(N_TOK, DIM)         # pack classes
    eot_idx = jnp.argmax(tokenized_prompts, axis=-1).astype(jnp.int32)        # (N,)
    return fused_text_encoder(x, eot_idx, kp)      # single fused Pallas kernel


# --------------------------- pure-JAX reference ------------------------------
def reference_forward(params, tokenized_prompts):
    init_emb = params['init_embedding']
    ctx = init_emb[:, 1:1 + N_CTX]
    prompts = get_prompts_with_middle_class(ctx, init_emb[:, :1, :], init_emb[:, 1 + N_CTX:, :])
    x = prompts + params['pos_emb'][None, :, :]
    mask = jnp.triu(jnp.full((SEQ, SEQ), NEG_INF, jnp.float32), k=1)
    scale = 1.0 / (HEAD_DIM ** 0.5)
    for L in params['layers']:
        h = _layernorm(x, L['ln1_w'], L['ln1_b'])
        qkv = jnp.einsum('nld,ed->nle', h, L['wqkv']) + L['bqkv']
        q, k, v = qkv[..., :DIM], qkv[..., DIM:2 * DIM], qkv[..., 2 * DIM:]
        q = q.reshape(N_CLS, SEQ, HEADS, HEAD_DIM).transpose(0, 2, 1, 3)
        k = k.reshape(N_CLS, SEQ, HEADS, HEAD_DIM).transpose(0, 2, 1, 3)
        v = v.reshape(N_CLS, SEQ, HEADS, HEAD_DIM).transpose(0, 2, 1, 3)
        s = jnp.einsum('nhld,nhmd->nhlm', q * scale, k) + mask
        p = jax.nn.softmax(s, axis=-1)
        o = jnp.einsum('nhlm,nhmd->nhld', p, v).transpose(0, 2, 1, 3).reshape(N_CLS, SEQ, DIM)
        x = x + jnp.einsum('nld,ed->nle', o, L['wo']) + L['bo']
        h2 = _layernorm(x, L['ln2_w'], L['ln2_b'])
        u = jnp.einsum('nld,ed->nle', h2, L['wfc']) + L['bfc']
        u = u * jax.nn.sigmoid(1.702 * u)
        x = x + jnp.einsum('nle,de->nld', u, L['wproj']) + L['bproj']
    x = _layernorm(x, params['lnf_w'], params['lnf_b'])
    eot = jnp.argmax(tokenized_prompts, axis=-1)
    return x[jnp.arange(N_CLS), eot] @ params['text_projection']


if __name__ == "__main__":
    key = jax.random.PRNGKey(0)
    params = init_params(key)
    kp = pack_params(params)
    tokenized_prompts = make_tokenized_prompts()

    fwd = jax.jit(functools.partial(prompt_learner_forward, params, kp))
    out = jax.block_until_ready(fwd(tokenized_prompts))

    ref = jax.block_until_ready(
        jax.jit(functools.partial(reference_forward, params))(tokenized_prompts))

    assert out.shape == (N_CLS, PROJ), out.shape
    assert jnp.all(jnp.isfinite(out))
    err = float(jnp.max(jnp.abs(out - ref)))
    # tolerance covers bf16 weights + approx-reciprocal softmax vs f32 reference
    assert err < 5e-2, f"mismatch vs reference: max abs err = {err}"
    print("KERNEL_OK")
</pallas_src>

<mosaic_0001>
module attributes {stable_mosaic.version = 11 : i64} {
  func.func @fused_text_encoder_kernel(%arg0: i32, %arg1: memref<2xi32, #tpu.memory_space<smem>>, %arg2: memref<64x64xf32, #tpu.memory_space<vmem>>, %arg3: memref<1x1x64xf32, #tpu.memory_space<vmem>>, %arg4: memref<1x1x64xf32, #tpu.memory_space<vmem>>, %arg5: memref<1x64x64xbf16, #tpu.memory_space<vmem>>, %arg6: memref<1x64x64xbf16, #tpu.memory_space<vmem>>, %arg7: memref<1x64x64xbf16, #tpu.memory_space<vmem>>, %arg8: memref<1x1x64xf32, #tpu.memory_space<vmem>>, %arg9: memref<1x1x64xf32, #tpu.memory_space<vmem>>, %arg10: memref<1x1x64xf32, #tpu.memory_space<vmem>>, %arg11: memref<1x64x64xbf16, #tpu.memory_space<vmem>>, %arg12: memref<1x1x64xf32, #tpu.memory_space<vmem>>, %arg13: memref<1x1x64xf32, #tpu.memory_space<vmem>>, %arg14: memref<1x1x64xf32, #tpu.memory_space<vmem>>, %arg15: memref<1x64x256xbf16, #tpu.memory_space<vmem>>, %arg16: memref<1x1x256xf32, #tpu.memory_space<vmem>>, %arg17: memref<1x256x64xbf16, #tpu.memory_space<vmem>>, %arg18: memref<1x1x64xf32, #tpu.memory_space<vmem>>, %arg19: memref<1x64xf32, #tpu.memory_space<vmem>>, %arg20: memref<1x64xf32, #tpu.memory_space<vmem>>, %arg21: memref<64x64xbf16, #tpu.memory_space<vmem>>, %arg22: memref<2x64xf32, #tpu.memory_space<vmem>>, %arg23: memref<64x64xf32, #tpu.memory_space<vmem>>, %arg24: memref<64x64xf32, #tpu.memory_space<vmem>>) attributes {dimension_semantics = [#tpu.dimension_semantics<arbitrary>], iteration_bounds = array<i64: 2>, scalar_prefetch = 1 : i64, scratch_operands = 2 : i64, tpu.core_type = #tpu.core_type<tc>, window_params = [{pipeline_mode = #tpu.pipeline_mode<synchronous>, transform_indices = @transform_0, window_bounds = array<i64: 64, 64>}, {transform_indices = @transform_1, window_bounds = array<i64: 1, 1, 64>}, {transform_indices = @transform_2, window_bounds = array<i64: 1, 1, 64>}, {transform_indices = @transform_3, window_bounds = array<i64: 1, 64, 64>}, {transform_indices = @transform_4, window_bounds = array<i64: 1, 64, 64>}, {transform_indices = @transform_5, window_bounds = array<i64: 1, 64, 64>}, {transform_indices = @transform_6, window_bounds = array<i64: 1, 1, 64>}, {transform_indices = @transform_7, window_bounds = array<i64: 1, 1, 64>}, {transform_indices = @transform_8, window_bounds = array<i64: 1, 1, 64>}, {transform_indices = @transform_9, window_bounds = array<i64: 1, 64, 64>}, {transform_indices = @transform_10, window_bounds = array<i64: 1, 1, 64>}, {transform_indices = @transform_11, window_bounds = array<i64: 1, 1, 64>}, {transform_indices = @transform_12, window_bounds = array<i64: 1, 1, 64>}, {transform_indices = @transform_13, window_bounds = array<i64: 1, 64, 256>}, {transform_indices = @transform_14, window_bounds = array<i64: 1, 1, 256>}, {transform_indices = @transform_15, window_bounds = array<i64: 1, 256, 64>}, {transform_indices = @transform_16, window_bounds = array<i64: 1, 1, 64>}, {pipeline_mode = #tpu.pipeline_mode<synchronous>, transform_indices = @transform_17, window_bounds = array<i64: 1, 64>}, {pipeline_mode = #tpu.pipeline_mode<synchronous>, transform_indices = @transform_18, window_bounds = array<i64: 1, 64>}, {pipeline_mode = #tpu.pipeline_mode<synchronous>, transform_indices = @transform_19, window_bounds = array<i64: 64, 64>}, {pipeline_mode = #tpu.pipeline_mode<synchronous>, transform_indices = @transform_20, window_bounds = array<i64: 2, 64>}]} {
    %c0_i32 = arith.constant 0 : i32
    %0 = arith.cmpi eq, %arg0, %c0_i32 : i32
    %1 = arith.extui %0 : i1 to i32
    %c0_i32_0 = arith.constant 0 : i32
    %2 = arith.cmpi ne, %1, %c0_i32_0 : i32
    scf.if %2 {
      %c0_93 = arith.constant 0 : index
      %c0_94 = arith.constant 0 : index
      %232 = vector.load %arg2[%c0_93, %c0_94] : memref<64x64xf32, #tpu.memory_space<vmem>>, vector<64x64xf32>
      %c0_95 = arith.constant 0 : index
      %c0_96 = arith.constant 0 : index
      %233 = vector.load %arg23[%c0_95, %c0_96] : memref<64x64xf32, #tpu.memory_space<vmem>>, vector<64x64xf32>
      tpu.vector_store %arg23[%c0_95, %c0_96], %232 {strides = array<i32>} : memref<64x64xf32, #tpu.memory_space<vmem>>, vector<64x64xf32>,
      %234 = tpu.iota {dimensions = array<i32: 0>} : vector<64x64xi32>
      %235 = tpu.iota {dimensions = array<i32: 1>} : vector<64x64xi32>
      %236 = arith.cmpi sgt, %235, %234 : vector<64x64xi32>
      %c32_i32_97 = arith.constant 32 : i32
      %237 = vector.broadcast %c32_i32_97 : i32 to vector<64x64xi32>
      %238 = arith.cmpi sge, %234, %237 : vector<64x64xi32>
      %c32_i32_98 = arith.constant 32 : i32
      %239 = vector.broadcast %c32_i32_98 : i32 to vector<64x64xi32>
      %240 = arith.cmpi slt, %235, %239 : vector<64x64xi32>
      %241 = arith.andi %238, %240 : vector<64x64xi1>
      %242 = arith.ori %236, %241 : vector<64x64xi1>
      %cst_99 = arith.constant -1.000000e+09 : f32
      %cst_100 = arith.constant 0.000000e+00 : f32
      %243 = vector.broadcast %cst_99 : f32 to vector<64x64xf32>
      %244 = vector.broadcast %cst_100 : f32 to vector<64x64xf32>
      %245 = arith.select %242, %243, %244 : vector<64x64xi1>, vector<64x64xf32>
      %c0_101 = arith.constant 0 : index
      %c0_102 = arith.constant 0 : index
      %246 = vector.load %arg24[%c0_101, %c0_102] : memref<64x64xf32, #tpu.memory_space<vmem>>, vector<64x64xf32>
      tpu.vector_store %arg24[%c0_101, %c0_102], %245 {strides = array<i32>} : memref<64x64xf32, #tpu.memory_space<vmem>>, vector<64x64xf32>,
    } else {
    }
    %c0 = arith.constant 0 : index
    %c0_1 = arith.constant 0 : index
    %3 = vector.load %arg23[%c0, %c0_1] : memref<64x64xf32, #tpu.memory_space<vmem>>, vector<64x64xf32>
    %c0_2 = arith.constant 0 : index
    %c0_3 = arith.constant 0 : index
    %4 = vector.load %arg24[%c0_2, %c0_3] : memref<64x64xf32, #tpu.memory_space<vmem>>, vector<64x64xf32>
    %5 = tpu.iota {dimensions = array<i32: 1>} : vector<1x64xi32>
    %c0_4 = arith.constant 0 : index
    %c0_5 = arith.constant 0 : index
    %c0_6 = arith.constant 0 : index
    %6 = vector.load %arg3[%c0_4, %c0_5, %c0_6] : memref<1x1x64xf32, #tpu.memory_space<vmem>>, vector<1x1x64xf32>
    %7 = vector.shape_cast %6 : vector<1x1x64xf32> to vector<1x64xf32>
    %c0_7 = arith.constant 0 : index
    %c0_8 = arith.constant 0 : index
    %c0_9 = arith.constant 0 : index
    %8 = vector.load %arg4[%c0_7, %c0_8, %c0_9] : memref<1x1x64xf32, #tpu.memory_space<vmem>>, vector<1x1x64xf32>
    %9 = vector.shape_cast %8 : vector<1x1x64xf32> to vector<1x64xf32>
    %cst = arith.constant dense<0.000000e+00> : vector<64xf32>
    %10 = vector.multi_reduction <add>, %3, %cst [1] : vector<64x64xf32> to vector<64xf32>
    %11 = vector.shape_cast %10 : vector<64xf32> to vector<64x1xf32>
    %cst_10 = arith.constant 6.400000e+01 : f32
    %12 = vector.broadcast %cst_10 : f32 to vector<64x1xf32>
    %13 = arith.divf %11, %12 : vector<64x1xf32>
    %14 = vector.broadcast %13 : vector<64x1xf32> to vector<64x64xf32>
    %15 = arith.subf %3, %14 : vector<64x64xf32>
    %16 = arith.mulf %15, %15 : vector<64x64xf32>
    %cst_11 = arith.constant dense<0.000000e+00> : vector<64xf32>
    %17 = vector.multi_reduction <add>, %16, %cst_11 [1] : vector<64x64xf32> to vector<64xf32>
    %18 = vector.shape_cast %17 : vector<64xf32> to vector<64x1xf32>
    %cst_12 = arith.constant 6.400000e+01 : f32
    %19 = vector.broadcast %cst_12 : f32 to vector<64x1xf32>
    %20 = arith.divf %18, %19 : vector<64x1xf32>
    %21 = vector.broadcast %13 : vector<64x1xf32> to vector<64x64xf32>
    %22 = arith.subf %3, %21 : vector<64x64xf32>
    %cst_13 = arith.constant 9.99999974E-6 : f32
    %23 = vector.broadcast %cst_13 : f32 to vector<64x1xf32>
    %24 = arith.addf %20, %23 : vector<64x1xf32>
    %25 = math.rsqrt %24 : vector<64x1xf32>
    %26 = vector.broadcast %25 : vector<64x1xf32> to vector<64x64xf32>
    %27 = arith.mulf %22, %26 : vector<64x64xf32>
    %28 = vector.broadcast %7 : vector<1x64xf32> to vector<64x64xf32>
    %29 = arith.mulf %27, %28 : vector<64x64xf32>
    %30 = vector.broadcast %9 : vector<1x64xf32> to vector<64x64xf32>
    %31 = arith.addf %29, %30 : vector<64x64xf32>
    %32 = arith.truncf %31 : vector<64x64xf32> to vector<64x64xbf16>
    %c0_14 = arith.constant 0 : index
    %c0_15 = arith.constant 0 : index
    %c0_16 = arith.constant 0 : index
    %33 = vector.load %arg5[%c0_14, %c0_15, %c0_16] : memref<1x64x64xbf16, #tpu.memory_space<vmem>>, vector<1x64x64xbf16>
    %34 = vector.shape_cast %33 : vector<1x64x64xbf16> to vector<64x64xbf16>
    %cst_17 = arith.constant dense<0.000000e+00> : vector<64x64xf32>
    %35 = tpu.matmul %32, %34, %cst_17 {dimension_numbers = #tpu.dot_dimension_numbers<[1], [0], [0], [1], [0, 0, 1, 1], [], []>} : vector<64x64xbf16>, vector<64x64xbf16>, vector<64x64xf32> -> vector<64x64xf32>
    %c0_18 = arith.constant 0 : index
    %c0_19 = arith.constant 0 : index
    %c0_20 = arith.constant 0 : index
    %36 = vector.load %arg8[%c0_18, %c0_19, %c0_20] : memref<1x1x64xf32, #tpu.memory_space<vmem>>, vector<1x1x64xf32>
    %37 = vector.shape_cast %36 : vector<1x1x64xf32> to vector<1x64xf32>
    %38 = vector.broadcast %37 : vector<1x64xf32> to vector<64x64xf32>
    %39 = arith.addf %35, %38 : vector<64x64xf32>
    %c0_21 = arith.constant 0 : index
    %c0_22 = arith.constant 0 : index
    %c0_23 = arith.constant 0 : index
    %40 = vector.load %arg6[%c0_21, %c0_22, %c0_23] : memref<1x64x64xbf16, #tpu.memory_space<vmem>>, vector<1x64x64xbf16>
    %41 = vector.shape_cast %40 : vector<1x64x64xbf16> to vector<64x64xbf16>
    %cst_24 = arith.constant dense<0.000000e+00> : vector<64x64xf32>
    %42 = tpu.matmul %32, %41, %cst_24 {dimension_numbers = #tpu.dot_dimension_numbers<[1], [0], [0], [1], [0, 0, 1, 1], [], []>} : vector<64x64xbf16>, vector<64x64xbf16>, vector<64x64xf32> -> vector<64x64xf32>
    %c0_25 = arith.constant 0 : index
    %c0_26 = arith.constant 0 : index
    %c0_27 = arith.constant 0 : index
    %43 = vector.load %arg9[%c0_25, %c0_26, %c0_27] : memref<1x1x64xf32, #tpu.memory_space<vmem>>, vector<1x1x64xf32>
    %44 = vector.shape_cast %43 : vector<1x1x64xf32> to vector<1x64xf32>
    %45 = vector.broadcast %44 : vector<1x64xf32> to vector<64x64xf32>
    %46 = arith.addf %42, %45 : vector<64x64xf32>
    %c0_28 = arith.constant 0 : index
    %c0_29 = arith.constant 0 : index
    %c0_30 = arith.constant 0 : index
    %47 = vector.load %arg7[%c0_28, %c0_29, %c0_30] : memref<1x64x64xbf16, #tpu.memory_space<vmem>>, vector<1x64x64xbf16>
    %48 = vector.shape_cast %47 : vector<1x64x64xbf16> to vector<64x64xbf16>
    %cst_31 = arith.constant dense<0.000000e+00> : vector<64x64xf32>
    %49 = tpu.matmul %32, %48, %cst_31 {dimension_numbers = #tpu.dot_dimension_numbers<[1], [0], [0], [1], [0, 0, 1, 1], [], []>} : vector<64x64xbf16>, vector<64x64xbf16>, vector<64x64xf32> -> vector<64x64xf32>
    %c0_32 = arith.constant 0 : index
    %c0_33 = arith.constant 0 : index
    %c0_34 = arith.constant 0 : index
    %50 = vector.load %arg10[%c0_32, %c0_33, %c0_34] : memref<1x1x64xf32, #tpu.memory_space<vmem>>, vector<1x1x64xf32>
    %51 = vector.shape_cast %50 : vector<1x1x64xf32> to vector<1x64xf32>
    %52 = vector.broadcast %51 : vector<1x64xf32> to vector<64x64xf32>
    %53 = arith.addf %49, %52 : vector<64x64xf32>
    %cst_35 = arith.constant 2.500000e-01 : f32
    %54 = vector.broadcast %cst_35 : f32 to vector<64x64xf32>
    %55 = arith.mulf %39, %54 : vector<64x64xf32>
    %56 = arith.truncf %46 : vector<64x64xf32> to vector<64x64xbf16>
    %c0_i32_36 = arith.constant 0 : i32
    %57 = vector.broadcast %c0_i32_36 : i32 to vector<1x64xi32>
    %58 = arith.cmpi sge, %5, %57 : vector<1x64xi32>
    %c16_i32 = arith.constant 16 : i32
    %59 = vector.broadcast %c16_i32 : i32 to vector<1x64xi32>
    %60 = arith.cmpi slt, %5, %59 : vector<1x64xi32>
    %61 = arith.andi %58, %60 : vector<1x64xi1>
    %62 = arith.extui %61 : vector<1x64xi1> to vector<1x64xi32>
    %63 = arith.sitofp %62 : vector<1x64xi32> to vector<1x64xf32>
    %64 = vector.broadcast %63 : vector<1x64xf32> to vector<64x64xf32>
    %65 = arith.mulf %55, %64 : vector<64x64xf32>
    %66 = arith.truncf %65 : vector<64x64xf32> to vector<64x64xbf16>
    %cst_37 = arith.constant dense<0.000000e+00> : vector<64x64xf32>
    %67 = tpu.matmul %66, %56, %cst_37 {dimension_numbers = #tpu.dot_dimension_numbers<[1], [1], [0], [0], [0, 0, 1, 0], [], []>} : vector<64x64xbf16>, vector<64x64xbf16>, vector<64x64xf32> -> vector<64x64xf32>
    %68 = arith.addf %67, %4 : vector<64x64xf32>
    %cst_38 = arith.constant dense<0xFF800000> : vector<64xf32>
    %69 = vector.multi_reduction <maximumf>, %68, %cst_38 [1] : vector<64x64xf32> to vector<64xf32>
    %70 = vector.shape_cast %69 : vector<64xf32> to vector<64x1xf32>
    %71 = vector.broadcast %70 : vector<64x1xf32> to vector<64x64xf32>
    %72 = arith.subf %68, %71 : vector<64x64xf32>
    %73 = math.exp %72 : vector<64x64xf32>
    %cst_39 = arith.constant dense<0.000000e+00> : vector<64xf32>
    %74 = vector.multi_reduction <add>, %73, %cst_39 [1] : vector<64x64xf32> to vector<64xf32>
    %75 = vector.shape_cast %74 : vector<64xf32> to vector<64x1xf32>
    %76 = tpu.reciprocal %75 {approx = true} : vector<64x1xf32> -> vector<64x1xf32>
    %77 = vector.broadcast %76 : vector<64x1xf32> to vector<64x64xf32>
    %78 = arith.mulf %73, %77 : vector<64x64xf32>
    %79 = arith.truncf %78 : vector<64x64xf32> to vector<64x64xbf16>
    %80 = vector.broadcast %63 : vector<1x64xf32> to vector<64x64xf32>
    %81 = arith.mulf %53, %80 : vector<64x64xf32>
    %82 = arith.truncf %81 : vector<64x64xf32> to vector<64x64xbf16>
    %cst_40 = arith.constant dense<0.000000e+00> : vector<64x64xf32>
    %83 = tpu.matmul %79, %82, %cst_40 {dimension_numbers = #tpu.dot_dimension_numbers<[1], [0], [0], [1], [0, 0, 1, 1], [], []>} : vector<64x64xbf16>, vector<64x64xbf16>, vector<64x64xf32> -> vector<64x64xf32>
    %c16_i32_41 = arith.constant 16 : i32
    %84 = vector.broadcast %c16_i32_41 : i32 to vector<1x64xi32>
    %85 = arith.cmpi sge, %5, %84 : vector<1x64xi32>
    %c32_i32 = arith.constant 32 : i32
    %86 = vector.broadcast %c32_i32 : i32 to vector<1x64xi32>
    %87 = arith.cmpi slt, %5, %86 : vector<1x64xi32>
    %88 = arith.andi %85, %87 : vector<1x64xi1>
    %89 = arith.extui %88 : vector<1x64xi1> to vector<1x64xi32>
    %90 = arith.sitofp %89 : vector<1x64xi32> to vector<1x64xf32>
    %91 = vector.broadcast %90 : vector<1x64xf32> to vector<64x64xf32>
    %92 = arith.mulf %55, %91 : vector<64x64xf32>
    %93 = arith.truncf %92 : vector<64x64xf32> to vector<64x64xbf16>
    %cst_42 = arith.constant dense<0.000000e+00> : vector<64x64xf32>
    %94 = tpu.matmul %93, %56, %cst_42 {dimension_numbers = #tpu.dot_dimension_numbers<[1], [1], [0], [0], [0, 0, 1, 0], [], []>} : vector<64x64xbf16>, vector<64x64xbf16>, vector<64x64xf32> -> vector<64x64xf32>
    %95 = arith.addf %94, %4 : vector<64x64xf32>
    %cst_43 = arith.constant dense<0xFF800000> : vector<64xf32>
    %96 = vector.multi_reduction <maximumf>, %95, %cst_43 [1] : vector<64x64xf32> to vector<64xf32>
    %97 = vector.shape_cast %96 : vector<64xf32> to vector<64x1xf32>
    %98 = vector.broadcast %97 : vector<64x1xf32> to vector<64x64xf32>
    %99 = arith.subf %95, %98 : vector<64x64xf32>
    %100 = math.exp %99 : vector<64x64xf32>
    %cst_44 = arith.constant dense<0.000000e+00> : vector<64xf32>
    %101 = vector.multi_reduction <add>, %100, %cst_44 [1] : vector<64x64xf32> to vector<64xf32>
    %102 = vector.shape_cast %101 : vector<64xf32> to vector<64x1xf32>
    %103 = tpu.reciprocal %102 {approx = true} : vector<64x1xf32> -> vector<64x1xf32>
    %104 = vector.broadcast %103 : vector<64x1xf32> to vector<64x64xf32>
    %105 = arith.mulf %100, %104 : vector<64x64xf32>
    %106 = arith.truncf %105 : vector<64x64xf32> to vector<64x64xbf16>
    %107 = vector.broadcast %90 : vector<1x64xf32> to vector<64x64xf32>
    %108 = arith.mulf %53, %107 : vector<64x64xf32>
    %109 = arith.truncf %108 : vector<64x64xf32> to vector<64x64xbf16>
    %cst_45 = arith.constant dense<0.000000e+00> : vector<64x64xf32>
    %110 = tpu.matmul %106, %109, %cst_45 {dimension_numbers = #tpu.dot_dimension_numbers<[1], [0], [0], [1], [0, 0, 1, 1], [], []>} : vector<64x64xbf16>, vector<64x64xbf16>, vector<64x64xf32> -> vector<64x64xf32>
    %111 = arith.addf %83, %110 : vector<64x64xf32>
    %c32_i32_46 = arith.constant 32 : i32
    %112 = vector.broadcast %c32_i32_46 : i32 to vector<1x64xi32>
    %113 = arith.cmpi sge, %5, %112 : vector<1x64xi32>
    %c48_i32 = arith.constant 48 : i32
    %114 = vector.broadcast %c48_i32 : i32 to vector<1x64xi32>
    %115 = arith.cmpi slt, %5, %114 : vector<1x64xi32>
    %116 = arith.andi %113, %115 : vector<1x64xi1>
    %117 = arith.extui %116 : vector<1x64xi1> to vector<1x64xi32>
    %118 = arith.sitofp %117 : vector<1x64xi32> to vector<1x64xf32>
    %119 = vector.broadcast %118 : vector<1x64xf32> to vector<64x64xf32>
    %120 = arith.mulf %55, %119 : vector<64x64xf32>
    %121 = arith.truncf %120 : vector<64x64xf32> to vector<64x64xbf16>
    %cst_47 = arith.constant dense<0.000000e+00> : vector<64x64xf32>
    %122 = tpu.matmul %121, %56, %cst_47 {dimension_numbers = #tpu.dot_dimension_numbers<[1], [1], [0], [0], [0, 0, 1, 0], [], []>} : vector<64x64xbf16>, vector<64x64xbf16>, vector<64x64xf32> -> vector<64x64xf32>
    %123 = arith.addf %122, %4 : vector<64x64xf32>
    %cst_48 = arith.constant dense<0xFF800000> : vector<64xf32>
    %124 = vector.multi_reduction <maximumf>, %123, %cst_48 [1] : vector<64x64xf32> to vector<64xf32>
    %125 = vector.shape_cast %124 : vector<64xf32> to vector<64x1xf32>
    %126 = vector.broadcast %125 : vector<64x1xf32> to vector<64x64xf32>
    %127 = arith.subf %123, %126 : vector<64x64xf32>
    %128 = math.exp %127 : vector<64x64xf32>
    %cst_49 = arith.constant dense<0.000000e+00> : vector<64xf32>
    %129 = vector.multi_reduction <add>, %128, %cst_49 [1] : vector<64x64xf32> to vector<64xf32>
    %130 = vector.shape_cast %129 : vector<64xf32> to vector<64x1xf32>
    %131 = tpu.reciprocal %130 {approx = true} : vector<64x1xf32> -> vector<64x1xf32>
    %132 = vector.broadcast %131 : vector<64x1xf32> to vector<64x64xf32>
    %133 = arith.mulf %128, %132 : vector<64x64xf32>
    %134 = arith.truncf %133 : vector<64x64xf32> to vector<64x64xbf16>
    %135 = vector.broadcast %118 : vector<1x64xf32> to vector<64x64xf32>
    %136 = arith.mulf %53, %135 : vector<64x64xf32>
    %137 = arith.truncf %136 : vector<64x64xf32> to vector<64x64xbf16>
    %cst_50 = arith.constant dense<0.000000e+00> : vector<64x64xf32>
    %138 = tpu.matmul %134, %137, %cst_50 {dimension_numbers = #tpu.dot_dimension_numbers<[1], [0], [0], [1], [0, 0, 1, 1], [], []>} : vector<64x64xbf16>, vector<64x64xbf16>, vector<64x64xf32> -> vector<64x64xf32>
    %139 = arith.addf %111, %138 : vector<64x64xf32>
    %c48_i32_51 = arith.constant 48 : i32
    %140 = vector.broadcast %c48_i32_51 : i32 to vector<1x64xi32>
    %141 = arith.cmpi sge, %5, %140 : vector<1x64xi32>
    %c64_i32 = arith.constant 64 : i32
    %142 = vector.broadcast %c64_i32 : i32 to vector<1x64xi32>
    %143 = arith.cmpi slt, %5, %142 : vector<1x64xi32>
    %144 = arith.andi %141, %143 : vector<1x64xi1>
    %145 = arith.extui %144 : vector<1x64xi1> to vector<1x64xi32>
    %146 = arith.sitofp %145 : vector<1x64xi32> to vector<1x64xf32>
    %147 = vector.broadcast %146 : vector<1x64xf32> to vector<64x64xf32>
    %148 = arith.mulf %55, %147 : vector<64x64xf32>
    %149 = arith.truncf %148 : vector<64x64xf32> to vector<64x64xbf16>
    %cst_52 = arith.constant dense<0.000000e+00> : vector<64x64xf32>
    %150 = tpu.matmul %149, %56, %cst_52 {dimension_numbers = #tpu.dot_dimension_numbers<[1], [1], [0], [0], [0, 0, 1, 0], [], []>} : vector<64x64xbf16>, vector<64x64xbf16>, vector<64x64xf32> -> vector<64x64xf32>
    %151 = arith.addf %150, %4 : vector<64x64xf32>
    %cst_53 = arith.constant dense<0xFF800000> : vector<64xf32>
    %152 = vector.multi_reduction <maximumf>, %151, %cst_53 [1] : vector<64x64xf32> to vector<64xf32>
    %153 = vector.shape_cast %152 : vector<64xf32> to vector<64x1xf32>
    %154 = vector.broadcast %153 : vector<64x1xf32> to vector<64x64xf32>
    %155 = arith.subf %151, %154 : vector<64x64xf32>
    %156 = math.exp %155 : vector<64x64xf32>
    %cst_54 = arith.constant dense<0.000000e+00> : vector<64xf32>
    %157 = vector.multi_reduction <add>, %156, %cst_54 [1] : vector<64x64xf32> to vector<64xf32>
    %158 = vector.shape_cast %157 : vector<64xf32> to vector<64x1xf32>
    %159 = tpu.reciprocal %158 {approx = true} : vector<64x1xf32> -> vector<64x1xf32>
    %160 = vector.broadcast %159 : vector<64x1xf32> to vector<64x64xf32>
    %161 = arith.mulf %156, %160 : vector<64x64xf32>
    %162 = arith.truncf %161 : vector<64x64xf32> to vector<64x64xbf16>
    %163 = vector.broadcast %146 : vector<1x64xf32> to vector<64x64xf32>
    %164 = arith.mulf %53, %163 : vector<64x64xf32>
    %165 = arith.truncf %164 : vector<64x64xf32> to vector<64x64xbf16>
    %cst_55 = arith.constant dense<0.000000e+00> : vector<64x64xf32>
    %166 = tpu.matmul %162, %165, %cst_55 {dimension_numbers = #tpu.dot_dimension_numbers<[1], [0], [0], [1], [0, 0, 1, 1], [], []>} : vector<64x64xbf16>, vector<64x64xbf16>, vector<64x64xf32> -> vector<64x64xf32>
    %167 = arith.addf %139, %166 : vector<64x64xf32>
    %168 = arith.truncf %167 : vector<64x64xf32> to vector<64x64xbf16>
    %c0_56 = arith.constant 0 : index
    %c0_57 = arith.constant 0 : index
    %c0_58 = arith.constant 0 : index
    %169 = vector.load %arg11[%c0_56, %c0_57, %c0_58] : memref<1x64x64xbf16, #tpu.memory_space<vmem>>, vector<1x64x64xbf16>
    %170 = vector.shape_cast %169 : vector<1x64x64xbf16> to vector<64x64xbf16>
    %cst_59 = arith.constant dense<0.000000e+00> : vector<64x64xf32>
    %171 = tpu.matmul %168, %170, %cst_59 {dimension_numbers = #tpu.dot_dimension_numbers<[1], [0], [0], [1], [0, 0, 1, 1], [], []>} : vector<64x64xbf16>, vector<64x64xbf16>, vector<64x64xf32> -> vector<64x64xf32>
    %c0_60 = arith.constant 0 : index
    %c0_61 = arith.constant 0 : index
    %c0_62 = arith.constant 0 : index
    %172 = vector.load %arg12[%c0_60, %c0_61, %c0_62] : memref<1x1x64xf32, #tpu.memory_space<vmem>>, vector<1x1x64xf32>
    %173 = vector.shape_cast %172 : vector<1x1x64xf32> to vector<1x64xf32>
    %174 = vector.broadcast %173 : vector<1x64xf32> to vector<64x64xf32>
    %175 = arith.addf %171, %174 : vector<64x64xf32>
    %176 = arith.addf %3, %175 : vector<64x64xf32>
    %c0_63 = arith.constant 0 : index
    %c0_64 = arith.constant 0 : index
    %c0_65 = arith.constant 0 : index
    %177 = vector.load %arg13[%c0_63, %c0_64, %c0_65] : memref<1x1x64xf32, #tpu.memory_space<vmem>>, vector<1x1x64xf32>
    %178 = vector.shape_cast %177 : vector<1x1x64xf32> to vector<1x64xf32>
    %c0_66 = arith.constant 0 : index
    %c0_67 = arith.constant 0 : index
    %c0_68 = arith.constant 0 : index
    %179 = vector.load %arg14[%c0_66, %c0_67, %c0_68] : memref<1x1x64xf32, #tpu.memory_space<vmem>>, vector<1x1x64xf32>
    %180 = vector.shape_cast %179 : vector<1x1x64xf32> to vector<1x64xf32>
    %cst_69 = arith.constant dense<0.000000e+00> : vector<64xf32>
    %181 = vector.multi_reduction <add>, %176, %cst_69 [1] : vector<64x64xf32> to vector<64xf32>
    %182 = vector.shape_cast %181 : vector<64xf32> to vector<64x1xf32>
    %cst_70 = arith.constant 6.400000e+01 : f32
    %183 = vector.broadcast %cst_70 : f32 to vector<64x1xf32>
    %184 = arith.divf %182, %183 : vector<64x1xf32>
    %185 = vector.broadcast %184 : vector<64x1xf32> to vector<64x64xf32>
    %186 = arith.subf %176, %185 : vector<64x64xf32>
    %187 = arith.mulf %186, %186 : vector<64x64xf32>
    %cst_71 = arith.constant dense<0.000000e+00> : vector<64xf32>
    %188 = vector.multi_reduction <add>, %187, %cst_71 [1] : vector<64x64xf32> to vector<64xf32>
    %189 = vector.shape_cast %188 : vector<64xf32> to vector<64x1xf32>
    %cst_72 = arith.constant 6.400000e+01 : f32
    %190 = vector.broadcast %cst_72 : f32 to vector<64x1xf32>
    %191 = arith.divf %189, %190 : vector<64x1xf32>
    %192 = vector.broadcast %184 : vector<64x1xf32> to vector<64x64xf32>
    %193 = arith.subf %176, %192 : vector<64x64xf32>
    %cst_73 = arith.constant 9.99999974E-6 : f32
    %194 = vector.broadcast %cst_73 : f32 to vector<64x1xf32>
    %195 = arith.addf %191, %194 : vector<64x1xf32>
    %196 = math.rsqrt %195 : vector<64x1xf32>
    %197 = vector.broadcast %196 : vector<64x1xf32> to vector<64x64xf32>
    %198 = arith.mulf %193, %197 : vector<64x64xf32>
    %199 = vector.broadcast %178 : vector<1x64xf32> to vector<64x64xf32>
    %200 = arith.mulf %198, %199 : vector<64x64xf32>
    %201 = vector.broadcast %180 : vector<1x64xf32> to vector<64x64xf32>
    %202 = arith.addf %200, %201 : vector<64x64xf32>
    %203 = arith.truncf %202 : vector<64x64xf32> to vector<64x64xbf16>
    %c0_74 = arith.constant 0 : index
    %c0_75 = arith.constant 0 : index
    %c0_76 = arith.constant 0 : index
    %204 = vector.load %arg15[%c0_74, %c0_75, %c0_76] : memref<1x64x256xbf16, #tpu.memory_space<vmem>>, vector<1x64x256xbf16>
    %205 = vector.shape_cast %204 : vector<1x64x256xbf16> to vector<64x256xbf16>
    %cst_77 = arith.constant dense<0.000000e+00> : vector<64x256xf32>
    %206 = tpu.matmul %203, %205, %cst_77 {dimension_numbers = #tpu.dot_dimension_numbers<[1], [0], [0], [1], [0, 0, 1, 1], [], []>} : vector<64x64xbf16>, vector<64x256xbf16>, vector<64x256xf32> -> vector<64x256xf32>
    %c0_78 = arith.constant 0 : index
    %c0_79 = arith.constant 0 : index
    %c0_80 = arith.constant 0 : index
    %207 = vector.load %arg16[%c0_78, %c0_79, %c0_80] : memref<1x1x256xf32, #tpu.memory_space<vmem>>, vector<1x1x256xf32>
    %208 = vector.shape_cast %207 : vector<1x1x256xf32> to vector<1x256xf32>
    %209 = vector.broadcast %208 : vector<1x256xf32> to vector<64x256xf32>
    %210 = arith.addf %206, %209 : vector<64x256xf32>
    %cst_81 = arith.constant 1.702000e+00 : f32
    %211 = vector.broadcast %cst_81 : f32 to vector<64x256xf32>
    %212 = arith.mulf %211, %210 : vector<64x256xf32>
    %213 = arith.negf %212 : vector<64x256xf32>
    %214 = math.exp %213 : vector<64x256xf32>
    %cst_82 = arith.constant 1.000000e+00 : f32
    %215 = vector.broadcast %cst_82 : f32 to vector<64x256xf32>
    %216 = arith.addf %215, %214 : vector<64x256xf32>
    %217 = arith.divf %215, %216 : vector<64x256xf32>
    %218 = arith.mulf %210, %217 : vector<64x256xf32>
    %219 = arith.truncf %218 : vector<64x256xf32> to vector<64x256xbf16>
    %c0_83 = arith.constant 0 : index
    %c0_84 = arith.constant 0 : index
    %c0_85 = arith.constant 0 : index
    %220 = vector.load %arg17[%c0_83, %c0_84, %c0_85] : memref<1x256x64xbf16, #tpu.memory_space<vmem>>, vector<1x256x64xbf16>
    %221 = vector.shape_cast %220 : vector<1x256x64xbf16> to vector<256x64xbf16>
    %cst_86 = arith.constant dense<0.000000e+00> : vector<64x64xf32>
    %222 = tpu.matmul %219, %221, %cst_86 {dimension_numbers = #tpu.dot_dimension_numbers<[1], [0], [0], [1], [0, 0, 1, 1], [], []>} : vector<64x256xbf16>, vector<256x64xbf16>, vector<64x64xf32> -> vector<64x64xf32>
    %c0_87 = arith.constant 0 : index
    %c0_88 = arith.constant 0 : index
    %c0_89 = arith.constant 0 : index
    %223 = vector.load %arg18[%c0_87, %c0_88, %c0_89] : memref<1x1x64xf32, #tpu.memory_space<vmem>>, vector<1x1x64xf32>
    %224 = vector.shape_cast %223 : vector<1x1x64xf32> to vector<1x64xf32>
    %225 = vector.broadcast %224 : vector<1x64xf32> to vector<64x64xf32>
    %226 = arith.addf %222, %225 : vector<64x64xf32>
    %227 = arith.addf %176, %226 : vector<64x64xf32>
    %c0_90 = arith.constant 0 : index
    %c0_91 = arith.constant 0 : index
    %228 = vector.load %arg23[%c0_90, %c0_91] : memref<64x64xf32, #tpu.memory_space<vmem>>, vector<64x64xf32>
    tpu.vector_store %arg23[%c0_90, %c0_91], %227 {strides = array<i32>} : memref<64x64xf32, #tpu.memory_space<vmem>>, vector<64x64xf32>,
    %c1_i32 = arith.constant 1 : i32
    %229 = arith.cmpi eq, %arg0, %c1_i32 : i32
    %230 = arith.extui %229 : i1 to i32
    %c0_i32_92 = arith.constant 0 : i32
    %231 = arith.cmpi ne, %230, %c0_i32_92 : i32
    scf.if %231 {
      %232 = tpu.iota {dimensions = array<i32: 0>} : vector<2x64xi32>
      %233 = tpu.iota {dimensions = array<i32: 1>} : vector<2x64xi32>
      %c0_i32_93 = arith.constant 0 : i32
      %234 = vector.broadcast %c0_i32_93 : i32 to vector<2x64xi32>
      %c0_i32_94 = arith.constant 0 : i32
      %235 = vector.broadcast %c0_i32_94 : i32 to vector<2x64xi32>
      %236 = arith.cmpi eq, %232, %235 : vector<2x64xi32>
      %c0_95 = arith.constant 0 : index
      %237 = memref.load %arg1[%c0_95] : memref<2xi32, #tpu.memory_space<smem>>
      %c0_i32_96 = arith.constant 0 : i32
      %238 = arith.addi %237, %c0_i32_96 : i32
      %239 = vector.broadcast %238 : i32 to vector<2x64xi32>
      %240 = arith.select %236, %239, %234 : vector<2x64xi1>, vector<2x64xi32>
      %c1_i32_97 = arith.constant 1 : i32
      %241 = vector.broadcast %c1_i32_97 : i32 to vector<2x64xi32>
      %242 = arith.cmpi eq, %232, %241 : vector<2x64xi32>
      %c1 = arith.constant 1 : index
      %243 = memref.load %arg1[%c1] : memref<2xi32, #tpu.memory_space<smem>>
      %c32_i32_98 = arith.constant 32 : i32
      %244 = arith.addi %243, %c32_i32_98 : i32
      %245 = vector.broadcast %244 : i32 to vector<2x64xi32>
      %246 = arith.select %242, %245, %240 : vector<2x64xi1>, vector<2x64xi32>
      %247 = arith.cmpi eq, %233, %246 : vector<2x64xi32>
      %248 = arith.extui %247 : vector<2x64xi1> to vector<2x64xi32>
      %249 = arith.sitofp %248 : vector<2x64xi32> to vector<2x64xf32>
      %cst_99 = arith.constant dense<0.000000e+00> : vector<2x64xf32>
      %250 = tpu.matmul %249, %227, %cst_99 {dimension_numbers = #tpu.dot_dimension_numbers<[1], [0], [0], [1], [0, 0, 1, 1], [], []>} : vector<2x64xf32>, vector<64x64xf32>, vector<2x64xf32> -> vector<2x64xf32>
      %c0_100 = arith.constant 0 : index
      %c0_101 = arith.constant 0 : index
      %251 = vector.load %arg19[%c0_100, %c0_101] : memref<1x64xf32, #tpu.memory_space<vmem>>, vector<1x64xf32>
      %c0_102 = arith.constant 0 : index
      %c0_103 = arith.constant 0 : index
      %252 = vector.load %arg20[%c0_102, %c0_103] : memref<1x64xf32, #tpu.memory_space<vmem>>, vector<1x64xf32>
      %cst_104 = arith.constant dense<0.000000e+00> : vector<2xf32>
      %253 = vector.multi_reduction <add>, %250, %cst_104 [1] : vector<2x64xf32> to vector<2xf32>
      %254 = vector.shape_cast %253 : vector<2xf32> to vector<2x1xf32>
      %cst_105 = arith.constant 6.400000e+01 : f32
      %255 = vector.broadcast %cst_105 : f32 to vector<2x1xf32>
      %256 = arith.divf %254, %255 : vector<2x1xf32>
      %257 = vector.broadcast %256 : vector<2x1xf32> to vector<2x64xf32>
      %258 = arith.subf %250, %257 : vector<2x64xf32>
      %259 = arith.mulf %258, %258 : vector<2x64xf32>
      %cst_106 = arith.constant dense<0.000000e+00> : vector<2xf32>
      %260 = vector.multi_reduction <add>, %259, %cst_106 [1] : vector<2x64xf32> to vector<2xf32>
      %261 = vector.shape_cast %260 : vector<2xf32> to vector<2x1xf32>
      %cst_107 = arith.constant 6.400000e+01 : f32
      %262 = vector.broadcast %cst_107 : f32 to vector<2x1xf32>
      %263 = arith.divf %261, %262 : vector<2x1xf32>
      %264 = vector.broadcast %256 : vector<2x1xf32> to vector<2x64xf32>
      %265 = arith.subf %250, %264 : vector<2x64xf32>
      %cst_108 = arith.constant 9.99999974E-6 : f32
      %266 = vector.broadcast %cst_108 : f32 to vector<2x1xf32>
      %267 = arith.addf %263, %266 : vector<2x1xf32>
      %268 = math.rsqrt %267 : vector<2x1xf32>
      %269 = vector.broadcast %268 : vector<2x1xf32> to vector<2x64xf32>
      %270 = arith.mulf %265, %269 : vector<2x64xf32>
      %271 = vector.broadcast %251 : vector<1x64xf32> to vector<2x64xf32>
      %272 = arith.mulf %270, %271 : vector<2x64xf32>
      %273 = vector.broadcast %252 : vector<1x64xf32> to vector<2x64xf32>
      %274 = arith.addf %272, %273 : vector<2x64xf32>
      %275 = arith.truncf %274 : vector<2x64xf32> to vector<2x64xbf16>
      %c0_109 = arith.constant 0 : index
      %c0_110 = arith.constant 0 : index
      %276 = vector.load %arg21[%c0_109, %c0_110] : memref<64x64xbf16, #tpu.memory_space<vmem>>, vector<64x64xbf16>
      %cst_111 = arith.constant dense<0.000000e+00> : vector<2x64xf32>
      %277 = tpu.matmul %275, %276, %cst_111 {dimension_numbers = #tpu.dot_dimension_numbers<[1], [0], [0], [1], [0, 0, 1, 1], [], []>} : vector<2x64xbf16>, vector<64x64xbf16>, vector<2x64xf32> -> vector<2x64xf32>
      %c0_112 = arith.constant 0 : index
      %c0_113 = arith.constant 0 : index
      %278 = vector.load %arg22[%c0_112, %c0_113] : memref<2x64xf32, #tpu.memory_space<vmem>>, vector<2x64xf32>
      tpu.vector_store %arg22[%c0_112, %c0_113], %277 {strides = array<i32>} : memref<2x64xf32, #tpu.memory_space<vmem>>, vector<2x64xf32>,
    } else {
    }
    return
  }
  func.func @transform_0(%arg0: i32, %arg1: memref<2xi32, #tpu.memory_space<smem>>) -> (i32, i32) {
    %c0_i32 = arith.constant 0 : i32
    %c0_i32_0 = arith.constant 0 : i32
    %c0_i32_1 = arith.constant 0 : i32
    return %c0_i32, %c0_i32_0 : i32, i32
  }
  func.func @transform_1(%arg0: i32, %arg1: memref<2xi32, #tpu.memory_space<smem>>) -> (i32, i32, i32) {
    %c0_i32 = arith.constant 0 : i32
    %c0_i32_0 = arith.constant 0 : i32
    %c0_i32_1 = arith.constant 0 : i32
    return %arg0, %c0_i32, %c0_i32_0 : i32, i32, i32
  }
  func.func @transform_2(%arg0: i32, %arg1: memref<2xi32, #tpu.memory_space<smem>>) -> (i32, i32, i32) {
    %c0_i32 = arith.constant 0 : i32
    %c0_i32_0 = arith.constant 0 : i32
    %c0_i32_1 = arith.constant 0 : i32
    return %arg0, %c0_i32, %c0_i32_0 : i32, i32, i32
  }
  func.func @transform_3(%arg0: i32, %arg1: memref<2xi32, #tpu.memory_space<smem>>) -> (i32, i32, i32) {
    %c0_i32 = arith.constant 0 : i32
    %c0_i32_0 = arith.constant 0 : i32
    %c0_i32_1 = arith.constant 0 : i32
    return %arg0, %c0_i32, %c0_i32_0 : i32, i32, i32
  }
  func.func @transform_4(%arg0: i32, %arg1: memref<2xi32, #tpu.memory_space<smem>>) -> (i32, i32, i32) {
    %c0_i32 = arith.constant 0 : i32
    %c0_i32_0 = arith.constant 0 : i32
    %c0_i32_1 = arith.constant 0 : i32
    return %arg0, %c0_i32, %c0_i32_0 : i32, i32, i32
  }
  func.func @transform_5(%arg0: i32, %arg1: memref<2xi32, #tpu.memory_space<smem>>) -> (i32, i32, i32) {
    %c0_i32 = arith.constant 0 : i32
    %c0_i32_0 = arith.constant 0 : i32
    %c0_i32_1 = arith.constant 0 : i32
    return %arg0, %c0_i32, %c0_i32_0 : i32, i32, i32
  }
  func.func @transform_6(%arg0: i32, %arg1: memref<2xi32, #tpu.memory_space<smem>>) -> (i32, i32, i32) {
    %c0_i32 = arith.constant 0 : i32
    %c0_i32_0 = arith.constant 0 : i32
    %c0_i32_1 = arith.constant 0 : i32
    return %arg0, %c0_i32, %c0_i32_0 : i32, i32, i32
  }
  func.func @transform_7(%arg0: i32, %arg1: memref<2xi32, #tpu.memory_space<smem>>) -> (i32, i32, i32) {
    %c0_i32 = arith.constant 0 : i32
    %c0_i32_0 = arith.constant 0 : i32
    %c0_i32_1 = arith.constant 0 : i32
    return %arg0, %c0_i32, %c0_i32_0 : i32, i32, i32
  }
  func.func @transform_8(%arg0: i32, %arg1: memref<2xi32, #tpu.memory_space<smem>>) -> (i32, i32, i32) {
    %c0_i32 = arith.constant 0 : i32
    %c0_i32_0 = arith.constant 0 : i32
    %c0_i32_1 = arith.constant 0 : i32
    return %arg0, %c0_i32, %c0_i32_0 : i32, i32, i32
  }
  func.func @transform_9(%arg0: i32, %arg1: memref<2xi32, #tpu.memory_space<smem>>) -> (i32, i32, i32) {
    %c0_i32 = arith.constant 0 : i32
    %c0_i32_0 = arith.constant 0 : i32
    %c0_i32_1 = arith.constant 0 : i32
    return %arg0, %c0_i32, %c0_i32_0 : i32, i32, i32
  }
  func.func @transform_10(%arg0: i32, %arg1: memref<2xi32, #tpu.memory_space<smem>>) -> (i32, i32, i32) {
    %c0_i32 = arith.constant 0 : i32
    %c0_i32_0 = arith.constant 0 : i32
    %c0_i32_1 = arith.constant 0 : i32
    return %arg0, %c0_i32, %c0_i32_0 : i32, i32, i32
  }
  func.func @transform_11(%arg0: i32, %arg1: memref<2xi32, #tpu.memory_space<smem>>) -> (i32, i32, i32) {
    %c0_i32 = arith.constant 0 : i32
    %c0_i32_0 = arith.constant 0 : i32
    %c0_i32_1 = arith.constant 0 : i32
    return %arg0, %c0_i32, %c0_i32_0 : i32, i32, i32
  }
  func.func @transform_12(%arg0: i32, %arg1: memref<2xi32, #tpu.memory_space<smem>>) -> (i32, i32, i32) {
    %c0_i32 = arith.constant 0 : i32
    %c0_i32_0 = arith.constant 0 : i32
    %c0_i32_1 = arith.constant 0 : i32
    return %arg0, %c0_i32, %c0_i32_0 : i32, i32, i32
  }
  func.func @transform_13(%arg0: i32, %arg1: memref<2xi32, #tpu.memory_space<smem>>) -> (i32, i32, i32) {
    %c0_i32 = arith.constant 0 : i32
    %c0_i32_0 = arith.constant 0 : i32
    %c0_i32_1 = arith.constant 0 : i32
    return %arg0, %c0_i32, %c0_i32_0 : i32, i32, i32
  }
  func.func @transform_14(%arg0: i32, %arg1: memref<2xi32, #tpu.memory_space<smem>>) -> (i32, i32, i32) {
    %c0_i32 = arith.constant 0 : i32
    %c0_i32_0 = arith.constant 0 : i32
    %c0_i32_1 = arith.constant 0 : i32
    return %arg0, %c0_i32, %c0_i32_0 : i32, i32, i32
  }
  func.func @transform_15(%arg0: i32, %arg1: memref<2xi32, #tpu.memory_space<smem>>) -> (i32, i32, i32) {
    %c0_i32 = arith.constant 0 : i32
    %c0_i32_0 = arith.constant 0 : i32
    %c0_i32_1 = arith.constant 0 : i32
    return %arg0, %c0_i32, %c0_i32_0 : i32, i32, i32
  }
  func.func @transform_16(%arg0: i32, %arg1: memref<2xi32, #tpu.memory_space<smem>>) -> (i32, i32, i32) {
    %c0_i32 = arith.constant 0 : i32
    %c0_i32_0 = arith.constant 0 : i32
    %c0_i32_1 = arith.constant 0 : i32
    return %arg0, %c0_i32, %c0_i32_0 : i32, i32, i32
  }
  func.func @transform_17(%arg0: i32, %arg1: memref<2xi32, #tpu.memory_space<smem>>) -> (i32, i32) {
    %c0_i32 = arith.constant 0 : i32
    %c0_i32_0 = arith.constant 0 : i32
    %c0_i32_1 = arith.constant 0 : i32
    return %c0_i32, %c0_i32_0 : i32, i32
  }
  func.func @transform_18(%arg0: i32, %arg1: memref<2xi32, #tpu.memory_space<smem>>) -> (i32, i32) {
    %c0_i32 = arith.constant 0 : i32
    %c0_i32_0 = arith.constant 0 : i32
    %c0_i32_1 = arith.constant 0 : i32
    return %c0_i32, %c0_i32_0 : i32, i32
  }
  func.func @transform_19(%arg0: i32, %arg1: memref<2xi32, #tpu.memory_space<smem>>) -> (i32, i32) {
    %c0_i32 = arith.constant 0 : i32
    %c0_i32_0 = arith.constant 0 : i32
    %c0_i32_1 = arith.constant 0 : i32
    return %c0_i32, %c0_i32_0 : i32, i32
  }
  func.func @transform_20(%arg0: i32, %arg1: memref<2xi32, #tpu.memory_space<smem>>) -> (i32, i32) {
    %c0_i32 = arith.constant 0 : i32
    %c0_i32_0 = arith.constant 0 : i32
    %c0_i32_1 = arith.constant 0 : i32
    return %c0_i32, %c0_i32_0 : i32, i32
  }
}

</mosaic_0001>

<llo_original>
// kernel: prompt_learner_forward.1
$region0: #{prompt_learner_forward.1}
  #allocation0 [shape = 'u32[]', space=smem, size = 0x4, offset = 0x4, fixed_abs, tag = 'smem constant byte address 0x4 - core index']
  #allocation1 [shape = 'u32[144,128]{1,0:T(1,128)}', space=vmem, size = 0x12000, scoped, tag = 'internal scratch']
  #allocation2 [shape = 'f32[64,64]{1,0:T(8,128)}', space=vmem, size = 0x8000, scoped, tag = 'scratch operand']
  #allocation3 [shape = 'f32[64,64]{1,0:T(8,128)}', space=vmem, size = 0x8000, scoped, tag = 'scratch operand']
  #allocation4 [shape = 's32[1]{0}', space=sflag, size = 0x4, scoped, tag = 'scoped memory for prompt_learner_forward.1']
  #allocation5 [shape = 'u8[512]{0}', space=smem, size = 0x200, scoped, tag = 'prefetched SMEM operand 0']
  %s0 = inlined_call_operand.vmem [shape: s32[2], index: 0, kind: input, shape index: {}]
  %s1 = inlined_call_operand.hbm [shape: f32[64,64], index: 1, kind: input, shape index: {}]
  %s2 = inlined_call_operand.vmem [shape: f32[2,1,64], index: 2, kind: input, shape index: {}, may-alias: {2,12}]
  %s3 = inlined_call_operand.vmem [shape: f32[2,1,64], index: 3, kind: input, shape index: {}, may-alias: {3,13}]
  %s4 = inlined_call_operand.hbm [shape: bf16[2,64,64], index: 4, kind: input, shape index: {}]
  %s5 = inlined_call_operand.hbm [shape: bf16[2,64,64], index: 5, kind: input, shape index: {}]
  %s6 = inlined_call_operand.hbm [shape: bf16[2,64,64], index: 6, kind: input, shape index: {}]
  %s7 = inlined_call_operand.hbm [shape: f32[2,1,64], index: 7, kind: input, shape index: {}]
  %s8 = inlined_call_operand.hbm [shape: f32[2,1,64], index: 8, kind: input, shape index: {}]
  %s9 = inlined_call_operand.hbm [shape: f32[2,1,64], index: 9, kind: input, shape index: {}]
  %s10 = inlined_call_operand.vmem [shape: bf16[2,64,64], index: 10, kind: input, shape index: {}]
  %s11 = inlined_call_operand.hbm [shape: f32[2,1,64], index: 11, kind: input, shape index: {}]
  %s12 = inlined_call_operand.vmem [shape: f32[2,1,64], index: 12, kind: input, shape index: {}, may-alias: {2,12}]
  %s13 = inlined_call_operand.vmem [shape: f32[2,1,64], index: 13, kind: input, shape index: {}, may-alias: {3,13}]
  %s14 = inlined_call_operand.vmem [shape: bf16[2,64,256], index: 14, kind: input, shape index: {}]
  %s15 = inlined_call_operand.vmem [shape: f32[2,1,256], index: 15, kind: input, shape index: {}]
  %s16 = inlined_call_operand.vmem [shape: bf16[2,256,64], index: 16, kind: input, shape index: {}]
  %s17 = inlined_call_operand.vmem [shape: f32[2,1,64], index: 17, kind: input, shape index: {}]
  %s18 = inlined_call_operand.vmem [shape: f32[1,64], index: 18, kind: input, shape index: {}]
  %s19 = inlined_call_operand.vmem [shape: f32[1,64], index: 19, kind: input, shape index: {}]
  %s20 = inlined_call_operand.vmem [shape: bf16[64,64], index: 20, kind: input, shape index: {}]
  %s21 = inlined_call_operand.hbm [shape: f32[2,64], index: 21, kind: output, shape index: {}]
  %s22 = sld [smem:[#allocation0]]
  $region153: #{prompt_learner_forward.1} parent=0
    _
  %s24 = ssub.s32 1, %s22
  %s25 = scalar_select 0, %s24, %s22
  %s26 = sshll.u32 %s0, 4
  %s27 = int_to_ptr.vmem [resolvable:$true] %s26
  %29 = dma.vmem_to_smem %s27, 16, [#allocation5], [#allocation4]
  %30 = dma.done [#allocation4], 16
  %31 = sfence
  $region1: #{prompt_learner_forward.1} parent=0
    #allocation6 [shape = 'u8[32768]{0}', space=vmem, size = 0x8000, scoped, tag = 'input window, operand 1, single buffered']
    #allocation7 [shape = 's32[2]{0}', space=sflag, size = 0x8, scoped, tag = 'scoped memory for prompt_learner_forward.1']
    #allocation8 [shape = 's32[2]{0}', space=sflag, size = 0x8, scoped, tag = 'scoped memory for prompt_learner_forward.1']
    #allocation9 [shape = 'u8[32768]{0}', space=vmem, size = 0x8000, scoped, tag = 'input window, operand 4']
    #allocation10 [shape = 's32[2]{0}', space=sflag, size = 0x8, scoped, tag = 'scoped memory for prompt_learner_forward.1']
    #allocation11 [shape = 'u8[32768]{0}', space=vmem, size = 0x8000, scoped, tag = 'input window, operand 5']
    #allocation12 [shape = 'u8[32768]{0}', space=vmem, size = 0x8000, scoped, tag = 'input window, operand 6']
    #allocation13 [shape = 's32[2]{0}', space=sflag, size = 0x8, scoped, tag = 'scoped memory for prompt_learner_forward.1']
    #allocation14 [shape = 'u8[1024]{0}', space=vmem, size = 0x400, scoped, tag = 'input window, operand 7']
    #allocation15 [shape = 'u8[1024]{0}', space=vmem, size = 0x400, scoped, tag = 'input window, operand 8']
    #allocation16 [shape = 's32[2]{0}', space=sflag, size = 0x8, scoped, tag = 'scoped memory for prompt_learner_forward.1']
    #allocation17 [shape = 'u8[1024]{0}', space=vmem, size = 0x400, scoped, tag = 'input window, operand 9']
    #allocation18 [shape = 'u8[1024]{0}', space=vmem, size = 0x400, scoped, tag = 'input window, operand 11']
    #allocation19 [shape = 's32[2]{0}', space=sflag, size = 0x8, scoped, tag = 'scoped memory for prompt_learner_forward.1']
    #allocation20 [shape = 'u8[1024]{0}', space=vmem, size = 0x400, scoped, tag = 'output window, operand 0, single buffered']
    %32 = vsyncpa [#allocation7], 0
    %33 = vsyncpa [#allocation10], 0
    %s34 = scalar_lea.sflag [#allocation10], 1
    %35 = vsyncpa %s34, 0
    %36 = vsyncpa [#allocation13], 0
    %s37 = scalar_lea.sflag [#allocation13], 1
    %38 = vsyncpa %s37, 0
    %39 = vsyncpa [#allocation16], 0
    %s40 = scalar_lea.sflag [#allocation16], 1
    %41 = vsyncpa %s40, 0
    %42 = vsyncpa [#allocation19], 0
    %s43 = scalar_lea.sflag [#allocation19], 1
    %44 = vsyncpa %s43, 0
    %45 = vsyncpa [#allocation8], 0
    loop: start=0, step=1, limit=4
    $region2: #{prompt_learner_forward.1} parent=1 // loop_pre_header
      _
    $region3: #{prompt_learner_forward.1} parent=1 // loop_header
      %s47 = sphi 0, %s51
      %p48 = scmp.ge.s32.totalorder %s47, 4
      %s55 = sphi 0, %s55
      %s57 = sphi 0, %s55
      %s58 = sphi 0, %s57
      %s72 = sphi 0, %s58
      %s78 = sphi 0, %s80
      %s81 = sphi 0, %s78
      %s82 = sphi 0, %s81
      %s98 = sphi 0, %s82
      %s104 = sphi 0, %s106
      %s107 = sphi 0, %s104
      %s108 = sphi 0, %s107
      %s124 = sphi 0, %s108
      %s130 = sphi 0, %s132
      %s133 = sphi 0, %s130
      %s134 = sphi 0, %s133
      %s150 = sphi 0, %s134
      %s156 = sphi 0, %s158
      %s159 = sphi 0, %s156
      %s160 = sphi 0, %s159
      %s176 = sphi 0, %s160
      %s182 = sphi 0, %s184
      %s185 = sphi 0, %s182
      %s186 = sphi 0, %s185
      %s202 = sphi 0, %s186
      %s208 = sphi 0, %s210
      %s211 = sphi 0, %s208
      %s212 = sphi 0, %s211
      %s228 = sphi 0, %s212
      %s234 = sphi 0, %s236
      %s237 = sphi 0, %s234
      %s238 = sphi 0, %s237
      %s254 = sphi 0, %s238
      %s260 = sphi 0, %s262
      %s263 = sphi 0, %s260
      %s264 = sphi 0, %s263
      %s280 = sphi 0, %s264
      %s286 = sphi 0, %s288
      %s289 = sphi 0, %s286
      %s290 = sphi 0, %s289
      %s306 = sphi 0, %s290
      %s312 = sphi 0, %s314
      %s315 = sphi 0, %s312
      %s316 = sphi 0, %s315
      %s332 = sphi 0, %s316
      %s338 = sphi 0, %s340
      %s341 = sphi 0, %s338
      %s342 = sphi 0, %s341
      %s358 = sphi 0, %s342
      %s364 = sphi 0, %s366
      %s367 = sphi 0, %s364
      %s368 = sphi 0, %s367
      %s384 = sphi 0, %s368
      %s390 = sphi 0, %s392
      %s393 = sphi 0, %s390
      %s394 = sphi 0, %s393
      %s410 = sphi 0, %s394
      %s416 = sphi 0, %s418
      %s419 = sphi 0, %s416
      %s420 = sphi 0, %s419
      %s436 = sphi 0, %s420
      %s442 = sphi 0, %s444
      %s445 = sphi 0, %s442
      %s446 = sphi 0, %s445
      %s462 = sphi 0, %s446
      %s468 = sphi 0, %s470
      %s471 = sphi 0, %s468
      %s472 = sphi 0, %s471
      %s488 = sphi 0, %s472
      %s492 = sphi 0, %s492
      %s494 = sphi 0, %s492
      %s495 = sphi 0, %s494
      %s509 = sphi 0, %s495
      %s513 = sphi 0, %s513
      %s515 = sphi 0, %s513
      %s516 = sphi 0, %s515
      %s530 = sphi 0, %s516
      %s534 = sphi 0, %s534
      %s536 = sphi 0, %s534
      %s537 = sphi 0, %s536
      %s551 = sphi 0, %s537
      %s555 = sphi 0, %s555
      %s557 = sphi 0, %s555
      %s558 = sphi 0, %s557
      %s572 = sphi 0, %s558
    $region4: #{prompt_learner_forward.1} parent=1 // loop_header_branch
      %50 = sbr.rel (%p48) target = $region8
    $region5: #{prompt_learner_forward.1} parent=1 // loop_body
      %s52 = ssub.s32 %s47, 1
      %s53 = ssub.s32 %s47, 2
      %s54 = sadd.s32 %s47, 1
      %s56 = sadd.s32 %s55, 1
      %p59 = scmp.eq.s32.totalorder %s47, 1
      %p60 = scmp.ne.s32.totalorder %s55, %s57
      %p61 = scmp.eq.s32.totalorder %s47, 0
      %p62 = por %p60, %p61
      %p63 = scmp.ne.s32.totalorder %s55, %s57
      %p64 = scmp.eq.s32.totalorder %s52, 1
      %p65 = por %p63, %p64
      %p66 = scmp.ne.s32.totalorder %s57, %s58
      %p67 = scmp.eq.s32.totalorder %s52, 0
      %p68 = por %p66, %p67
      %p69 = scmp.ne.s32.totalorder %s57, %s58
      %p70 = scmp.eq.s32.totalorder %s53, 1
      %p71 = por %p69, %p70
      %p73 = scmp.ne.s32.totalorder %s58, %s72
      %p74 = scmp.eq.s32.totalorder %s53, 0
      %p75 = por %p73, %p74
      %s76 = ssub.s32 %s47, %s54
      %p77 = scmp.eq.s32.totalorder %s76, 0
      %s79 = sadd.s32 %s78, 1
      %s80 = scalar_select %p77, %s78, %s79
      %p83 = pneg %p77
      %p84 = scmp.eq.s32.totalorder %s47, 1
      %p85 = por %p83, %p84
      %p86 = scmp.ne.s32.totalorder %s78, %s81
      %p87 = scmp.eq.s32.totalorder %s47, 0
      %p88 = por %p86, %p87
      %p89 = scmp.ne.s32.totalorder %s78, %s81
      %p90 = scmp.eq.s32.totalorder %s52, 1
      %p91 = por %p89, %p90
      %p92 = scmp.ne.s32.totalorder %s81, %s82
      %p93 = scmp.eq.s32.totalorder %s52, 0
      %p94 = por %p92, %p93
      %p95 = scmp.ne.s32.totalorder %s81, %s82
      %p96 = scmp.eq.s32.totalorder %s53, 1
      %p97 = por %p95, %p96
      %p99 = scmp.ne.s32.totalorder %s82, %s98
      %p100 = scmp.eq.s32.totalorder %s53, 0
      %p101 = por %p99, %p100
      %s102 = ssub.s32 %s47, %s54
      %p103 = scmp.eq.s32.totalorder %s102, 0
      %s105 = sadd.s32 %s104, 1
      %s106 = scalar_select %p103, %s104, %s105
      %p109 = pneg %p103
      %p110 = scmp.eq.s32.totalorder %s47, 1
      %p111 = por %p109, %p110
      %p112 = scmp.ne.s32.totalorder %s104, %s107
      %p113 = scmp.eq.s32.totalorder %s47, 0
      %p114 = por %p112, %p113
      %p115 = scmp.ne.s32.totalorder %s104, %s107
      %p116 = scmp.eq.s32.totalorder %s52, 1
      %p117 = por %p115, %p116
      %p118 = scmp.ne.s32.totalorder %s107, %s108
      %p119 = scmp.eq.s32.totalorder %s52, 0
      %p120 = por %p118, %p119
      %p121 = scmp.ne.s32.totalorder %s107, %s108
      %p122 = scmp.eq.s32.totalorder %s53, 1
      %p123 = por %p121, %p122
      %p125 = scmp.ne.s32.totalorder %s108, %s124
      %p126 = scmp.eq.s32.totalorder %s53, 0
      %p127 = por %p125, %p126
      %s128 = ssub.s32 %s47, %s54
      %p129 = scmp.eq.s32.totalorder %s128, 0
      %s131 = sadd.s32 %s130, 1
      %s132 = scalar_select %p129, %s130, %s131
      %p135 = pneg %p129
      %p136 = scmp.eq.s32.totalorder %s47, 1
      %p137 = por %p135, %p136
      %p138 = scmp.ne.s32.totalorder %s130, %s133
      %p139 = scmp.eq.s32.totalorder %s47, 0
      %p140 = por %p138, %p139
      %p141 = scmp.ne.s32.totalorder %s130, %s133
      %p142 = scmp.eq.s32.totalorder %s52, 1
      %p143 = por %p141, %p142
      %p144 = scmp.ne.s32.totalorder %s133, %s134
      %p145 = scmp.eq.s32.totalorder %s52, 0
      %p146 = por %p144, %p145
      %p147 = scmp.ne.s32.totalorder %s133, %s134
      %p148 = scmp.eq.s32.totalorder %s53, 1
      %p149 = por %p147, %p148
      %p151 = scmp.ne.s32.totalorder %s134, %s150
      %p152 = scmp.eq.s32.totalorder %s53, 0
      %p153 = por %p151, %p152
      %s154 = ssub.s32 %s47, %s54
      %p155 = scmp.eq.s32.totalorder %s154, 0
      %s157 = sadd.s32 %s156, 1
      %s158 = scalar_select %p155, %s156, %s157
      %p161 = pneg %p155
      %p162 = scmp.eq.s32.totalorder %s47, 1
      %p163 = por %p161, %p162
      %p164 = scmp.ne.s32.totalorder %s156, %s159
      %p165 = scmp.eq.s32.totalorder %s47, 0
      %p166 = por %p164, %p165
      %p167 = scmp.ne.s32.totalorder %s156, %s159
      %p168 = scmp.eq.s32.totalorder %s52, 1
      %p169 = por %p167, %p168
      %p170 = scmp.ne.s32.totalorder %s159, %s160
      %p171 = scmp.eq.s32.totalorder %s52, 0
      %p172 = por %p170, %p171
      %p173 = scmp.ne.s32.totalorder %s159, %s160
      %p174 = scmp.eq.s32.totalorder %s53, 1
      %p175 = por %p173, %p174
      %p177 = scmp.ne.s32.totalorder %s160, %s176
      %p178 = scmp.eq.s32.totalorder %s53, 0
      %p179 = por %p177, %p178
      %s180 = ssub.s32 %s47, %s54
      %p181 = scmp.eq.s32.totalorder %s180, 0
      %s183 = sadd.s32 %s182, 1
      %s184 = scalar_select %p181, %s182, %s183
      %p187 = pneg %p181
      %p188 = scmp.eq.s32.totalorder %s47, 1
      %p189 = por %p187, %p188
      %p190 = scmp.ne.s32.totalorder %s182, %s185
      %p191 = scmp.eq.s32.totalorder %s47, 0
      %p192 = por %p190, %p191
      %p193 = scmp.ne.s32.totalorder %s182, %s185
      %p194 = scmp.eq.s32.totalorder %s52, 1
      %p195 = por %p193, %p194
      %p196 = scmp.ne.s32.totalorder %s185, %s186
      %p197 = scmp.eq.s32.totalorder %s52, 0
      %p198 = por %p196, %p197
      %p199 = scmp.ne.s32.totalorder %s185, %s186
      %p200 = scmp.eq.s32.totalorder %s53, 1
      %p201 = por %p199, %p200
      %p203 = scmp.ne.s32.totalorder %s186, %s202
      %p204 = scmp.eq.s32.totalorder %s53, 0
      %p205 = por %p203, %p204
      %s206 = ssub.s32 %s47, %s54
      %p207 = scmp.eq.s32.totalorder %s206, 0
      %s209 = sadd.s32 %s208, 1
      %s210 = scalar_select %p207, %s208, %s209
      %p213 = pneg %p207
      %p214 = scmp.eq.s32.totalorder %s47, 1
      %p215 = por %p213, %p214
      %p216 = scmp.ne.s32.totalorder %s208, %s211
      %p217 = scmp.eq.s32.totalorder %s47, 0
      %p218 = por %p216, %p217
      %p219 = scmp.ne.s32.totalorder %s208, %s211
      %p220 = scmp.eq.s32.totalorder %s52, 1
      %p221 = por %p219, %p220
      %p222 = scmp.ne.s32.totalorder %s211, %s212
      %p223 = scmp.eq.s32.totalorder %s52, 0
      %p224 = por %p222, %p223
      %p225 = scmp.ne.s32.totalorder %s211, %s212
      %p226 = scmp.eq.s32.totalorder %s53, 1
      %p227 = por %p225, %p226
      %p229 = scmp.ne.s32.totalorder %s212, %s228
      %p230 = scmp.eq.s32.totalorder %s53, 0
      %p231 = por %p229, %p230
      %s232 = ssub.s32 %s47, %s54
      %p233 = scmp.eq.s32.totalorder %s232, 0
      %s235 = sadd.s32 %s234, 1
      %s236 = scalar_select %p233, %s234, %s235
      %p239 = pneg %p233
      %p240 = scmp.eq.s32.totalorder %s47, 1
      %p241 = por %p239, %p240
      %p242 = scmp.ne.s32.totalorder %s234, %s237
      %p243 = scmp.eq.s32.totalorder %s47, 0
      %p244 = por %p242, %p243
      %p245 = scmp.ne.s32.totalorder %s234, %s237
      %p246 = scmp.eq.s32.totalorder %s52, 1
      %p247 = por %p245, %p246
      %p248 = scmp.ne.s32.totalorder %s237, %s238
      %p249 = scmp.eq.s32.totalorder %s52, 0
      %p250 = por %p248, %p249
      %p251 = scmp.ne.s32.totalorder %s237, %s238
      %p252 = scmp.eq.s32.totalorder %s53, 1
      %p253 = por %p251, %p252
      %p255 = scmp.ne.s32.totalorder %s238, %s254
      %p256 = scmp.eq.s32.totalorder %s53, 0
      %p257 = por %p255, %p256
      %s258 = ssub.s32 %s47, %s54
      %p259 = scmp.eq.s32.totalorder %s258, 0
      %s261 = sadd.s32 %s260, 1
      %s262 = scalar_select %p259, %s260, %s261
      %p265 = pneg %p259
      %p266 = scmp.eq.s32.totalorder %s47, 1
      %p267 = por %p265, %p266
      %p268 = scmp.ne.s32.totalorder %s260, %s263
      %p269 = scmp.eq.s32.totalorder %s47, 0
      %p270 = por %p268, %p269
      %p271 = scmp.ne.s32.totalorder %s260, %s263
      %p272 = scmp.eq.s32.totalorder %s52, 1
      %p273 = por %p271, %p272
      %p274 = scmp.ne.s32.totalorder %s263, %s264
      %p275 = scmp.eq.s32.totalorder %s52, 0
      %p276 = por %p274, %p275
      %p277 = scmp.ne.s32.totalorder %s263, %s264
      %p278 = scmp.eq.s32.totalorder %s53, 1
      %p279 = por %p277, %p278
      %p281 = scmp.ne.s32.totalorder %s264, %s280
      %p282 = scmp.eq.s32.totalorder %s53, 0
      %p283 = por %p281, %p282
      %s284 = ssub.s32 %s47, %s54
      %p285 = scmp.eq.s32.totalorder %s284, 0
      %s287 = sadd.s32 %s286, 1
      %s288 = scalar_select %p285, %s286, %s287
      %p291 = pneg %p285
      %p292 = scmp.eq.s32.totalorder %s47, 1
      %p293 = por %p291, %p292
      %p294 = scmp.ne.s32.totalorder %s286, %s289
      %p295 = scmp.eq.s32.totalorder %s47, 0
      %p296 = por %p294, %p295
      %p297 = scmp.ne.s32.totalorder %s286, %s289
      %p298 = scmp.eq.s32.totalorder %s52, 1
      %p299 = por %p297, %p298
      %p300 = scmp.ne.s32.totalorder %s289, %s290
      %p301 = scmp.eq.s32.totalorder %s52, 0
      %p302 = por %p300, %p301
      %p303 = scmp.ne.s32.totalorder %s289, %s290
      %p304 = scmp.eq.s32.totalorder %s53, 1
      %p305 = por %p303, %p304
      %p307 = scmp.ne.s32.totalorder %s290, %s306
      %p308 = scmp.eq.s32.totalorder %s53, 0
      %p309 = por %p307, %p308
      %s310 = ssub.s32 %s47, %s54
      %p311 = scmp.eq.s32.totalorder %s310, 0
      %s313 = sadd.s32 %s312, 1
      %s314 = scalar_select %p311, %s312, %s313
      %p317 = pneg %p311
      %p318 = scmp.eq.s32.totalorder %s47, 1
      %p319 = por %p317, %p318
      %p320 = scmp.ne.s32.totalorder %s312, %s315
      %p321 = scmp.eq.s32.totalorder %s47, 0
      %p322 = por %p320, %p321
      %p323 = scmp.ne.s32.totalorder %s312, %s315
      %p324 = scmp.eq.s32.totalorder %s52, 1
      %p325 = por %p323, %p324
      %p326 = scmp.ne.s32.totalorder %s315, %s316
      %p327 = scmp.eq.s32.totalorder %s52, 0
      %p328 = por %p326, %p327
      %p329 = scmp.ne.s32.totalorder %s315, %s316
      %p330 = scmp.eq.s32.totalorder %s53, 1
      %p331 = por %p329, %p330
      %p333 = scmp.ne.s32.totalorder %s316, %s332
      %p334 = scmp.eq.s32.totalorder %s53, 0
      %p335 = por %p333, %p334
      %s336 = ssub.s32 %s47, %s54
      %p337 = scmp.eq.s32.totalorder %s336, 0
      %s339 = sadd.s32 %s338, 1
      %s340 = scalar_select %p337, %s338, %s339
      %p343 = pneg %p337
      %p344 = scmp.eq.s32.totalorder %s47, 1
      %p345 = por %p343, %p344
      %p346 = scmp.ne.s32.totalorder %s338, %s341
      %p347 = scmp.eq.s32.totalorder %s47, 0
      %p348 = por %p346, %p347
      %p349 = scmp.ne.s32.totalorder %s338, %s341
      %p350 = scmp.eq.s32.totalorder %s52, 1
      %p351 = por %p349, %p350
      %p352 = scmp.ne.s32.totalorder %s341, %s342
      %p353 = scmp.eq.s32.totalorder %s52, 0
      %p354 = por %p352, %p353
      %p355 = scmp.ne.s32.totalorder %s341, %s342
      %p356 = scmp.eq.s32.totalorder %s53, 1
      %p357 = por %p355, %p356
      %p359 = scmp.ne.s32.totalorder %s342, %s358
      %p360 = scmp.eq.s32.totalorder %s53, 0
      %p361 = por %p359, %p360
      %s362 = ssub.s32 %s47, %s54
      %p363 = scmp.eq.s32.totalorder %s362, 0
      %s365 = sadd.s32 %s364, 1
      %s366 = scalar_select %p363, %s364, %s365
      %p369 = pneg %p363
      %p370 = scmp.eq.s32.totalorder %s47, 1
      %p371 = por %p369, %p370
      %p372 = scmp.ne.s32.totalorder %s364, %s367
      %p373 = scmp.eq.s32.totalorder %s47, 0
      %p374 = por %p372, %p373
      %p375 = scmp.ne.s32.totalorder %s364, %s367
      %p376 = scmp.eq.s32.totalorder %s52, 1
      %p377 = por %p375, %p376
      %p378 = scmp.ne.s32.totalorder %s367, %s368
      %p379 = scmp.eq.s32.totalorder %s52, 0
      %p380 = por %p378, %p379
      %p381 = scmp.ne.s32.totalorder %s367, %s368
      %p382 = scmp.eq.s32.totalorder %s53, 1
      %p383 = por %p381, %p382
      %p385 = scmp.ne.s32.totalorder %s368, %s384
      %p386 = scmp.eq.s32.totalorder %s53, 0
      %p387 = por %p385, %p386
      %s388 = ssub.s32 %s47, %s54
      %p389 = scmp.eq.s32.totalorder %s388, 0
      %s391 = sadd.s32 %s390, 1
      %s392 = scalar_select %p389, %s390, %s391
      %p395 = pneg %p389
      %p396 = scmp.eq.s32.totalorder %s47, 1
      %p397 = por %p395, %p396
      %p398 = scmp.ne.s32.totalorder %s390, %s393
      %p399 = scmp.eq.s32.totalorder %s47, 0
      %p400 = por %p398, %p399
      %p401 = scmp.ne.s32.totalorder %s390, %s393
      %p402 = scmp.eq.s32.totalorder %s52, 1
      %p403 = por %p401, %p402
      %p404 = scmp.ne.s32.totalorder %s393, %s394
      %p405 = scmp.eq.s32.totalorder %s52, 0
      %p406 = por %p404, %p405
      %p407 = scmp.ne.s32.totalorder %s393, %s394
      %p408 = scmp.eq.s32.totalorder %s53, 1
      %p409 = por %p407, %p408
      %p411 = scmp.ne.s32.totalorder %s394, %s410
      %p412 = scmp.eq.s32.totalorder %s53, 0
      %p413 = por %p411, %p412
      %s414 = ssub.s32 %s47, %s54
      %p415 = scmp.eq.s32.totalorder %s414, 0
      %s417 = sadd.s32 %s416, 1
      %s418 = scalar_select %p415, %s416, %s417
      %p421 = pneg %p415
      %p422 = scmp.eq.s32.totalorder %s47, 1
      %p423 = por %p421, %p422
      %p424 = scmp.ne.s32.totalorder %s416, %s419
      %p425 = scmp.eq.s32.totalorder %s47, 0
      %p426 = por %p424, %p425
      %p427 = scmp.ne.s32.totalorder %s416, %s419
      %p428 = scmp.eq.s32.totalorder %s52, 1
      %p429 = por %p427, %p428
      %p430 = scmp.ne.s32.totalorder %s419, %s420
      %p431 = scmp.eq.s32.totalorder %s52, 0
      %p432 = por %p430, %p431
      %p433 = scmp.ne.s32.totalorder %s419, %s420
      %p434 = scmp.eq.s32.totalorder %s53, 1
      %p435 = por %p433, %p434
      %p437 = scmp.ne.s32.totalorder %s420, %s436
      %p438 = scmp.eq.s32.totalorder %s53, 0
      %p439 = por %p437, %p438
      %s440 = ssub.s32 %s47, %s54
      %p441 = scmp.eq.s32.totalorder %s440, 0
      %s443 = sadd.s32 %s442, 1
      %s444 = scalar_select %p441, %s442, %s443
      %p447 = pneg %p441
      %p448 = scmp.eq.s32.totalorder %s47, 1
      %p449 = por %p447, %p448
      %p450 = scmp.ne.s32.totalorder %s442, %s445
      %p451 = scmp.eq.s32.totalorder %s47, 0
      %p452 = por %p450, %p451
      %p453 = scmp.ne.s32.totalorder %s442, %s445
      %p454 = scmp.eq.s32.totalorder %s52, 1
      %p455 = por %p453, %p454
      %p456 = scmp.ne.s32.totalorder %s445, %s446
      %p457 = scmp.eq.s32.totalorder %s52, 0
      %p458 = por %p456, %p457
      %p459 = scmp.ne.s32.totalorder %s445, %s446
      %p460 = scmp.eq.s32.totalorder %s53, 1
      %p461 = por %p459, %p460
      %p463 = scmp.ne.s32.totalorder %s446, %s462
      %p464 = scmp.eq.s32.totalorder %s53, 0
      %p465 = por %p463, %p464
      %s466 = ssub.s32 %s47, %s54
      %p467 = scmp.eq.s32.totalorder %s466, 0
      %s469 = sadd.s32 %s468, 1
      %s470 = scalar_select %p467, %s468, %s469
      %p473 = pneg %p467
      %p474 = scmp.eq.s32.totalorder %s47, 1
      %p475 = por %p473, %p474
      %p476 = scmp.ne.s32.totalorder %s468, %s471
      %p477 = scmp.eq.s32.totalorder %s47, 0
      %p478 = por %p476, %p477
      %p479 = scmp.ne.s32.totalorder %s468, %s471
      %p480 = scmp.eq.s32.totalorder %s52, 1
      %p481 = por %p479, %p480
      %p482 = scmp.ne.s32.totalorder %s471, %s472
      %p483 = scmp.eq.s32.totalorder %s52, 0
      %p484 = por %p482, %p483
      %p485 = scmp.ne.s32.totalorder %s471, %s472
      %p486 = scmp.eq.s32.totalorder %s53, 1
      %p487 = por %p485, %p486
      %p489 = scmp.ne.s32.totalorder %s472, %s488
      %p490 = scmp.eq.s32.totalorder %s53, 0
      %p491 = por %p489, %p490
      %s493 = sadd.s32 %s492, 1
      %p496 = scmp.eq.s32.totalorder %s47, 1
      %p497 = scmp.ne.s32.totalorder %s492, %s494
      %p498 = scmp.eq.s32.totalorder %s47, 0
      %p499 = por %p497, %p498
      %p500 = scmp.ne.s32.totalorder %s492, %s494
      %p501 = scmp.eq.s32.totalorder %s52, 1
      %p502 = por %p500, %p501
      %p503 = scmp.ne.s32.totalorder %s494, %s495
      %p504 = scmp.eq.s32.totalorder %s52, 0
      %p505 = por %p503, %p504
      %p506 = scmp.ne.s32.totalorder %s494, %s495
      %p507 = scmp.eq.s32.totalorder %s53, 1
      %p508 = por %p506, %p507
      %p510 = scmp.ne.s32.totalorder %s495, %s509
      %p511 = scmp.eq.s32.totalorder %s53, 0
      %p512 = por %p510, %p511
      %s514 = sadd.s32 %s513, 1
      %p517 = scmp.eq.s32.totalorder %s47, 1
      %p518 = scmp.ne.s32.totalorder %s513, %s515
      %p519 = scmp.eq.s32.totalorder %s47, 0
      %p520 = por %p518, %p519
      %p521 = scmp.ne.s32.totalorder %s513, %s515
      %p522 = scmp.eq.s32.totalorder %s52, 1
      %p523 = por %p521, %p522
      %p524 = scmp.ne.s32.totalorder %s515, %s516
      %p525 = scmp.eq.s32.totalorder %s52, 0
      %p526 = por %p524, %p525
      %p527 = scmp.ne.s32.totalorder %s515, %s516
      %p528 = scmp.eq.s32.totalorder %s53, 1
      %p529 = por %p527, %p528
      %p531 = scmp.ne.s32.totalorder %s516, %s530
      %p532 = scmp.eq.s32.totalorder %s53, 0
      %p533 = por %p531, %p532
      %s535 = sadd.s32 %s534, 1
      %p538 = scmp.eq.s32.totalorder %s47, 1
      %p539 = scmp.ne.s32.totalorder %s534, %s536
      %p540 = scmp.eq.s32.totalorder %s47, 0
      %p541 = por %p539, %p540
      %p542 = scmp.ne.s32.totalorder %s534, %s536
      %p543 = scmp.eq.s32.totalorder %s52, 1
      %p544 = por %p542, %p543
      %p545 = scmp.ne.s32.totalorder %s536, %s537
      %p546 = scmp.eq.s32.totalorder %s52, 0
      %p547 = por %p545, %p546
      %p548 = scmp.ne.s32.totalorder %s536, %s537
      %p549 = scmp.eq.s32.totalorder %s53, 1
      %p550 = por %p548, %p549
      %p552 = scmp.ne.s32.totalorder %s537, %s551
      %p553 = scmp.eq.s32.totalorder %s53, 0
      %p554 = por %p552, %p553
      %s556 = sadd.s32 %s555, 1
      %p559 = scmp.eq.s32.totalorder %s47, 1
      %p560 = scmp.ne.s32.totalorder %s555, %s557
      %p561 = scmp.eq.s32.totalorder %s47, 0
      %p562 = por %p560, %p561
      %p563 = scmp.ne.s32.totalorder %s555, %s557
      %p564 = scmp.eq.s32.totalorder %s52, 1
      %p565 = por %p563, %p564
      %p566 = scmp.ne.s32.totalorder %s557, %s558
      %p567 = scmp.eq.s32.totalorder %s52, 0
      %p568 = por %p566, %p567
      %p569 = scmp.ne.s32.totalorder %s557, %s558
      %p570 = scmp.eq.s32.totalorder %s53, 1
      %p571 = por %p569, %p570
      %p573 = scmp.ne.s32.totalorder %s558, %s572
      %p574 = scmp.eq.s32.totalorder %s53, 0
      %p575 = por %p573, %p574
      %p576 = scmp.le.s32.totalorder 1, %s47
      %p577 = scmp.lt.s32.totalorder %s47, 3
      %p578 = pnand %p576, %p577
      %p579 = pneg %p578
      // Predicated region
      $region9: #{prompt_learner_forward.1} parent=5 // pred_check
        _
      $region10: #{prompt_learner_forward.1} parent=5 // pred_check_branch
        %581 = sbr.rel (%p578) target = $region12
      $region11: #{prompt_learner_forward.1} parent=5 // pred_region
        %s582 = ssub.s32 %s47, 1
        // Predicated region
        $region13: #{prompt_learner_forward.1} parent=11 // pred_check
          %p583 = pneg %p68
        $region14: #{prompt_learner_forward.1} parent=11 // pred_check_branch
          %585 = sbr.rel (%p583) target = $region16
        $region15: #{prompt_learner_forward.1} parent=11 // pred_region
          %s587 = ssub.s32 1024, 1024
          %588 = vsyncadd [#allocation7], %s587
          %s589 = sshll.u32 [#allocation6], 4
          %s590 = int_to_ptr.vmem [resolvable:$true] %s589
          %595 = dma.hbm_to_vmem [thread:$0]  %s1, 1024, %s590, [#allocation7], 128, 128, 8
        $region16: #{prompt_learner_forward.1} parent=11 // pred_fallthru
          _
        // Predicated region
        $region17: #{prompt_learner_forward.1} parent=11 // pred_check
          %p596 = pneg %p505
        $region18: #{prompt_learner_forward.1} parent=11 // pred_check_branch
          %598 = sbr.rel (%p596) target = $region20
        $region19: #{prompt_learner_forward.1} parent=11 // pred_region
          _
        $region20: #{prompt_learner_forward.1} parent=11 // pred_fallthru
          _
        // Predicated region
        $region21: #{prompt_learner_forward.1} parent=11 // pred_check
          %p599 = pneg %p526
        $region22: #{prompt_learner_forward.1} parent=11 // pred_check_branch
          %601 = sbr.rel (%p599) target = $region24
        $region23: #{prompt_learner_forward.1} parent=11 // pred_region
          _
        $region24: #{prompt_learner_forward.1} parent=11 // pred_fallthru
          _
        // Predicated region
        $region25: #{prompt_learner_forward.1} parent=11 // pred_check
          %p602 = pneg %p547
        $region26: #{prompt_learner_forward.1} parent=11 // pred_check_branch
          %604 = sbr.rel (%p602) target = $region28
        $region27: #{prompt_learner_forward.1} parent=11 // pred_region
          _
        $region28: #{prompt_learner_forward.1} parent=11 // pred_fallthru
          _
      $region12: #{prompt_learner_forward.1} parent=5 // pred_fallthru
        _
      %p605 = scmp.lt.s32.totalorder %s47, 2
      // Predicated region
      $region29: #{prompt_learner_forward.1} parent=5 // pred_check
        %p606 = pneg %p605
      $region30: #{prompt_learner_forward.1} parent=5 // pred_check_branch
        %608 = sbr.rel (%p606) target = $region32
      $region31: #{prompt_learner_forward.1} parent=5 // pred_region
        // Predicated region
        $region33: #{prompt_learner_forward.1} parent=31 // pred_check
          %p609 = pneg %p88
        $region34: #{prompt_learner_forward.1} parent=31 // pred_check_branch
          %611 = sbr.rel (%p609) target = $region36
        $region35: #{prompt_learner_forward.1} parent=31 // pred_region
          %p612 = scmp.lt.s32.totalorder %s47, 1
          %s613 = scalar_select %p612, %s47, 1
          %s614 = scalar_lea.vmem %s2, %s613
        $region36: #{prompt_learner_forward.1} parent=31 // pred_fallthru
          _
        // Predicated region
        $region37: #{prompt_learner_forward.1} parent=31 // pred_check
          %p615 = pneg %p114
        $region38: #{prompt_learner_forward.1} parent=31 // pred_check_branch
          %617 = sbr.rel (%p615) target = $region40
        $region39: #{prompt_learner_forward.1} parent=31 // pred_region
          %p618 = scmp.lt.s32.totalorder %s47, 1
          %s619 = scalar_select %p618, %s47, 1
          %s620 = scalar_lea.vmem %s3, %s619
        $region40: #{prompt_learner_forward.1} parent=31 // pred_fallthru
          _
        // Predicated region
        $region41: #{prompt_learner_forward.1} parent=31 // pred_check
          %p621 = pneg %p140
        $region42: #{prompt_learner_forward.1} parent=31 // pred_check_branch
          %623 = sbr.rel (%p621) target = $region44
        $region43: #{prompt_learner_forward.1} parent=31 // pred_region
          %s624 = sand.u32 %s47, 1
          %s625 = scalar_lea.sflag [#allocation10], %s624
          %s626 = sand.u32 %s130, 1
          %s627 = smul.addr %s626, 32
          %s628 = scalar_lea.vmem [#allocation9], %s627
          %s630 = ssub.s32 512, 512
          %631 = vsyncadd %s625, %s630
          %s632 = smul.addr %s47, 8
          %s633 = smul.addr %s632, 64
          %s634 = scalar_lea.hbm %s4, %s633
          %s635 = sshll.u32 %s628, 4
          %s636 = int_to_ptr.vmem [resolvable:$true] %s635
          %641 = dma.hbm_to_vmem [thread:$0]  %s634, 512, %s636, %s625, 64, 64, 4
        $region44: #{prompt_learner_forward.1} parent=31 // pred_fallthru
          _
        // Predicated region
        $region45: #{prompt_learner_forward.1} parent=31 // pred_check
          %p642 = pneg %p166
        $region46: #{prompt_learner_forward.1} parent=31 // pred_check_branch
          %644 = sbr.rel (%p642) target = $region48
        $region47: #{prompt_learner_forward.1} parent=31 // pred_region
          %s645 = sand.u32 %s47, 1
          %s646 = scalar_lea.sflag [#allocation10], %s645
          %s647 = sand.u32 %s156, 1
          %s648 = smul.addr %s647, 32
          %s649 = scalar_lea.vmem [#allocation11], %s648
          %s651 = ssub.s32 512, 512
          %652 = vsyncadd %s646, %s651
          %s653 = smul.addr %s47, 8
          %s654 = smul.addr %s653, 64
          %s655 = scalar_lea.hbm %s5, %s654
          %s656 = sshll.u32 %s649, 4
          %s657 = int_to_ptr.vmem [resolvable:$true] %s656
          %662 = dma.hbm_to_vmem [thread:$0]  %s655, 512, %s657, %s646, 64, 64, 4
        $region48: #{prompt_learner_forward.1} parent=31 // pred_fallthru
          _
        // Predicated region
        $region49: #{prompt_learner_forward.1} parent=31 // pred_check
          %p663 = pneg %p192
        $region50: #{prompt_learner_forward.1} parent=31 // pred_check_branch
          %665 = sbr.rel (%p663) target = $region52
        $region51: #{prompt_learner_forward.1} parent=31 // pred_region
          %s666 = sand.u32 %s47, 1
          %s667 = scalar_lea.sflag [#allocation13], %s666
          %s668 = sand.u32 %s182, 1
          %s669 = smul.addr %s668, 32
          %s670 = scalar_lea.vmem [#allocation12], %s669
          %s672 = ssub.s32 512, 512
          %673 = vsyncadd %s667, %s672
          %s674 = smul.addr %s47, 8
          %s675 = smul.addr %s674, 64
          %s676 = scalar_lea.hbm %s6, %s675
          %s677 = sshll.u32 %s670, 4
          %s678 = int_to_ptr.vmem [resolvable:$true] %s677
          %683 = dma.hbm_to_vmem [thread:$0]  %s676, 512, %s678, %s667, 64, 64, 4
        $region52: #{prompt_learner_forward.1} parent=31 // pred_fallthru
          _
        // Predicated region
        $region53: #{prompt_learner_forward.1} parent=31 // pred_check
          %p684 = pneg %p218
        $region54: #{prompt_learner_forward.1} parent=31 // pred_check_branch
          %686 = sbr.rel (%p684) target = $region56
        $region55: #{prompt_learner_forward.1} parent=31 // pred_region
          %s687 = sand.u32 %s47, 1
          %s688 = scalar_lea.sflag [#allocation13], %s687
          %s689 = sand.u32 %s208, 1
          %s690 = scalar_lea.vmem [#allocation14], %s689
          %s692 = ssub.s32 16, 16
          %693 = vsyncadd %s688, %s692
          %s694 = smul.addr %s47, 16
          %s695 = scalar_lea.hbm %s7, %s694
          %s697 = sshll.u32 %s690, 4
          %s698 = int_to_ptr.vmem [resolvable:$true] %s697
          %700 = dma.hbm_to_vmem [thread:$0]  %s695, 16, %s698, %s688
        $region56: #{prompt_learner_forward.1} parent=31 // pred_fallthru
          _
        // Predicated region
        $region57: #{prompt_learner_forward.1} parent=31 // pred_check
          %p701 = pneg %p244
        $region58: #{prompt_learner_forward.1} parent=31 // pred_check_branch
          %703 = sbr.rel (%p701) target = $region60
        $region59: #{prompt_learner_forward.1} parent=31 // pred_region
          %s704 = sand.u32 %s47, 1
          %s705 = scalar_lea.sflag [#allocation16], %s704
          %s706 = sand.u32 %s234, 1
          %s707 = scalar_lea.vmem [#allocation15], %s706
          %s709 = ssub.s32 16, 16
          %710 = vsyncadd %s705, %s709
          %s711 = smul.addr %s47, 16
          %s712 = scalar_lea.hbm %s8, %s711
          %s714 = sshll.u32 %s707, 4
          %s715 = int_to_ptr.vmem [resolvable:$true] %s714
          %717 = dma.hbm_to_vmem [thread:$0]  %s712, 16, %s715, %s705
        $region60: #{prompt_learner_forward.1} parent=31 // pred_fallthru
          _
        // Predicated region
        $region61: #{prompt_learner_forward.1} parent=31 // pred_check
          %p718 = pneg %p270
        $region62: #{prompt_learner_forward.1} parent=31 // pred_check_branch
          %720 = sbr.rel (%p718) target = $region64
        $region63: #{prompt_learner_forward.1} parent=31 // pred_region
          %s721 = sand.u32 %s47, 1
          %s722 = scalar_lea.sflag [#allocation16], %s721
          %s723 = sand.u32 %s260, 1
          %s724 = scalar_lea.vmem [#allocation17], %s723
          %s726 = ssub.s32 16, 16
          %727 = vsyncadd %s722, %s726
          %s728 = smul.addr %s47, 16
          %s729 = scalar_lea.hbm %s9, %s728
          %s731 = sshll.u32 %s724, 4
          %s732 = int_to_ptr.vmem [resolvable:$true] %s731
          %734 = dma.hbm_to_vmem [thread:$0]  %s729, 16, %s732, %s722
        $region64: #{prompt_learner_forward.1} parent=31 // pred_fallthru
          _
        // Predicated region
        $region65: #{prompt_learner_forward.1} parent=31 // pred_check
          %p735 = pneg %p296
        $region66: #{prompt_learner_forward.1} parent=31 // pred_check_branch
          %737 = sbr.rel (%p735) target = $region68
        $region67: #{prompt_learner_forward.1} parent=31 // pred_region
          %p738 = scmp.lt.s32.totalorder %s47, 1
          %s739 = scalar_select %p738, %s47, 1
          %s740 = smul.addr %s739, 8
          %s741 = smul.addr %s740, 4
          %s742 = scalar_lea.vmem %s10, %s741
        $region68: #{prompt_learner_forward.1} parent=31 // pred_fallthru
          _
        // Predicated region
        $region69: #{prompt_learner_forward.1} parent=31 // pred_check
          %p743 = pneg %p322
        $region70: #{prompt_learner_forward.1} parent=31 // pred_check_branch
          %745 = sbr.rel (%p743) target = $region72
        $region71: #{prompt_learner_forward.1} parent=31 // pred_region
          %s746 = sand.u32 %s312, 1
          %s747 = scalar_lea.sflag [#allocation19], %s746
          %s748 = sand.u32 %s312, 1
          %s749 = scalar_lea.vmem [#allocation18], %s748
          %s751 = ssub.s32 16, 16
          %752 = vsyncadd %s747, %s751
          %s753 = smul.addr %s47, 16
          %s754 = scalar_lea.hbm %s11, %s753
          %s756 = sshll.u32 %s749, 4
          %s757 = int_to_ptr.vmem [resolvable:$true] %s756
          %759 = dma.hbm_to_vmem [thread:$0]  %s754, 16, %s757, %s747
        $region72: #{prompt_learner_forward.1} parent=31 // pred_fallthru
          _
        // Predicated region
        $region73: #{prompt_learner_forward.1} parent=31 // pred_check
          %p760 = pneg %p348
        $region74: #{prompt_learner_forward.1} parent=31 // pred_check_branch
          %762 = sbr.rel (%p760) target = $region76
        $region75: #{prompt_learner_forward.1} parent=31 // pred_region
          %p763 = scmp.lt.s32.totalorder %s47, 1
          %s764 = scalar_select %p763, %s47, 1
          %s765 = scalar_lea.vmem %s12, %s764
        $region76: #{prompt_learner_forward.1} parent=31 // pred_fallthru
          _
        // Predicated region
        $region77: #{prompt_learner_forward.1} parent=31 // pred_check
          %p766 = pneg %p374
        $region78: #{prompt_learner_forward.1} parent=31 // pred_check_branch
          %768 = sbr.rel (%p766) target = $region80
        $region79: #{prompt_learner_forward.1} parent=31 // pred_region
          %p769 = scmp.lt.s32.totalorder %s47, 1
          %s770 = scalar_select %p769, %s47, 1
          %s771 = scalar_lea.vmem %s13, %s770
        $region80: #{prompt_learner_forward.1} parent=31 // pred_fallthru
          _
        // Predicated region
        $region81: #{prompt_learner_forward.1} parent=31 // pred_check
          %p772 = pneg %p400
        $region82: #{prompt_learner_forward.1} parent=31 // pred_check_branch
          %774 = sbr.rel (%p772) target = $region84
        $region83: #{prompt_learner_forward.1} parent=31 // pred_region
          %p775 = scmp.lt.s32.totalorder %s47, 1
          %s776 = scalar_select %p775, %s47, 1
          %s777 = smul.addr %s776, 16
          %s778 = smul.addr %s777, 4
          %s779 = scalar_lea.vmem %s14, %s778
        $region84: #{prompt_learner_forward.1} parent=31 // pred_fallthru
          _
        // Predicated region
        $region85: #{prompt_learner_forward.1} parent=31 // pred_check
          %p780 = pneg %p426
        $region86: #{prompt_learner_forward.1} parent=31 // pred_check_branch
          %782 = sbr.rel (%p780) target = $region88
        $region87: #{prompt_learner_forward.1} parent=31 // pred_region
          %p783 = scmp.lt.s32.totalorder %s47, 1
          %s784 = scalar_select %p783, %s47, 1
          %s785 = smul.addr %s784, 2
          %s786 = scalar_lea.vmem %s15, %s785
        $region88: #{prompt_learner_forward.1} parent=31 // pred_fallthru
          _
        // Predicated region
        $region89: #{prompt_learner_forward.1} parent=31 // pred_check
          %p787 = pneg %p452
        $region90: #{prompt_learner_forward.1} parent=31 // pred_check_branch
          %789 = sbr.rel (%p787) target = $region92
        $region91: #{prompt_learner_forward.1} parent=31 // pred_region
          %p790 = scmp.lt.s32.totalorder %s47, 1
          %s791 = scalar_select %p790, %s47, 1
          %s792 = smul.addr %s791, 32
          %s793 = smul.addr %s792, 4
          %s794 = scalar_lea.vmem %s16, %s793
        $region92: #{prompt_learner_forward.1} parent=31 // pred_fallthru
          _
        // Predicated region
        $region93: #{prompt_learner_forward.1} parent=31 // pred_check
          %p795 = pneg %p478
        $region94: #{prompt_learner_forward.1} parent=31 // pred_check_branch
          %797 = sbr.rel (%p795) target = $region96
        $region95: #{prompt_learner_forward.1} parent=31 // pred_region
          %p798 = scmp.lt.s32.totalorder %s47, 1
          %s799 = scalar_select %p798, %s47, 1
          %s800 = scalar_lea.vmem %s17, %s799
        $region96: #{prompt_learner_forward.1} parent=31 // pred_fallthru
          _
      $region32: #{prompt_learner_forward.1} parent=5 // pred_fallthru
        _
      %p801 = scmp.le.s32.totalorder 1, %s47
      %p802 = scmp.lt.s32.totalorder %s47, 3
      %p803 = pnand %p801, %p802
      %p804 = pneg %p803
      // Predicated region
      $region97: #{prompt_learner_forward.1} parent=5 // pred_check
        _
      $region98: #{prompt_learner_forward.1} parent=5 // pred_check_branch
        %806 = sbr.rel (%p803) target = $region100
      $region99: #{prompt_learner_forward.1} parent=5 // pred_region
        %s807 = ssub.s32 %s47, 1
        // Predicated region
        $region101: #{prompt_learner_forward.1} parent=99 // pred_check
          %p808 = pneg %p68
        $region102: #{prompt_learner_forward.1} parent=99 // pred_check_branch
          %810 = sbr.rel (%p808) target = $region104
        $region103: #{prompt_learner_forward.1} parent=99 // pred_region
          %811 = dma.done [#allocation7], 1024
        $region104: #{prompt_learner_forward.1} parent=99 // pred_fallthru
          _
        %s812 = sand.u32 %s52, 1
        %s813 = scalar_lea.sflag [#allocation10], %s812
        %s814 = sand.u32 %s133, 1
        %s815 = smul.addr %s814, 32
        %s816 = scalar_lea.vmem [#allocation9], %s815
        // Predicated region
        $region105: #{prompt_learner_forward.1} parent=99 // pred_check
          %p817 = pneg %p146
        $region106: #{prompt_learner_forward.1} parent=99 // pred_check_branch
          %819 = sbr.rel (%p817) target = $region108
        $region107: #{prompt_learner_forward.1} parent=99 // pred_region
          %820 = dma.done %s813, 512
        $region108: #{prompt_learner_forward.1} parent=99 // pred_fallthru
          _
        %s821 = sand.u32 %s52, 1
        %s822 = scalar_lea.sflag [#allocation10], %s821
        %s823 = sand.u32 %s159, 1
        %s824 = smul.addr %s823, 32
        %s825 = scalar_lea.vmem [#allocation11], %s824
        // Predicated region
        $region109: #{prompt_learner_forward.1} parent=99 // pred_check
          %p826 = pneg %p172
        $region110: #{prompt_learner_forward.1} parent=99 // pred_check_branch
          %828 = sbr.rel (%p826) target = $region112
        $region111: #{prompt_learner_forward.1} parent=99 // pred_region
          %829 = dma.done %s822, 512
        $region112: #{prompt_learner_forward.1} parent=99 // pred_fallthru
          _
        %s830 = sand.u32 %s52, 1
        %s831 = scalar_lea.sflag [#allocation13], %s830
        %s832 = sand.u32 %s185, 1
        %s833 = smul.addr %s832, 32
        %s834 = scalar_lea.vmem [#allocation12], %s833
        // Predicated region
        $region113: #{prompt_learner_forward.1} parent=99 // pred_check
          %p835 = pneg %p198
        $region114: #{prompt_learner_forward.1} parent=99 // pred_check_branch
          %837 = sbr.rel (%p835) target = $region116
        $region115: #{prompt_learner_forward.1} parent=99 // pred_region
          %838 = dma.done %s831, 512
        $region116: #{prompt_learner_forward.1} parent=99 // pred_fallthru
          _
        %s839 = sand.u32 %s52, 1
        %s840 = scalar_lea.sflag [#allocation13], %s839
        %s841 = sand.u32 %s211, 1
        %s842 = scalar_lea.vmem [#allocation14], %s841
        // Predicated region
        $region117: #{prompt_learner_forward.1} parent=99 // pred_check
          %p843 = pneg %p224
        $region118: #{prompt_learner_forward.1} parent=99 // pred_check_branch
          %845 = sbr.rel (%p843) target = $region120
        $region119: #{prompt_learner_forward.1} parent=99 // pred_region
          %846 = dma.done %s840, 16
        $region120: #{prompt_learner_forward.1} parent=99 // pred_fallthru
          _
        %s847 = sand.u32 %s52, 1
        %s848 = scalar_lea.sflag [#allocation16], %s847
        %s849 = sand.u32 %s237, 1
        %s850 = scalar_lea.vmem [#allocation15], %s849
        // Predicated region
        $region121: #{prompt_learner_forward.1} parent=99 // pred_check
          %p851 = pneg %p250
        $region122: #{prompt_learner_forward.1} parent=99 // pred_check_branch
          %853 = sbr.rel (%p851) target = $region124
        $region123: #{prompt_learner_forward.1} parent=99 // pred_region
          %854 = dma.done %s848, 16
        $region124: #{prompt_learner_forward.1} parent=99 // pred_fallthru
          _
        %s855 = sand.u32 %s52, 1
        %s856 = scalar_lea.sflag [#allocation16], %s855
        %s857 = sand.u32 %s263, 1
        %s858 = scalar_lea.vmem [#allocation17], %s857
        // Predicated region
        $region125: #{prompt_learner_forward.1} parent=99 // pred_check
          %p859 = pneg %p276
        $region126: #{prompt_learner_forward.1} parent=99 // pred_check_branch
          %861 = sbr.rel (%p859) target = $region128
        $region127: #{prompt_learner_forward.1} parent=99 // pred_region
          %862 = dma.done %s856, 16
        $region128: #{prompt_learner_forward.1} parent=99 // pred_fallthru
          _
        %s863 = sand.u32 %s315, 1
        %s864 = scalar_lea.sflag [#allocation19], %s863
        %s865 = sand.u32 %s315, 1
        %s866 = scalar_lea.vmem [#allocation18], %s865
        // Predicated region
        $region129: #{prompt_learner_forward.1} parent=99 // pred_check
          %p867 = pneg %p328
        $region130: #{prompt_learner_forward.1} parent=99 // pred_check_branch
          %869 = sbr.rel (%p867) target = $region132
        $region131: #{prompt_learner_forward.1} parent=99 // pred_region
          %870 = dma.done %s864, 16
        $region132: #{prompt_learner_forward.1} parent=99 // pred_fallthru
          _
        %p871 = pneg %p68
        %p872 = pneg %p65
        %p873 = scmp.lt.s32.totalorder %s52, 1
        %s874 = scalar_select %p873, %s52, 1
        %s875 = scalar_lea.vmem %s2, %s874
        %p876 = pneg %p94
        %p877 = pneg %p91
        %p878 = scmp.lt.s32.totalorder %s52, 1
        %s879 = scalar_select %p878, %s52, 1
        %s880 = scalar_lea.vmem %s3, %s879
        %p881 = pneg %p120
        %p882 = pneg %p117
        %s883 = sand.u32 %s52, 1
        %s884 = scalar_lea.sflag [#allocation10], %s883
        %s885 = sand.u32 %s133, 1
        %s886 = smul.addr %s885, 32
        %s887 = scalar_lea.vmem [#allocation9], %s886
        %p888 = pneg %p146
        %p889 = pneg %p143
        %s890 = sand.u32 %s52, 1
        %s891 = scalar_lea.sflag [#allocation10], %s890
        %s892 = sand.u32 %s159, 1
        %s893 = smul.addr %s892, 32
        %s894 = scalar_lea.vmem [#allocation11], %s893
        %p895 = pneg %p172
        %p896 = pneg %p169
        %s897 = sand.u32 %s52, 1
        %s898 = scalar_lea.sflag [#allocation13], %s897
        %s899 = sand.u32 %s185, 1
        %s900 = smul.addr %s899, 32
        %s901 = scalar_lea.vmem [#allocation12], %s900
        %p902 = pneg %p198
        %p903 = pneg %p195
        %s904 = sand.u32 %s52, 1
        %s905 = scalar_lea.sflag [#allocation13], %s904
        %s906 = sand.u32 %s211, 1
        %s907 = scalar_lea.vmem [#allocation14], %s906
        %p908 = pneg %p224
        %p909 = pneg %p221
        %s910 = sand.u32 %s52, 1
        %s911 = scalar_lea.sflag [#allocation16], %s910
        %s912 = sand.u32 %s237, 1
        %s913 = scalar_lea.vmem [#allocation15], %s912
        %p914 = pneg %p250
        %p915 = pneg %p247
        %s916 = sand.u32 %s52, 1
        %s917 = scalar_lea.sflag [#allocation16], %s916
        %s918 = sand.u32 %s263, 1
        %s919 = scalar_lea.vmem [#allocation17], %s918
        %p920 = pneg %p276
        %p921 = pneg %p273
        %p922 = scmp.lt.s32.totalorder %s52, 1
        %s923 = scalar_select %p922, %s52, 1
        %s924 = smul.addr %s923, 8
        %s925 = smul.addr %s924, 4
        %s926 = scalar_lea.vmem %s10, %s925
        %p927 = pneg %p302
        %p928 = pneg %p299
        %s929 = sand.u32 %s315, 1
        %s930 = scalar_lea.sflag [#allocation19], %s929
        %s931 = sand.u32 %s315, 1
        %s932 = scalar_lea.vmem [#allocation18], %s931
        %p933 = pneg %p328
        %p934 = pneg %p325
        %p935 = scmp.lt.s32.totalorder %s52, 1
        %s936 = scalar_select %p935, %s52, 1
        %s937 = scalar_lea.vmem %s12, %s936
        %p938 = pneg %p354
        %p939 = pneg %p351
        %p940 = scmp.lt.s32.totalorder %s52, 1
        %s941 = scalar_select %p940, %s52, 1
        %s942 = scalar_lea.vmem %s13, %s941
        %p943 = pneg %p380
        %p944 = pneg %p377
        %p945 = scmp.lt.s32.totalorder %s52, 1
        %s946 = scalar_select %p945, %s52, 1
        %s947 = smul.addr %s946, 16
        %s948 = smul.addr %s947, 4
        %s949 = scalar_lea.vmem %s14, %s948
        %p950 = pneg %p406
        %p951 = pneg %p403
        %p952 = scmp.lt.s32.totalorder %s52, 1
        %s953 = scalar_select %p952, %s52, 1
        %s954 = smul.addr %s953, 2
        %s955 = scalar_lea.vmem %s15, %s954
        %p956 = pneg %p432
        %p957 = pneg %p429
        %p958 = scmp.lt.s32.totalorder %s52, 1
        %s959 = scalar_select %p958, %s52, 1
        %s960 = smul.addr %s959, 32
        %s961 = smul.addr %s960, 4
        %s962 = scalar_lea.vmem %s16, %s961
        %p963 = pneg %p458
        %p964 = pneg %p455
        %p965 = scmp.lt.s32.totalorder %s52, 1
        %s966 = scalar_select %p965, %s52, 1
        %s967 = scalar_lea.vmem %s17, %s966
        %p968 = pneg %p484
        %p969 = pneg %p481
        %p970 = pneg %p505
        %p971 = pneg %p502
        %p972 = pneg %p526
        %p973 = pneg %p523
        %p974 = pneg %p547
        %p975 = pneg %p544
        %p976 = pneg %p568
        %p977 = pneg %p565
        %p978 = scmp.lt.s32.totalorder %s52, 1
        %s979 = scalar_select %p978, %s52, 1
        %s980 = scalar_lea.vmem %s2, %s979
        %p981 = scmp.lt.s32.totalorder %s52, 1
        %s982 = scalar_select %p981, %s52, 1
        %s983 = scalar_lea.vmem %s3, %s982
        %p984 = scmp.lt.s32.totalorder %s52, 1
        %s985 = scalar_select %p984, %s52, 1
        %s986 = smul.addr %s985, 8
        %s987 = smul.addr %s986, 4
        %s988 = scalar_lea.vmem %s10, %s987
        %p989 = scmp.lt.s32.totalorder %s52, 1
        %s990 = scalar_select %p989, %s52, 1
        %s991 = scalar_lea.vmem %s12, %s990
        %p992 = scmp.lt.s32.totalorder %s52, 1
        %s993 = scalar_select %p992, %s52, 1
        %s994 = scalar_lea.vmem %s13, %s993
        %p995 = scmp.lt.s32.totalorder %s52, 1
        %s996 = scalar_select %p995, %s52, 1
        %s997 = smul.addr %s996, 16
        %s998 = smul.addr %s997, 4
        %s999 = scalar_lea.vmem %s14, %s998
        %p1000 = scmp.lt.s32.totalorder %s52, 1
        %s1001 = scalar_select %p1000, %s52, 1
        %s1002 = smul.addr %s1001, 2
        %s1003 = scalar_lea.vmem %s15, %s1002
        %p1004 = scmp.lt.s32.totalorder %s52, 1
        %s1005 = scalar_select %p1004, %s52, 1
        %s1006 = smul.addr %s1005, 32
        %s1007 = smul.addr %s1006, 4
        %s1008 = scalar_lea.vmem %s16, %s1007
        %p1009 = scmp.lt.s32.totalorder %s52, 1
        %s1010 = scalar_select %p1009, %s52, 1
        %s1011 = scalar_lea.vmem %s17, %s1010
        %p1013 = scmp.eq.s32.totalorder %s52, 0
        // Predicated region
        $region133: #{prompt_learner_forward.1} parent=99 // pred_check
          %p1014 = pneg %p1013
        $region134: #{prompt_learner_forward.1} parent=99 // pred_check_branch
          %1016 = sbr.rel (%p1014) target = $region136
        $region135: #{prompt_learner_forward.1} parent=99 // pred_region
          %v1017 = vld [vmem:[#allocation6] sm:$0xff]
          %v1018 = vld [vmem:[#allocation6 + $0x8] sm:$0xff]
          %v1019 = vld [vmem:[#allocation6 + $0x10] sm:$0xff]
          %v1020 = vld [vmem:[#allocation6 + $0x18] sm:$0xff]
          %v1021 = vld [vmem:[#allocation6 + $0x20] sm:$0xff]
          %v1022 = vld [vmem:[#allocation6 + $0x28] sm:$0xff]
          %v1023 = vld [vmem:[#allocation6 + $0x30] sm:$0xff]
          %v1024 = vld [vmem:[#allocation6 + $0x38] sm:$0xff]
          %vm1025 = vcmask 523264
          %1026 = vst.msk [vmem:[#allocation2] sm:$0xff] %vm1025, %v1017
          %1027 = vst.msk [vmem:[#allocation2 + $0x8] sm:$0xff] %vm1025, %v1018
          %1028 = vst.msk [vmem:[#allocation2 + $0x10] sm:$0xff] %vm1025, %v1019
          %1029 = vst.msk [vmem:[#allocation2 + $0x18] sm:$0xff] %vm1025, %v1020
          %1030 = vst.msk [vmem:[#allocation2 + $0x20] sm:$0xff] %vm1025, %v1021
          %1031 = vst.msk [vmem:[#allocation2 + $0x28] sm:$0xff] %vm1025, %v1022
          %1032 = vst.msk [vmem:[#allocation2 + $0x30] sm:$0xff] %vm1025, %v1023
          %1033 = vst.msk [vmem:[#allocation2 + $0x38] sm:$0xff] %vm1025, %v1024
          %v1034 = vlaneseq
          %v1035 = vshrl.u32 %v1034, 7
          %v1036 = vadd.s32 %v1035, 8
          %v1037 = vadd.s32 %v1035, 16
          %v1038 = vadd.s32 %v1035, 24
          %v1039 = vadd.s32 %v1035, 32
          %v1040 = vadd.s32 %v1035, 40
          %v1041 = vadd.s32 %v1035, 48
          %v1042 = vadd.s32 %v1035, 56
          %v1043 = vlaneseq
          %v1044 = vand.u32 %v1043, 127
          %vm1045 = vcmp.gt.s32.totalorder %v1044, %v1035
          %vm1046 = vcmp.gt.s32.totalorder %v1044, %v1036
          %vm1047 = vcmp.gt.s32.totalorder %v1044, %v1037
          %vm1048 = vcmp.gt.s32.totalorder %v1044, %v1038
          %vm1049 = vcmp.gt.s32.totalorder %v1044, %v1039
          %vm1050 = vcmp.gt.s32.totalorder %v1044, %v1040
          %vm1051 = vcmp.gt.s32.totalorder %v1044, %v1041
          %vm1052 = vcmp.gt.s32.totalorder %v1044, %v1042
          %vm1053 = vcmp.ge.s32.totalorder %v1035, 32
          %vm1054 = vcmp.ge.s32.totalorder %v1036, 32
          %vm1055 = vcmp.ge.s32.totalorder %v1037, 32
          %vm1056 = vcmp.ge.s32.totalorder %v1038, 32
          %vm1057 = vcmp.ge.s32.totalorder %v1039, 32
          %vm1058 = vcmp.ge.s32.totalorder %v1040, 32
          %vm1059 = vcmp.ge.s32.totalorder %v1041, 32
          %vm1060 = vcmp.ge.s32.totalorder %v1042, 32
          %vm1061 = vcmp.lt.s32.totalorder %v1044, 32
          %vm1062 = vmand %vm1053, %vm1061
          %vm1063 = vmand %vm1054, %vm1061
          %vm1064 = vmand %vm1055, %vm1061
          %vm1065 = vmand %vm1056, %vm1061
          %vm1066 = vmand %vm1057, %vm1061
          %vm1067 = vmand %vm1058, %vm1061
          %vm1068 = vmand %vm1059, %vm1061
          %vm1069 = vmand %vm1060, %vm1061
          %vm1070 = vmor %vm1045, %vm1062
          %vm1071 = vmor %vm1046, %vm1063
          %vm1072 = vmor %vm1047, %vm1064
          %vm1073 = vmor %vm1048, %vm1065
          %vm1074 = vmor %vm1049, %vm1066
          %vm1075 = vmor %vm1050, %vm1067
          %vm1076 = vmor %vm1051, %vm1068
          %vm1077 = vmor %vm1052, %vm1069
          %v1078 = vsel %vm1070, -1e+09, 0.0
          %v1079 = vsel %vm1071, -1e+09, 0.0
          %v1080 = vsel %vm1072, -1e+09, 0.0
          %v1081 = vsel %vm1073, -1e+09, 0.0
          %v1082 = vsel %vm1074, -1e+09, 0.0
          %v1083 = vsel %vm1075, -1e+09, 0.0
          %v1084 = vsel %vm1076, -1e+09, 0.0
          %v1085 = vsel %vm1077, -1e+09, 0.0
          %1086 = vst.msk [vmem:[#allocation3] sm:$0xff] %vm1025, %v1078
          %1087 = vst.msk [vmem:[#allocation3 + $0x8] sm:$0xff] %vm1025, %v1079
          %1088 = vst.msk [vmem:[#allocation3 + $0x10] sm:$0xff] %vm1025, %v1080
          %1089 = vst.msk [vmem:[#allocation3 + $0x18] sm:$0xff] %vm1025, %v1081
          %1090 = vst.msk [vmem:[#allocation3 + $0x20] sm:$0xff] %vm1025, %v1082
          %1091 = vst.msk [vmem:[#allocation3 + $0x28] sm:$0xff] %vm1025, %v1083
          %1092 = vst.msk [vmem:[#allocation3 + $0x30] sm:$0xff] %vm1025, %v1084
          %1093 = vst.msk [vmem:[#allocation3 + $0x38] sm:$0xff] %vm1025, %v1085
        $region136: #{prompt_learner_forward.1} parent=99 // pred_fallthru
          _
        %v1094 = vld [vmem:[#allocation2] sm:$0xff]
        %v1095 = vld [vmem:[#allocation2 + $0x8] sm:$0xff]
        %v1096 = vld [vmem:[#allocation2 + $0x10] sm:$0xff]
        %v1097 = vld [vmem:[#allocation2 + $0x18] sm:$0xff]
        %v1098 = vld [vmem:[#allocation2 + $0x20] sm:$0xff]
        %v1099 = vld [vmem:[#allocation2 + $0x28] sm:$0xff]
        %v1100 = vld [vmem:[#allocation2 + $0x30] sm:$0xff]
        %v1101 = vld [vmem:[#allocation2 + $0x38] sm:$0xff]
        %v1102 = vld [vmem:[#allocation3] sm:$0xff]
        %v1103 = vld [vmem:[#allocation3 + $0x8] sm:$0xff]
        %v1104 = vld [vmem:[#allocation3 + $0x10] sm:$0xff]
        %v1105 = vld [vmem:[#allocation3 + $0x18] sm:$0xff]
        %v1106 = vld [vmem:[#allocation3 + $0x20] sm:$0xff]
        %v1107 = vld [vmem:[#allocation3 + $0x28] sm:$0xff]
        %v1108 = vld [vmem:[#allocation3 + $0x30] sm:$0xff]
        %v1109 = vld [vmem:[#allocation3 + $0x38] sm:$0xff]
        %v1110 = vlaneseq
        %v1111 = vand.u32 %v1110, 127
        %v1112 = vld [vmem:[%s980] sm:$0x1]
        %v1113 = vld [vmem:[%s983] sm:$0x1]
        %vm1114 = vcmask 523264
        %v1115 = vsel %vm1114, %v1094, 0.0
        %1116 = vadd.xlane.f32.xlu0 %v1115
        %v1117 = vpop.xlane.xlu0 %1116
        %v1118 = vsel %vm1114, %v1095, 0.0
        %1119 = vadd.xlane.f32.xlu0 %v1118
        %v1120 = vpop.xlane.xlu0 %1119
        %v1121 = vsel %vm1114, %v1096, 0.0
        %1122 = vadd.xlane.f32.xlu0 %v1121
        %v1123 = vpop.xlane.xlu0 %1122
        %v1124 = vsel %vm1114, %v1097, 0.0
        %1125 = vadd.xlane.f32.xlu0 %v1124
        %v1126 = vpop.xlane.xlu0 %1125
        %v1127 = vsel %vm1114, %v1098, 0.0
        %1128 = vadd.xlane.f32.xlu0 %v1127
        %v1129 = vpop.xlane.xlu0 %1128
        %v1130 = vsel %vm1114, %v1099, 0.0
        %1131 = vadd.xlane.f32.xlu0 %v1130
        %v1132 = vpop.xlane.xlu0 %1131
        %v1133 = vsel %vm1114, %v1100, 0.0
        %1134 = vadd.xlane.f32.xlu0 %v1133
        %v1135 = vpop.xlane.xlu0 %1134
        %v1136 = vsel %vm1114, %v1101, 0.0
        %1137 = vadd.xlane.f32.xlu0 %v1136
        %v1138 = vpop.xlane.xlu0 %1137
        %v1139 = vrcp.pop 64.0
        %v1140 = vmul.f32 %v1117, %v1139
        %v1141 = vmul.f32 %v1120, %v1139
        %v1142 = vmul.f32 %v1123, %v1139
        %v1143 = vmul.f32 %v1126, %v1139
        %v1144 = vmul.f32 %v1129, %v1139
        %v1145 = vmul.f32 %v1132, %v1139
        %v1146 = vmul.f32 %v1135, %v1139
        %v1147 = vmul.f32 %v1138, %v1139
        %v1148 = vsub.f32 %v1094, %v1140
        %v1149 = vsub.f32 %v1095, %v1141
        %v1150 = vsub.f32 %v1096, %v1142
        %v1151 = vsub.f32 %v1097, %v1143
        %v1152 = vsub.f32 %v1098, %v1144
        %v1153 = vsub.f32 %v1099, %v1145
        %v1154 = vsub.f32 %v1100, %v1146
        %v1155 = vsub.f32 %v1101, %v1147
        %v1156 = vmul.f32 %v1148, %v1148
        %v1157 = vmul.f32 %v1149, %v1149
        %v1158 = vmul.f32 %v1150, %v1150
        %v1159 = vmul.f32 %v1151, %v1151
        %v1160 = vmul.f32 %v1152, %v1152
        %v1161 = vmul.f32 %v1153, %v1153
        %v1162 = vmul.f32 %v1154, %v1154
        %v1163 = vmul.f32 %v1155, %v1155
        %v1164 = vsel %vm1114, %v1156, 0.0
        %1165 = vadd.xlane.f32.xlu0 %v1164
        %v1166 = vpop.xlane.xlu0 %1165
        %v1167 = vsel %vm1114, %v1157, 0.0
        %1168 = vadd.xlane.f32.xlu0 %v1167
        %v1169 = vpop.xlane.xlu0 %1168
        %v1170 = vsel %vm1114, %v1158, 0.0
        %1171 = vadd.xlane.f32.xlu0 %v1170
        %v1172 = vpop.xlane.xlu0 %1171
        %v1173 = vsel %vm1114, %v1159, 0.0
        %1174 = vadd.xlane.f32.xlu0 %v1173
        %v1175 = vpop.xlane.xlu0 %1174
        %v1176 = vsel %vm1114, %v1160, 0.0
        %1177 = vadd.xlane.f32.xlu0 %v1176
        %v1178 = vpop.xlane.xlu0 %1177
        %v1179 = vsel %vm1114, %v1161, 0.0
        %1180 = vadd.xlane.f32.xlu0 %v1179
        %v1181 = vpop.xlane.xlu0 %1180
        %v1182 = vsel %vm1114, %v1162, 0.0
        %1183 = vadd.xlane.f32.xlu0 %v1182
        %v1184 = vpop.xlane.xlu0 %1183
        %v1185 = vsel %vm1114, %v1163, 0.0
        %1186 = vadd.xlane.f32.xlu0 %v1185
        %v1187 = vpop.xlane.xlu0 %1186
        %v1188 = vmul.f32 %v1166, %v1139
        %v1189 = vmul.f32 %v1169, %v1139
        %v1190 = vmul.f32 %v1172, %v1139
        %v1191 = vmul.f32 %v1175, %v1139
        %v1192 = vmul.f32 %v1178, %v1139
        %v1193 = vmul.f32 %v1181, %v1139
        %v1194 = vmul.f32 %v1184, %v1139
        %v1195 = vmul.f32 %v1187, %v1139
        %v1196 = vadd.f32 %v1188, 1e-05
        %v1197 = vadd.f32 %v1189, 1e-05
        %v1198 = vadd.f32 %v1190, 1e-05
        %v1199 = vadd.f32 %v1191, 1e-05
        %v1200 = vadd.f32 %v1192, 1e-05
        %v1201 = vadd.f32 %v1193, 1e-05
        %v1202 = vadd.f32 %v1194, 1e-05
        %v1203 = vadd.f32 %v1195, 1e-05
        %v1204 = vrsqrt.pop %v1196
        %v1205 = vrsqrt.pop %v1197
        %v1206 = vrsqrt.pop %v1198
        %v1207 = vrsqrt.pop %v1199
        %v1208 = vrsqrt.pop %v1200
        %v1209 = vrsqrt.pop %v1201
        %v1210 = vrsqrt.pop %v1202
        %v1211 = vrsqrt.pop %v1203
        %v1212 = vmul.f32 %v1148, %v1204
        %v1213 = vmul.f32 %v1149, %v1205
        %v1214 = vmul.f32 %v1150, %v1206
        %v1215 = vmul.f32 %v1151, %v1207
        %v1216 = vmul.f32 %v1152, %v1208
        %v1217 = vmul.f32 %v1153, %v1209
        %v1218 = vmul.f32 %v1154, %v1210
        %v1219 = vmul.f32 %v1155, %v1211
        %v1221 = vlaneseq
        %v1222 = vshrl.u32 %v1221, 7
        %v1223 = vsub.s32 0, %v1222
        %v1224 = vrot.slane %v1112, %v1223
        %v1226 = vmul.f32 %v1212, %v1224
        %v1227 = vmul.f32 %v1213, %v1224
        %v1228 = vmul.f32 %v1214, %v1224
        %v1229 = vmul.f32 %v1215, %v1224
        %v1230 = vmul.f32 %v1216, %v1224
        %v1231 = vmul.f32 %v1217, %v1224
        %v1232 = vmul.f32 %v1218, %v1224
        %v1233 = vmul.f32 %v1219, %v1224
        %v1235 = vlaneseq
        %v1236 = vshrl.u32 %v1235, 7
        %v1237 = vsub.s32 0, %v1236
        %v1238 = vrot.slane %v1113, %v1237
        %v1240 = vadd.f32 %v1226, %v1238
        %v1241 = vadd.f32 %v1227, %v1238
        %v1242 = vadd.f32 %v1228, %v1238
        %v1243 = vadd.f32 %v1229, %v1238
        %v1244 = vadd.f32 %v1230, %v1238
        %v1245 = vadd.f32 %v1231, %v1238
        %v1246 = vadd.f32 %v1232, %v1238
        %v1247 = vadd.f32 %v1233, %v1238
        %v1248 = vpack.c.bf16 %v1241, %v1240
        %v1249 = vpack.c.bf16 %v1243, %v1242
        %v1250 = vpack.c.bf16 %v1245, %v1244
        %v1251 = vpack.c.bf16 %v1247, %v1246
        %v1252 = vld [vmem:[%s816] sm:$0xf]
        %v1253 = vld [vmem:[%s816 + $0x4] sm:$0xf]
        %v1254 = vld [vmem:[%s816 + $0x8] sm:$0xf]
        %v1255 = vld [vmem:[%s816 + $0xc] sm:$0xf]
        %v1256 = vld [vmem:[%s816 + $0x10] sm:$0xf]
        %v1257 = vld [vmem:[%s816 + $0x14] sm:$0xf]
        %v1258 = vld [vmem:[%s816 + $0x18] sm:$0xf]
        %v1259 = vld [vmem:[%s816 + $0x1c] sm:$0xf]
        %v1260 = vld [vmem:[%s842] sm:$0x1]
        %v1262 = vlaneseq
        %v1263 = vshrl.u32 %v1262, 7
        %v1264 = vsub.s32 0, %v1263
        %v1265 = vrot.slane %v1260, %v1264
        %v1275 = vunpack.c.l.b16 %v1252
        %v1276 = vunpack.c.l.b16 %v1253
        %v1277 = vunpack.c.l.b16 %v1254
        %v1278 = vunpack.c.l.b16 %v1255
        %v1279 = vunpack.c.l.b16 %v1256
        %v1280 = vunpack.c.l.b16 %v1257
        %v1281 = vunpack.c.l.b16 %v1258
        %v1282 = vunpack.c.l.b16 %v1259
        %v1283 = vpack.c.b16 %v1276, %v1275
        %v1284 = vpack.c.b16 %v1278, %v1277
        %v1285 = vpack.c.b16 %v1280, %v1279
        %v1286 = vpack.c.b16 %v1282, %v1281
        %v1292 = vsel %vm1114, %v1248, 0
        %v1295 = vsel %vm1114, %v1249, 0
        %v1298 = vsel %vm1114, %v1250, 0
        %v1301 = vsel %vm1114, %v1251, 0
        %1303 = vmatprep.subr.bf16.mxu0 0
        %1304 = vmatpush1.bf16.msra.mxu0 %v1283
        %1305 = vmatprep.subr.bf16.mxu0 0
        %1306 = vmatpush1.bf16.msra.mxu0 %v1284
        %1307 = vmatprep.subr.bf16.mxu0 0
        %1308 = vmatpush1.bf16.msra.mxu0 %v1285
        %1309 = vmatprep.subr.bf16.mxu0 0
        %1310 = vmatpush1.bf16.msra.mxu0 %v1286
        %1311 = vmatprep.subr.bf16.mxu0 0
        %1312 = vmatpush1.bf16.msra.mxu0 0
        %1313 = vmatprep.subr.bf16.mxu0 0
        %1314 = vmatpush1.bf16.msra.mxu0 0
        %1315 = vmatprep.subr.bf16.mxu0 0
        %1316 = vmatpush1.bf16.msra.mxu0 0
        %1317 = vmatprep.subr.bf16.mxu0 0
        %1318 = vmatpush1.bf16.msra.mxu0 0
        %1319 = vmatprep.subr.bf16.mxu0 0
        %1320 = vmatpush1.bf16.msra.mxu0 0
        %1321 = vmatprep.subr.bf16.mxu0 0
        %1322 = vmatpush1.bf16.msra.mxu0 0
        %1323 = vmatprep.subr.bf16.mxu0 0
        %1324 = vmatpush1.bf16.msra.mxu0 0
        %1325 = vmatprep.subr.bf16.mxu0 0
        %1326 = vmatpush1.bf16.msra.mxu0 0
        %1327 = vmatprep.subr.bf16.mxu0 0
        %1328 = vmatpush1.bf16.msra.mxu0 0
        %1329 = vmatprep.subr.bf16.mxu0 0
        %1330 = vmatpush1.bf16.msra.mxu0 0
        %1331 = vmatprep.subr.bf16.mxu0 0
        %1332 = vmatpush1.bf16.msra.mxu0 0
        %1333 = vmatprep.subr.bf16.mxu0 0
        %1334 = vmatpush1.bf16.msra.mxu0 0
        %1335 = vmatprep.mubr.bf16.mxu0 0
        %1336 = vmatmul.mubr.bf16.gmra.mrb[0].mxu0 %v1292
        %v1337 = vpop.f32.mrb[0].mxu0
        %v1338 = vadd.f32 %v1265, %v1337
        %v1339 = vpop.f32.mrb[0].mxu0
        %v1340 = vpop.f32.mrb[0].mxu0
        %v1341 = vadd.f32 %v1265, %v1340
        %v1342 = vpop.f32.mrb[0].mxu0
        %1343 = vmatprep.mubr.bf16.mxu0 0
        %1344 = vmatmul.mubr.bf16.gmra.mrb[0].mxu0 %v1295
        %v1345 = vpop.f32.mrb[0].mxu0
        %v1346 = vadd.f32 %v1265, %v1345
        %v1347 = vpop.f32.mrb[0].mxu0
        %v1348 = vpop.f32.mrb[0].mxu0
        %v1349 = vadd.f32 %v1265, %v1348
        %v1350 = vpop.f32.mrb[0].mxu0
        %1351 = vmatprep.mubr.bf16.mxu0 0
        %1352 = vmatmul.mubr.bf16.gmra.mrb[0].mxu0 %v1298
        %v1353 = vpop.f32.mrb[0].mxu0
        %v1354 = vadd.f32 %v1265, %v1353
        %v1355 = vpop.f32.mrb[0].mxu0
        %v1356 = vpop.f32.mrb[0].mxu0
        %v1357 = vadd.f32 %v1265, %v1356
        %v1358 = vpop.f32.mrb[0].mxu0
        %1359 = vmatprep.mubr.bf16.mxu0 0
        %1360 = vmatmul.mubr.bf16.gmra.mrb[0].mxu0 %v1301
        %v1361 = vpop.f32.mrb[0].mxu0
        %v1362 = vadd.f32 %v1265, %v1361
        %v1363 = vpop.f32.mrb[0].mxu0
        %v1364 = vpop.f32.mrb[0].mxu0
        %v1365 = vadd.f32 %v1265, %v1364
        %v1366 = vpop.f32.mrb[0].mxu0
        %1367 = vdwg.mxu0
        %v1368 = vld [vmem:[%s825] sm:$0xf]
        %v1369 = vld [vmem:[%s825 + $0x4] sm:$0xf]
        %v1370 = vld [vmem:[%s825 + $0x8] sm:$0xf]
        %v1371 = vld [vmem:[%s825 + $0xc] sm:$0xf]
        %v1372 = vld [vmem:[%s825 + $0x10] sm:$0xf]
        %v1373 = vld [vmem:[%s825 + $0x14] sm:$0xf]
        %v1374 = vld [vmem:[%s825 + $0x18] sm:$0xf]
        %v1375 = vld [vmem:[%s825 + $0x1c] sm:$0xf]
        %v1376 = vld [vmem:[%s850] sm:$0x1]
        %v1378 = vlaneseq
        %v1379 = vshrl.u32 %v1378, 7
        %v1380 = vsub.s32 0, %v1379
        %v1381 = vrot.slane %v1376, %v1380
        %v1391 = vunpack.c.l.b16 %v1368
        %v1392 = vunpack.c.l.b16 %v1369
        %v1393 = vunpack.c.l.b16 %v1370
        %v1394 = vunpack.c.l.b16 %v1371
        %v1395 = vunpack.c.l.b16 %v1372
        %v1396 = vunpack.c.l.b16 %v1373
        %v1397 = vunpack.c.l.b16 %v1374
        %v1398 = vunpack.c.l.b16 %v1375
        %v1399 = vpack.c.b16 %v1392, %v1391
        %v1400 = vpack.c.b16 %v1394, %v1393
        %v1401 = vpack.c.b16 %v1396, %v1395
        %v1402 = vpack.c.b16 %v1398, %v1397
        %1407 = vmatprep.subr.bf16.mxu0 0
        %1408 = vmatpush1.bf16.msra.mxu0 %v1399
        %1409 = vmatprep.subr.bf16.mxu0 0
        %1410 = vmatpush1.bf16.msra.mxu0 %v1400
        %1411 = vmatprep.subr.bf16.mxu0 0
        %1412 = vmatpush1.bf16.msra.mxu0 %v1401
        %1413 = vmatprep.subr.bf16.mxu0 0
        %1414 = vmatpush1.bf16.msra.mxu0 %v1402
        %1415 = vmatprep.subr.bf16.mxu0 0
        %1416 = vmatpush1.bf16.msra.mxu0 0
        %1417 = vmatprep.subr.bf16.mxu0 0
        %1418 = vmatpush1.bf16.msra.mxu0 0
        %1419 = vmatprep.subr.bf16.mxu0 0
        %1420 = vmatpush1.bf16.msra.mxu0 0
        %1421 = vmatprep.subr.bf16.mxu0 0
        %1422 = vmatpush1.bf16.msra.mxu0 0
        %1423 = vmatprep.subr.bf16.mxu0 0
        %1424 = vmatpush1.bf16.msra.mxu0 0
        %1425 = vmatprep.subr.bf16.mxu0 0
        %1426 = vmatpush1.bf16.msra.mxu0 0
        %1427 = vmatprep.subr.bf16.mxu0 0
        %1428 = vmatpush1.bf16.msra.mxu0 0
        %1429 = vmatprep.subr.bf16.mxu0 0
        %1430 = vmatpush1.bf16.msra.mxu0 0
        %1431 = vmatprep.subr.bf16.mxu0 0
        %1432 = vmatpush1.bf16.msra.mxu0 0
        %1433 = vmatprep.subr.bf16.mxu0 0
        %1434 = vmatpush1.bf16.msra.mxu0 0
        %1435 = vmatprep.subr.bf16.mxu0 0
        %1436 = vmatpush1.bf16.msra.mxu0 0
        %1437 = vmatprep.subr.bf16.mxu0 0
        %1438 = vmatpush1.bf16.msra.mxu0 0
        %1439 = vmatprep.mubr.bf16.mxu0 0
        %1440 = vmatmul.mubr.bf16.gmra.mrb[0].mxu0 %v1292
        %v1441 = vpop.f32.mrb[0].mxu0
        %v1442 = vadd.f32 %v1381, %v1441
        %v1443 = vpop.f32.mrb[0].mxu0
        %v1444 = vpop.f32.mrb[0].mxu0
        %v1445 = vadd.f32 %v1381, %v1444
        %v1446 = vpop.f32.mrb[0].mxu0
        %1447 = vmatprep.mubr.bf16.mxu0 0
        %1448 = vmatmul.mubr.bf16.gmra.mrb[0].mxu0 %v1295
        %v1449 = vpop.f32.mrb[0].mxu0
        %v1450 = vadd.f32 %v1381, %v1449
        %v1451 = vpop.f32.mrb[0].mxu0
        %v1452 = vpop.f32.mrb[0].mxu0
        %v1453 = vadd.f32 %v1381, %v1452
        %v1454 = vpop.f32.mrb[0].mxu0
        %1455 = vmatprep.mubr.bf16.mxu0 0
        %1456 = vmatmul.mubr.bf16.gmra.mrb[0].mxu0 %v1298
        %v1457 = vpop.f32.mrb[0].mxu0
        %v1458 = vadd.f32 %v1381, %v1457
        %v1459 = vpop.f32.mrb[0].mxu0
        %v1460 = vpop.f32.mrb[0].mxu0
        %v1461 = vadd.f32 %v1381, %v1460
        %v1462 = vpop.f32.mrb[0].mxu0
        %1463 = vmatprep.mubr.bf16.mxu0 0
        %1464 = vmatmul.mubr.bf16.gmra.mrb[0].mxu0 %v1301
        %v1465 = vpop.f32.mrb[0].mxu0
        %v1466 = vadd.f32 %v1381, %v1465
        %v1467 = vpop.f32.mrb[0].mxu0
        %v1468 = vpop.f32.mrb[0].mxu0
        %v1469 = vadd.f32 %v1381, %v1468
        %v1470 = vpop.f32.mrb[0].mxu0
        %1471 = vdwg.mxu0
        %v1472 = vld [vmem:[%s834] sm:$0xf]
        %v1473 = vld [vmem:[%s834 + $0x4] sm:$0xf]
        %v1474 = vld [vmem:[%s834 + $0x8] sm:$0xf]
        %v1475 = vld [vmem:[%s834 + $0xc] sm:$0xf]
        %v1476 = vld [vmem:[%s834 + $0x10] sm:$0xf]
        %v1477 = vld [vmem:[%s834 + $0x14] sm:$0xf]
        %v1478 = vld [vmem:[%s834 + $0x18] sm:$0xf]
        %v1479 = vld [vmem:[%s834 + $0x1c] sm:$0xf]
        %v1480 = vld [vmem:[%s858] sm:$0x1]
        %v1482 = vlaneseq
        %v1483 = vshrl.u32 %v1482, 7
        %v1484 = vsub.s32 0, %v1483
        %v1485 = vrot.slane %v1480, %v1484
        %v1495 = vunpack.c.l.b16 %v1472
        %v1496 = vunpack.c.l.b16 %v1473
        %v1497 = vunpack.c.l.b16 %v1474
        %v1498 = vunpack.c.l.b16 %v1475
        %v1499 = vunpack.c.l.b16 %v1476
        %v1500 = vunpack.c.l.b16 %v1477
        %v1501 = vunpack.c.l.b16 %v1478
        %v1502 = vunpack.c.l.b16 %v1479
        %v1503 = vpack.c.b16 %v1496, %v1495
        %v1504 = vpack.c.b16 %v1498, %v1497
        %v1505 = vpack.c.b16 %v1500, %v1499
        %v1506 = vpack.c.b16 %v1502, %v1501
        %1511 = vmatprep.subr.bf16.mxu0 0
        %1512 = vmatpush1.bf16.msra.mxu0 %v1503
        %1513 = vmatprep.subr.bf16.mxu0 0
        %1514 = vmatpush1.bf16.msra.mxu0 %v1504
        %1515 = vmatprep.subr.bf16.mxu0 0
        %1516 = vmatpush1.bf16.msra.mxu0 %v1505
        %1517 = vmatprep.subr.bf16.mxu0 0
        %1518 = vmatpush1.bf16.msra.mxu0 %v1506
        %1519 = vmatprep.subr.bf16.mxu0 0
        %1520 = vmatpush1.bf16.msra.mxu0 0
        %1521 = vmatprep.subr.bf16.mxu0 0
        %1522 = vmatpush1.bf16.msra.mxu0 0
        %1523 = vmatprep.subr.bf16.mxu0 0
        %1524 = vmatpush1.bf16.msra.mxu0 0
        %1525 = vmatprep.subr.bf16.mxu0 0
        %1526 = vmatpush1.bf16.msra.mxu0 0
        %1527 = vmatprep.subr.bf16.mxu0 0
        %1528 = vmatpush1.bf16.msra.mxu0 0
        %1529 = vmatprep.subr.bf16.mxu0 0
        %1530 = vmatpush1.bf16.msra.mxu0 0
        %1531 = vmatprep.subr.bf16.mxu0 0
        %1532 = vmatpush1.bf16.msra.mxu0 0
        %1533 = vmatprep.subr.bf16.mxu0 0
        %1534 = vmatpush1.bf16.msra.mxu0 0
        %1535 = vmatprep.subr.bf16.mxu0 0
        %1536 = vmatpush1.bf16.msra.mxu0 0
        %1537 = vmatprep.subr.bf16.mxu0 0
        %1538 = vmatpush1.bf16.msra.mxu0 0
        %1539 = vmatprep.subr.bf16.mxu0 0
        %1540 = vmatpush1.bf16.msra.mxu0 0
        %1541 = vmatprep.subr.bf16.mxu0 0
        %1542 = vmatpush1.bf16.msra.mxu0 0
        %1543 = vmatprep.mubr.bf16.mxu0 0
        %1544 = vmatmul.mubr.bf16.gmra.mrb[0].mxu0 %v1292
        %v1545 = vpop.f32.mrb[0].mxu0
        %v1546 = vadd.f32 %v1485, %v1545
        %v1547 = vpop.f32.mrb[0].mxu0
        %v1548 = vpop.f32.mrb[0].mxu0
        %v1549 = vadd.f32 %v1485, %v1548
        %v1550 = vpop.f32.mrb[0].mxu0
        %1551 = vmatprep.mubr.bf16.mxu0 0
        %1552 = vmatmul.mubr.bf16.gmra.mrb[0].mxu0 %v1295
        %v1553 = vpop.f32.mrb[0].mxu0
        %v1554 = vadd.f32 %v1485, %v1553
        %v1555 = vpop.f32.mrb[0].mxu0
        %v1556 = vpop.f32.mrb[0].mxu0
        %v1557 = vadd.f32 %v1485, %v1556
        %v1558 = vpop.f32.mrb[0].mxu0
        %1559 = vmatprep.mubr.bf16.mxu0 0
        %1560 = vmatmul.mubr.bf16.gmra.mrb[0].mxu0 %v1298
        %v1561 = vpop.f32.mrb[0].mxu0
        %v1562 = vadd.f32 %v1485, %v1561
        %v1563 = vpop.f32.mrb[0].mxu0
        %v1564 = vpop.f32.mrb[0].mxu0
        %v1565 = vadd.f32 %v1485, %v1564
        %v1566 = vpop.f32.mrb[0].mxu0
        %1567 = vmatprep.mubr.bf16.mxu0 0
        %1568 = vmatmul.mubr.bf16.gmra.mrb[0].mxu0 %v1301
        %v1569 = vpop.f32.mrb[0].mxu0
        %v1570 = vadd.f32 %v1485, %v1569
        %v1571 = vpop.f32.mrb[0].mxu0
        %v1572 = vpop.f32.mrb[0].mxu0
        %v1573 = vadd.f32 %v1485, %v1572
        %v1574 = vpop.f32.mrb[0].mxu0
        %1575 = vdwg.mxu0
        %v1576 = vmul.f32 %v1338, 0.25
        %v1577 = vmul.f32 %v1341, 0.25
        %v1578 = vmul.f32 %v1346, 0.25
        %v1579 = vmul.f32 %v1349, 0.25
        %v1580 = vmul.f32 %v1354, 0.25
        %v1581 = vmul.f32 %v1357, 0.25
        %v1582 = vmul.f32 %v1362, 0.25
        %v1583 = vmul.f32 %v1365, 0.25
        %v1584 = vpack.c.bf16 %v1445, %v1442
        %v1585 = vpack.c.bf16 %v1453, %v1450
        %v1586 = vpack.c.bf16 %v1461, %v1458
        %v1587 = vpack.c.bf16 %v1469, %v1466
        %vm1588 = vcmp.ge.s32.totalorder %v1111, 0
        %vm1589 = vcmp.lt.s32.totalorder %v1111, 16
        %vm1590 = vmand %vm1588, %vm1589
        %v1591 = vsel %vm1590, 1, 0
        %v1592 = vcvt.s32.f32 %v1591
        %v1593 = vmul.f32 %v1576, %v1592
        %v1594 = vmul.f32 %v1577, %v1592
        %v1595 = vmul.f32 %v1578, %v1592
        %v1596 = vmul.f32 %v1579, %v1592
        %v1597 = vmul.f32 %v1580, %v1592
        %v1598 = vmul.f32 %v1581, %v1592
        %v1599 = vmul.f32 %v1582, %v1592
        %v1600 = vmul.f32 %v1583, %v1592
        %v1601 = vpack.c.bf16 %v1594, %v1593
        %v1602 = vpack.c.bf16 %v1596, %v1595
        %v1603 = vpack.c.bf16 %v1598, %v1597
        %v1604 = vpack.c.bf16 %v1600, %v1599
        %v1606 = vsel %vm1114, %v1601, 0
        %v1609 = vsel %vm1114, %v1602, 0
        %v1612 = vsel %vm1114, %v1603, 0
        %v1615 = vsel %vm1114, %v1604, 0
        %v1618 = vsel %vm1114, %v1584, 0
        %v1621 = vsel %vm1114, %v1585, 0
        %v1624 = vsel %vm1114, %v1586, 0
        %v1627 = vsel %vm1114, %v1587, 0
        %1629 = vmatprep.subr.bf16.mxu0 0
        %1630 = vmatpush1.bf16.xpose.msra.mxu0 %v1618
        %1631 = vmatprep.subr.bf16.mxu0 0
        %1632 = vmatpush1.bf16.xpose.msra.mxu0 %v1621
        %1633 = vmatprep.subr.bf16.mxu0 0
        %1634 = vmatpush1.bf16.xpose.msra.mxu0 %v1624
        %1635 = vmatprep.subr.bf16.mxu0 0
        %1636 = vmatpush1.bf16.xpose.msra.mxu0 %v1627
        %1637 = vmatprep.subr.bf16.mxu0 0
        %1638 = vmatpush1.bf16.xpose.msra.mxu0 0
        %1639 = vmatprep.subr.bf16.mxu0 0
        %1640 = vmatpush1.bf16.xpose.msra.mxu0 0
        %1641 = vmatprep.subr.bf16.mxu0 0
        %1642 = vmatpush1.bf16.xpose.msra.mxu0 0
        %1643 = vmatprep.subr.bf16.mxu0 0
        %1644 = vmatpush1.bf16.xpose.msra.mxu0 0
        %1645 = vmatprep.subr.bf16.mxu0 0
        %1646 = vmatpush1.bf16.xpose.msra.mxu0 0
        %1647 = vmatprep.subr.bf16.mxu0 0
        %1648 = vmatpush1.bf16.xpose.msra.mxu0 0
        %1649 = vmatprep.subr.bf16.mxu0 0
        %1650 = vmatpush1.bf16.xpose.msra.mxu0 0
        %1651 = vmatprep.subr.bf16.mxu0 0
        %1652 = vmatpush1.bf16.xpose.msra.mxu0 0
        %1653 = vmatprep.subr.bf16.mxu0 0
        %1654 = vmatpush1.bf16.xpose.msra.mxu0 0
        %1655 = vmatprep.subr.bf16.mxu0 0
        %1656 = vmatpush1.bf16.xpose.msra.mxu0 0
        %1657 = vmatprep.subr.bf16.mxu0 0
        %1658 = vmatpush1.bf16.xpose.msra.mxu0 0
        %1659 = vmatprep.subr.bf16.mxu0 0
        %1660 = vmatpush1.bf16.xpose.msra.mxu0 0
        %1661 = vmatprep.mubr.bf16.mxu0 0
        %1662 = vmatmul.mubr.bf16.gmra.mrb[0].mxu0 %v1606
        %v1663 = vpop.f32.mrb[0].mxu0
        %v1664 = vadd.f32 %v1102, %v1663
        %v1665 = vpop.f32.mrb[0].mxu0
        %v1666 = vpop.f32.mrb[0].mxu0
        %v1667 = vadd.f32 %v1103, %v1666
        %v1668 = vpop.f32.mrb[0].mxu0
        %1669 = vmatprep.mubr.bf16.mxu0 0
        %1670 = vmatmul.mubr.bf16.gmra.mrb[0].mxu0 %v1609
        %v1671 = vpop.f32.mrb[0].mxu0
        %v1672 = vadd.f32 %v1104, %v1671
        %v1673 = vpop.f32.mrb[0].mxu0
        %v1674 = vpop.f32.mrb[0].mxu0
        %v1675 = vadd.f32 %v1105, %v1674
        %v1676 = vpop.f32.mrb[0].mxu0
        %1677 = vmatprep.mubr.bf16.mxu0 0
        %1678 = vmatmul.mubr.bf16.gmra.mrb[0].mxu0 %v1612
        %v1679 = vpop.f32.mrb[0].mxu0
        %v1680 = vadd.f32 %v1106, %v1679
        %v1681 = vpop.f32.mrb[0].mxu0
        %v1682 = vpop.f32.mrb[0].mxu0
        %v1683 = vadd.f32 %v1107, %v1682
        %v1684 = vpop.f32.mrb[0].mxu0
        %1685 = vmatprep.mubr.bf16.mxu0 0
        %1686 = vmatmul.mubr.bf16.gmra.mrb[0].mxu0 %v1615
        %v1687 = vpop.f32.mrb[0].mxu0
        %v1688 = vadd.f32 %v1108, %v1687
        %v1689 = vpop.f32.mrb[0].mxu0
        %v1690 = vpop.f32.mrb[0].mxu0
        %v1691 = vadd.f32 %v1109, %v1690
        %v1692 = vpop.f32.mrb[0].mxu0
        %1693 = vdwg.mxu0
        %v1694 = vsel %vm1114, %v1664, -inf
        %1695 = vmax.xlane.f32.xlu0 %v1694
        %v1696 = vpop.xlane.xlu0 %1695
        %v1697 = vsel %vm1114, %v1667, -inf
        %1698 = vmax.xlane.f32.xlu0 %v1697
        %v1699 = vpop.xlane.xlu0 %1698
        %v1700 = vsel %vm1114, %v1672, -inf
        %1701 = vmax.xlane.f32.xlu0 %v1700
        %v1702 = vpop.xlane.xlu0 %1701
        %v1703 = vsel %vm1114, %v1675, -inf
        %1704 = vmax.xlane.f32.xlu0 %v1703
        %v1705 = vpop.xlane.xlu0 %1704
        %v1706 = vsel %vm1114, %v1680, -inf
        %1707 = vmax.xlane.f32.xlu0 %v1706
        %v1708 = vpop.xlane.xlu0 %1707
        %v1709 = vsel %vm1114, %v1683, -inf
        %1710 = vmax.xlane.f32.xlu0 %v1709
        %v1711 = vpop.xlane.xlu0 %1710
        %v1712 = vsel %vm1114, %v1688, -inf
        %1713 = vmax.xlane.f32.xlu0 %v1712
        %v1714 = vpop.xlane.xlu0 %1713
        %v1715 = vsel %vm1114, %v1691, -inf
        %1716 = vmax.xlane.f32.xlu0 %v1715
        %v1717 = vpop.xlane.xlu0 %1716
        %v1718 = vsub.f32 %v1664, %v1696
        %v1719 = vsub.f32 %v1667, %v1699
        %v1720 = vsub.f32 %v1672, %v1702
        %v1721 = vsub.f32 %v1675, %v1705
        %v1722 = vsub.f32 %v1680, %v1708
        %v1723 = vsub.f32 %v1683, %v1711
        %v1724 = vsub.f32 %v1688, %v1714
        %v1725 = vsub.f32 %v1691, %v1717
        %v1726 = vmul.f32 %v1718, 1.442695
        %v1727 = vpow.pop %v1726
        %v1728 = vmul.f32 %v1719, 1.442695
        %v1729 = vpow.pop %v1728
        %v1730 = vmul.f32 %v1720, 1.442695
        %v1731 = vpow.pop %v1730
        %v1732 = vmul.f32 %v1721, 1.442695
        %v1733 = vpow.pop %v1732
        %v1734 = vmul.f32 %v1722, 1.442695
        %v1735 = vpow.pop %v1734
        %v1736 = vmul.f32 %v1723, 1.442695
        %v1737 = vpow.pop %v1736
        %v1738 = vmul.f32 %v1724, 1.442695
        %v1739 = vpow.pop %v1738
        %v1740 = vmul.f32 %v1725, 1.442695
        %v1741 = vpow.pop %v1740
        %v1742 = vsel %vm1114, %v1727, 0.0
        %1743 = vadd.xlane.f32.xlu0 %v1742
        %v1744 = vpop.xlane.xlu0 %1743
        %v1745 = vsel %vm1114, %v1729, 0.0
        %1746 = vadd.xlane.f32.xlu0 %v1745
        %v1747 = vpop.xlane.xlu0 %1746
        %v1748 = vsel %vm1114, %v1731, 0.0
        %1749 = vadd.xlane.f32.xlu0 %v1748
        %v1750 = vpop.xlane.xlu0 %1749
        %v1751 = vsel %vm1114, %v1733, 0.0
        %1752 = vadd.xlane.f32.xlu0 %v1751
        %v1753 = vpop.xlane.xlu0 %1752
        %v1754 = vsel %vm1114, %v1735, 0.0
        %1755 = vadd.xlane.f32.xlu0 %v1754
        %v1756 = vpop.xlane.xlu0 %1755
        %v1757 = vsel %vm1114, %v1737, 0.0
        %1758 = vadd.xlane.f32.xlu0 %v1757
        %v1759 = vpop.xlane.xlu0 %1758
        %v1760 = vsel %vm1114, %v1739, 0.0
        %1761 = vadd.xlane.f32.xlu0 %v1760
        %v1762 = vpop.xlane.xlu0 %1761
        %v1763 = vsel %vm1114, %v1741, 0.0
        %1764 = vadd.xlane.f32.xlu0 %v1763
        %v1765 = vpop.xlane.xlu0 %1764
        %v1766 = vrcp.pop %v1744
        %v1767 = vrcp.pop %v1747
        %v1768 = vrcp.pop %v1750
        %v1769 = vrcp.pop %v1753
        %v1770 = vrcp.pop %v1756
        %v1771 = vrcp.pop %v1759
        %v1772 = vrcp.pop %v1762
        %v1773 = vrcp.pop %v1765
        %v1774 = vmul.f32 %v1727, %v1766
        %v1775 = vmul.f32 %v1729, %v1767
        %v1776 = vmul.f32 %v1731, %v1768
        %v1777 = vmul.f32 %v1733, %v1769
        %v1778 = vmul.f32 %v1735, %v1770
        %v1779 = vmul.f32 %v1737, %v1771
        %v1780 = vmul.f32 %v1739, %v1772
        %v1781 = vmul.f32 %v1741, %v1773
        %v1782 = vpack.c.bf16 %v1775, %v1774
        %v1783 = vpack.c.bf16 %v1777, %v1776
        %v1784 = vpack.c.bf16 %v1779, %v1778
        %v1785 = vpack.c.bf16 %v1781, %v1780
        %v1786 = vmul.f32 %v1546, %v1592
        %v1787 = vmul.f32 %v1549, %v1592
        %v1788 = vmul.f32 %v1554, %v1592
        %v1789 = vmul.f32 %v1557, %v1592
        %v1790 = vmul.f32 %v1562, %v1592
        %v1791 = vmul.f32 %v1565, %v1592
        %v1792 = vmul.f32 %v1570, %v1592
        %v1793 = vmul.f32 %v1573, %v1592
        %v1794 = vpack.c.bf16 %v1787, %v1786
        %v1795 = vpack.c.bf16 %v1789, %v1788
        %v1796 = vpack.c.bf16 %v1791, %v1790
        %v1797 = vpack.c.bf16 %v1793, %v1792
        %vm1798 = vcmp.ge.s32.totalorder %v1111, 16
        %vm1799 = vcmp.lt.s32.totalorder %v1111, 32
        %vm1800 = vmand %vm1798, %vm1799
        %v1801 = vsel %vm1800, 1, 0
        %v1802 = vcvt.s32.f32 %v1801
        %v1803 = vmul.f32 %v1576, %v1802
        %v1804 = vmul.f32 %v1577, %v1802
        %v1805 = vmul.f32 %v1578, %v1802
        %v1806 = vmul.f32 %v1579, %v1802
        %v1807 = vmul.f32 %v1580, %v1802
        %v1808 = vmul.f32 %v1581, %v1802
        %v1809 = vmul.f32 %v1582, %v1802
        %v1810 = vmul.f32 %v1583, %v1802
        %v1811 = vpack.c.bf16 %v1804, %v1803
        %v1812 = vpack.c.bf16 %v1806, %v1805
        %v1813 = vpack.c.bf16 %v1808, %v1807
        %v1814 = vpack.c.bf16 %v1810, %v1809
        %v1816 = vsel %vm1114, %v1811, 0
        %v1819 = vsel %vm1114, %v1812, 0
        %v1822 = vsel %vm1114, %v1813, 0
        %v1825 = vsel %vm1114, %v1814, 0
        %1827 = vmatprep.subr.bf16.mxu0 0
        %1828 = vmatpush1.bf16.xpose.msra.mxu0 %v1618
        %1829 = vmatprep.subr.bf16.mxu0 0
        %1830 = vmatpush1.bf16.xpose.msra.mxu0 %v1621
        %1831 = vmatprep.subr.bf16.mxu0 0
        %1832 = vmatpush1.bf16.xpose.msra.mxu0 %v1624
        %1833 = vmatprep.subr.bf16.mxu0 0
        %1834 = vmatpush1.bf16.xpose.msra.mxu0 %v1627
        %1835 = vmatprep.subr.bf16.mxu0 0
        %1836 = vmatpush1.bf16.xpose.msra.mxu0 0
        %1837 = vmatprep.subr.bf16.mxu0 0
        %1838 = vmatpush1.bf16.xpose.msra.mxu0 0
        %1839 = vmatprep.subr.bf16.mxu0 0
        %1840 = vmatpush1.bf16.xpose.msra.mxu0 0
        %1841 = vmatprep.subr.bf16.mxu0 0
        %1842 = vmatpush1.bf16.xpose.msra.mxu0 0
        %1843 = vmatprep.subr.bf16.mxu0 0
        %1844 = vmatpush1.bf16.xpose.msra.mxu0 0
        %1845 = vmatprep.subr.bf16.mxu0 0
        %1846 = vmatpush1.bf16.xpose.msra.mxu0 0
        %1847 = vmatprep.subr.bf16.mxu0 0
        %1848 = vmatpush1.bf16.xpose.msra.mxu0 0
        %1849 = vmatprep.subr.bf16.mxu0 0
        %1850 = vmatpush1.bf16.xpose.msra.mxu0 0
        %1851 = vmatprep.subr.bf16.mxu0 0
        %1852 = vmatpush1.bf16.xpose.msra.mxu0 0
        %1853 = vmatprep.subr.bf16.mxu0 0
        %1854 = vmatpush1.bf16.xpose.msra.mxu0 0
        %1855 = vmatprep.subr.bf16.mxu0 0
        %1856 = vmatpush1.bf16.xpose.msra.mxu0 0
        %1857 = vmatprep.subr.bf16.mxu0 0
        %1858 = vmatpush1.bf16.xpose.msra.mxu0 0
        %1859 = vmatprep.mubr.bf16.mxu0 0
        %1860 = vmatmul.mubr.bf16.gmra.mrb[0].mxu0 %v1816
        %v1861 = vpop.f32.mrb[0].mxu0
        %v1862 = vadd.f32 %v1102, %v1861
        %v1863 = vpop.f32.mrb[0].mxu0
        %v1864 = vpop.f32.mrb[0].mxu0
        %v1865 = vadd.f32 %v1103, %v1864
        %v1866 = vpop.f32.mrb[0].mxu0
        %1867 = vmatprep.mubr.bf16.mxu0 0
        %1868 = vmatmul.mubr.bf16.gmra.mrb[0].mxu0 %v1819
        %v1869 = vpop.f32.mrb[0].mxu0
        %v1870 = vadd.f32 %v1104, %v1869
        %v1871 = vpop.f32.mrb[0].mxu0
        %v1872 = vpop.f32.mrb[0].mxu0
        %v1873 = vadd.f32 %v1105, %v1872
        %v1874 = vpop.f32.mrb[0].mxu0
        %1875 = vmatprep.mubr.bf16.mxu0 0
        %1876 = vmatmul.mubr.bf16.gmra.mrb[0].mxu0 %v1822
        %v1877 = vpop.f32.mrb[0].mxu0
        %v1878 = vadd.f32 %v1106, %v1877
        %v1879 = vpop.f32.mrb[0].mxu0
        %v1880 = vpop.f32.mrb[0].mxu0
        %v1881 = vadd.f32 %v1107, %v1880
        %v1882 = vpop.f32.mrb[0].mxu0
        %1883 = vmatprep.mubr.bf16.mxu0 0
        %1884 = vmatmul.mubr.bf16.gmra.mrb[0].mxu0 %v1825
        %v1885 = vpop.f32.mrb[0].mxu0
        %v1886 = vadd.f32 %v1108, %v1885
        %v1887 = vpop.f32.mrb[0].mxu0
        %v1888 = vpop.f32.mrb[0].mxu0
        %v1889 = vadd.f32 %v1109, %v1888
        %v1890 = vpop.f32.mrb[0].mxu0
        %1891 = vdwg.mxu0
        %v1892 = vsel %vm1114, %v1862, -inf
        %1893 = vmax.xlane.f32.xlu0 %v1892
        %v1894 = vpop.xlane.xlu0 %1893
        %v1895 = vsel %vm1114, %v1865, -inf
        %1896 = vmax.xlane.f32.xlu0 %v1895
        %v1897 = vpop.xlane.xlu0 %1896
        %v1898 = vsel %vm1114, %v1870, -inf
        %1899 = vmax.xlane.f32.xlu0 %v1898
        %v1900 = vpop.xlane.xlu0 %1899
        %v1901 = vsel %vm1114, %v1873, -inf
        %1902 = vmax.xlane.f32.xlu0 %v1901
        %v1903 = vpop.xlane.xlu0 %1902
        %v1904 = vsel %vm1114, %v1878, -inf
        %1905 = vmax.xlane.f32.xlu0 %v1904
        %v1906 = vpop.xlane.xlu0 %1905
        %v1907 = vsel %vm1114, %v1881, -inf
        %1908 = vmax.xlane.f32.xlu0 %v1907
        %v1909 = vpop.xlane.xlu0 %1908
        %v1910 = vsel %vm1114, %v1886, -inf
        %1911 = vmax.xlane.f32.xlu0 %v1910
        %v1912 = vpop.xlane.xlu0 %1911
        %v1913 = vsel %vm1114, %v1889, -inf
        %1914 = vmax.xlane.f32.xlu0 %v1913
        %v1915 = vpop.xlane.xlu0 %1914
        %v1916 = vsub.f32 %v1862, %v1894
        %v1917 = vsub.f32 %v1865, %v1897
        %v1918 = vsub.f32 %v1870, %v1900
        %v1919 = vsub.f32 %v1873, %v1903
        %v1920 = vsub.f32 %v1878, %v1906
        %v1921 = vsub.f32 %v1881, %v1909
        %v1922 = vsub.f32 %v1886, %v1912
        %v1923 = vsub.f32 %v1889, %v1915
        %v1924 = vmul.f32 %v1916, 1.442695
        %v1925 = vpow.pop %v1924
        %v1926 = vmul.f32 %v1917, 1.442695
        %v1927 = vpow.pop %v1926
        %v1928 = vmul.f32 %v1918, 1.442695
        %v1929 = vpow.pop %v1928
        %v1930 = vmul.f32 %v1919, 1.442695
        %v1931 = vpow.pop %v1930
        %v1932 = vmul.f32 %v1920, 1.442695
        %v1933 = vpow.pop %v1932
        %v1934 = vmul.f32 %v1921, 1.442695
        %v1935 = vpow.pop %v1934
        %v1936 = vmul.f32 %v1922, 1.442695
        %v1937 = vpow.pop %v1936
        %v1938 = vmul.f32 %v1923, 1.442695
        %v1939 = vpow.pop %v1938
        %v1940 = vsel %vm1114, %v1925, 0.0
        %1941 = vadd.xlane.f32.xlu0 %v1940
        %v1942 = vpop.xlane.xlu0 %1941
        %v1943 = vsel %vm1114, %v1927, 0.0
        %1944 = vadd.xlane.f32.xlu0 %v1943
        %v1945 = vpop.xlane.xlu0 %1944
        %v1946 = vsel %vm1114, %v1929, 0.0
        %1947 = vadd.xlane.f32.xlu0 %v1946
        %v1948 = vpop.xlane.xlu0 %1947
        %v1949 = vsel %vm1114, %v1931, 0.0
        %1950 = vadd.xlane.f32.xlu0 %v1949
        %v1951 = vpop.xlane.xlu0 %1950
        %v1952 = vsel %vm1114, %v1933, 0.0
        %1953 = vadd.xlane.f32.xlu0 %v1952
        %v1954 = vpop.xlane.xlu0 %1953
        %v1955 = vsel %vm1114, %v1935, 0.0
        %1956 = vadd.xlane.f32.xlu0 %v1955
        %v1957 = vpop.xlane.xlu0 %1956
        %v1958 = vsel %vm1114, %v1937, 0.0
        %1959 = vadd.xlane.f32.xlu0 %v1958
        %v1960 = vpop.xlane.xlu0 %1959
        %v1961 = vsel %vm1114, %v1939, 0.0
        %1962 = vadd.xlane.f32.xlu0 %v1961
        %v1963 = vpop.xlane.xlu0 %1962
        %v1964 = vrcp.pop %v1942
        %v1965 = vrcp.pop %v1945
        %v1966 = vrcp.pop %v1948
        %v1967 = vrcp.pop %v1951
        %v1968 = vrcp.pop %v1954
        %v1969 = vrcp.pop %v1957
        %v1970 = vrcp.pop %v1960
        %v1971 = vrcp.pop %v1963
        %v1972 = vmul.f32 %v1925, %v1964
        %v1973 = vmul.f32 %v1927, %v1965
        %v1974 = vmul.f32 %v1929, %v1966
        %v1975 = vmul.f32 %v1931, %v1967
        %v1976 = vmul.f32 %v1933, %v1968
        %v1977 = vmul.f32 %v1935, %v1969
        %v1978 = vmul.f32 %v1937, %v1970
        %v1979 = vmul.f32 %v1939, %v1971
        %v1980 = vpack.c.bf16 %v1973, %v1972
        %v1981 = vpack.c.bf16 %v1975, %v1974
        %v1982 = vpack.c.bf16 %v1977, %v1976
        %v1983 = vpack.c.bf16 %v1979, %v1978
        %v1984 = vmul.f32 %v1546, %v1802
        %v1985 = vmul.f32 %v1549, %v1802
        %v1986 = vmul.f32 %v1554, %v1802
        %v1987 = vmul.f32 %v1557, %v1802
        %v1988 = vmul.f32 %v1562, %v1802
        %v1989 = vmul.f32 %v1565, %v1802
        %v1990 = vmul.f32 %v1570, %v1802
        %v1991 = vmul.f32 %v1573, %v1802
        %v1992 = vpack.c.bf16 %v1985, %v1984
        %v1993 = vpack.c.bf16 %v1987, %v1986
        %v1994 = vpack.c.bf16 %v1989, %v1988
        %v1995 = vpack.c.bf16 %v1991, %v1990
        %v1997 = vsel %vm1114, %v1980, 0
        %v2000 = vsel %vm1114, %v1981, 0
        %v2003 = vsel %vm1114, %v1982, 0
        %v2006 = vsel %vm1114, %v1983, 0
        %2008 = vmatprep.subr.bf16.mxu0 0
        %2009 = vmatpush1.bf16.msra.mxu0 %v1992
        %2010 = vmatprep.subr.bf16.mxu0 0
        %2011 = vmatpush1.bf16.msra.mxu0 %v1993
        %2012 = vmatprep.subr.bf16.mxu0 0
        %2013 = vmatpush1.bf16.msra.mxu0 %v1994
        %2014 = vmatprep.subr.bf16.mxu0 0
        %2015 = vmatpush1.bf16.msra.mxu0 %v1995
        %2016 = vmatprep.subr.bf16.mxu0 0
        %2017 = vmatpush1.bf16.msra.mxu0 0
        %2018 = vmatprep.subr.bf16.mxu0 0
        %2019 = vmatpush1.bf16.msra.mxu0 0
        %2020 = vmatprep.subr.bf16.mxu0 0
        %2021 = vmatpush1.bf16.msra.mxu0 0
        %2022 = vmatprep.subr.bf16.mxu0 0
        %2023 = vmatpush1.bf16.msra.mxu0 0
        %2024 = vmatprep.subr.bf16.mxu0 0
        %2025 = vmatpush1.bf16.msra.mxu0 0
        %2026 = vmatprep.subr.bf16.mxu0 0
        %2027 = vmatpush1.bf16.msra.mxu0 0
        %2028 = vmatprep.subr.bf16.mxu0 0
        %2029 = vmatpush1.bf16.msra.mxu0 0
        %2030 = vmatprep.subr.bf16.mxu0 0
        %2031 = vmatpush1.bf16.msra.mxu0 0
        %2032 = vmatprep.subr.bf16.mxu0 0
        %2033 = vmatpush1.bf16.msra.mxu0 0
        %2034 = vmatprep.subr.bf16.mxu0 0
        %2035 = vmatpush1.bf16.msra.mxu0 0
        %2036 = vmatprep.subr.bf16.mxu0 0
        %2037 = vmatpush1.bf16.msra.mxu0 0
        %2038 = vmatprep.subr.bf16.mxu0 0
        %2039 = vmatpush1.bf16.msra.mxu0 0
        %2040 = vmatprep.mubr.bf16.mxu0 0
        %2041 = vmatmul.mubr.bf16.gmra.mrb[0].mxu0 %v1997
        %v2042 = vpop.f32.mrb[0].mxu0
        %v2043 = vadd.f32 0.0, %v2042
        %v2044 = vpop.f32.mrb[0].mxu0
        %v2045 = vpop.f32.mrb[0].mxu0
        %v2046 = vadd.f32 0.0, %v2045
        %v2047 = vpop.f32.mrb[0].mxu0
        %2048 = vmatprep.mubr.bf16.mxu0 0
        %2049 = vmatmul.mubr.bf16.gmra.mrb[0].mxu0 %v2000
        %v2050 = vpop.f32.mrb[0].mxu0
        %v2051 = vadd.f32 0.0, %v2050
        %v2052 = vpop.f32.mrb[0].mxu0
        %v2053 = vpop.f32.mrb[0].mxu0
        %v2054 = vadd.f32 0.0, %v2053
        %v2055 = vpop.f32.mrb[0].mxu0
        %2056 = vmatprep.mubr.bf16.mxu0 0
        %2057 = vmatmul.mubr.bf16.gmra.mrb[0].mxu0 %v2003
        %v2058 = vpop.f32.mrb[0].mxu0
        %v2059 = vadd.f32 0.0, %v2058
        %v2060 = vpop.f32.mrb[0].mxu0
        %v2061 = vpop.f32.mrb[0].mxu0
        %v2062 = vadd.f32 0.0, %v2061
        %v2063 = vpop.f32.mrb[0].mxu0
        %2064 = vmatprep.mubr.bf16.mxu0 0
        %2065 = vmatmul.mubr.bf16.gmra.mrb[0].mxu0 %v2006
        %v2066 = vpop.f32.mrb[0].mxu0
        %v2067 = vadd.f32 0.0, %v2066
        %v2068 = vpop.f32.mrb[0].mxu0
        %v2069 = vpop.f32.mrb[0].mxu0
        %v2070 = vadd.f32 0.0, %v2069
        %v2071 = vpop.f32.mrb[0].mxu0
        %2072 = vdwg.mxu0
        %v2074 = vsel %vm1114, %v1782, 0
        %v2077 = vsel %vm1114, %v1783, 0
        %v2080 = vsel %vm1114, %v1784, 0
        %v2083 = vsel %vm1114, %v1785, 0
        %2085 = vmatprep.subr.bf16.mxu0 0
        %2086 = vmatpush1.bf16.msra.mxu0 %v1794
        %2087 = vmatprep.subr.bf16.mxu0 0
        %2088 = vmatpush1.bf16.msra.mxu0 %v1795
        %2089 = vmatprep.subr.bf16.mxu0 0
        %2090 = vmatpush1.bf16.msra.mxu0 %v1796
        %2091 = vmatprep.subr.bf16.mxu0 0
        %2092 = vmatpush1.bf16.msra.mxu0 %v1797
        %2093 = vmatprep.subr.bf16.mxu0 0
        %2094 = vmatpush1.bf16.msra.mxu0 0
        %2095 = vmatprep.subr.bf16.mxu0 0
        %2096 = vmatpush1.bf16.msra.mxu0 0
        %2097 = vmatprep.subr.bf16.mxu0 0
        %2098 = vmatpush1.bf16.msra.mxu0 0
        %2099 = vmatprep.subr.bf16.mxu0 0
        %2100 = vmatpush1.bf16.msra.mxu0 0
        %2101 = vmatprep.subr.bf16.mxu0 0
        %2102 = vmatpush1.bf16.msra.mxu0 0
        %2103 = vmatprep.subr.bf16.mxu0 0
        %2104 = vmatpush1.bf16.msra.mxu0 0
        %2105 = vmatprep.subr.bf16.mxu0 0
        %2106 = vmatpush1.bf16.msra.mxu0 0
        %2107 = vmatprep.subr.bf16.mxu0 0
        %2108 = vmatpush1.bf16.msra.mxu0 0
        %2109 = vmatprep.subr.bf16.mxu0 0
        %2110 = vmatpush1.bf16.msra.mxu0 0
        %2111 = vmatprep.subr.bf16.mxu0 0
        %2112 = vmatpush1.bf16.msra.mxu0 0
        %2113 = vmatprep.subr.bf16.mxu0 0
        %2114 = vmatpush1.bf16.msra.mxu0 0
        %2115 = vmatprep.subr.bf16.mxu0 0
        %2116 = vmatpush1.bf16.msra.mxu0 0
        %2117 = vmatprep.mubr.bf16.mxu0 0
        %2118 = vmatmul.mubr.bf16.gmra.mrb[0].mxu0 %v2074
        %v2119 = vpop.f32.mrb[0].mxu0
        %v2120 = vadd.f32 %v2043, %v2119
        %v2121 = vpop.f32.mrb[0].mxu0
        %v2122 = vpop.f32.mrb[0].mxu0
        %v2123 = vadd.f32 %v2046, %v2122
        %v2124 = vpop.f32.mrb[0].mxu0
        %2125 = vmatprep.mubr.bf16.mxu0 0
        %2126 = vmatmul.mubr.bf16.gmra.mrb[0].mxu0 %v2077
        %v2127 = vpop.f32.mrb[0].mxu0
        %v2128 = vadd.f32 %v2051, %v2127
        %v2129 = vpop.f32.mrb[0].mxu0
        %v2130 = vpop.f32.mrb[0].mxu0
        %v2131 = vadd.f32 %v2054, %v2130
        %v2132 = vpop.f32.mrb[0].mxu0
        %2133 = vmatprep.mubr.bf16.mxu0 0
        %2134 = vmatmul.mubr.bf16.gmra.mrb[0].mxu0 %v2080
        %v2135 = vpop.f32.mrb[0].mxu0
        %v2136 = vadd.f32 %v2059, %v2135
        %v2137 = vpop.f32.mrb[0].mxu0
        %v2138 = vpop.f32.mrb[0].mxu0
        %v2139 = vadd.f32 %v2062, %v2138
        %v2140 = vpop.f32.mrb[0].mxu0
        %2141 = vmatprep.mubr.bf16.mxu0 0
        %2142 = vmatmul.mubr.bf16.gmra.mrb[0].mxu0 %v2083
        %v2143 = vpop.f32.mrb[0].mxu0
        %v2144 = vadd.f32 %v2067, %v2143
        %v2145 = vpop.f32.mrb[0].mxu0
        %v2146 = vpop.f32.mrb[0].mxu0
        %v2147 = vadd.f32 %v2070, %v2146
        %v2148 = vpop.f32.mrb[0].mxu0
        %2149 = vdwg.mxu0
        %vm2150 = vcmp.ge.s32.totalorder %v1111, 32
        %vm2151 = vcmp.lt.s32.totalorder %v1111, 48
        %vm2152 = vmand %vm2150, %vm2151
        %v2153 = vsel %vm2152, 1, 0
        %v2154 = vcvt.s32.f32 %v2153
        %v2155 = vmul.f32 %v1576, %v2154
        %v2156 = vmul.f32 %v1577, %v2154
        %v2157 = vmul.f32 %v1578, %v2154
        %v2158 = vmul.f32 %v1579, %v2154
        %v2159 = vmul.f32 %v1580, %v2154
        %v2160 = vmul.f32 %v1581, %v2154
        %v2161 = vmul.f32 %v1582, %v2154
        %v2162 = vmul.f32 %v1583, %v2154
        %v2163 = vpack.c.bf16 %v2156, %v2155
        %v2164 = vpack.c.bf16 %v2158, %v2157
        %v2165 = vpack.c.bf16 %v2160, %v2159
        %v2166 = vpack.c.bf16 %v2162, %v2161
        %v2168 = vsel %vm1114, %v2163, 0
        %v2171 = vsel %vm1114, %v2164, 0
        %v2174 = vsel %vm1114, %v2165, 0
        %v2177 = vsel %vm1114, %v2166, 0
        %2179 = vmatprep.subr.bf16.mxu0 0
        %2180 = vmatpush1.bf16.xpose.msra.mxu0 %v1618
        %2181 = vmatprep.subr.bf16.mxu0 0
        %2182 = vmatpush1.bf16.xpose.msra.mxu0 %v1621
        %2183 = vmatprep.subr.bf16.mxu0 0
        %2184 = vmatpush1.bf16.xpose.msra.mxu0 %v1624
        %2185 = vmatprep.subr.bf16.mxu0 0
        %2186 = vmatpush1.bf16.xpose.msra.mxu0 %v1627
        %2187 = vmatprep.subr.bf16.mxu0 0
        %2188 = vmatpush1.bf16.xpose.msra.mxu0 0
        %2189 = vmatprep.subr.bf16.mxu0 0
        %2190 = vmatpush1.bf16.xpose.msra.mxu0 0
        %2191 = vmatprep.subr.bf16.mxu0 0
        %2192 = vmatpush1.bf16.xpose.msra.mxu0 0
        %2193 = vmatprep.subr.bf16.mxu0 0
        %2194 = vmatpush1.bf16.xpose.msra.mxu0 0
        %2195 = vmatprep.subr.bf16.mxu0 0
        %2196 = vmatpush1.bf16.xpose.msra.mxu0 0
        %2197 = vmatprep.subr.bf16.mxu0 0
        %2198 = vmatpush1.bf16.xpose.msra.mxu0 0
        %2199 = vmatprep.subr.bf16.mxu0 0
        %2200 = vmatpush1.bf16.xpose.msra.mxu0 0
        %2201 = vmatprep.subr.bf16.mxu0 0
        %2202 = vmatpush1.bf16.xpose.msra.mxu0 0
        %2203 = vmatprep.subr.bf16.mxu0 0
        %2204 = vmatpush1.bf16.xpose.msra.mxu0 0
        %2205 = vmatprep.subr.bf16.mxu0 0
        %2206 = vmatpush1.bf16.xpose.msra.mxu0 0
        %2207 = vmatprep.subr.bf16.mxu0 0
        %2208 = vmatpush1.bf16.xpose.msra.mxu0 0
        %2209 = vmatprep.subr.bf16.mxu0 0
        %2210 = vmatpush1.bf16.xpose.msra.mxu0 0
        %2211 = vmatprep.mubr.bf16.mxu0 0
        %2212 = vmatmul.mubr.bf16.gmra.mrb[0].mxu0 %v2168
        %v2213 = vpop.f32.mrb[0].mxu0
        %v2214 = vadd.f32 %v1102, %v2213
        %v2215 = vpop.f32.mrb[0].mxu0
        %v2216 = vpop.f32.mrb[0].mxu0
        %v2217 = vadd.f32 %v1103, %v2216
        %v2218 = vpop.f32.mrb[0].mxu0
        %2219 = vmatprep.mubr.bf16.mxu0 0
        %2220 = vmatmul.mubr.bf16.gmra.mrb[0].mxu0 %v2171
        %v2221 = vpop.f32.mrb[0].mxu0
        %v2222 = vadd.f32 %v1104, %v2221
        %v2223 = vpop.f32.mrb[0].mxu0
        %v2224 = vpop.f32.mrb[0].mxu0
        %v2225 = vadd.f32 %v1105, %v2224
        %v2226 = vpop.f32.mrb[0].mxu0
        %2227 = vmatprep.mubr.bf16.mxu0 0
        %2228 = vmatmul.mubr.bf16.gmra.mrb[0].mxu0 %v2174
        %v2229 = vpop.f32.mrb[0].mxu0
        %v2230 = vadd.f32 %v1106, %v2229
        %v2231 = vpop.f32.mrb[0].mxu0
        %v2232 = vpop.f32.mrb[0].mxu0
        %v2233 = vadd.f32 %v1107, %v2232
        %v2234 = vpop.f32.mrb[0].mxu0
        %2235 = vmatprep.mubr.bf16.mxu0 0
        %2236 = vmatmul.mubr.bf16.gmra.mrb[0].mxu0 %v2177
        %v2237 = vpop.f32.mrb[0].mxu0
        %v2238 = vadd.f32 %v1108, %v2237
        %v2239 = vpop.f32.mrb[0].mxu0
        %v2240 = vpop.f32.mrb[0].mxu0
        %v2241 = vadd.f32 %v1109, %v2240
        %v2242 = vpop.f32.mrb[0].mxu0
        %2243 = vdwg.mxu0
        %v2244 = vsel %vm1114, %v2214, -inf
        %2245 = vmax.xlane.f32.xlu0 %v2244
        %v2246 = vpop.xlane.xlu0 %2245
        %v2247 = vsel %vm1114, %v2217, -inf
        %2248 = vmax.xlane.f32.xlu0 %v2247
        %v2249 = vpop.xlane.xlu0 %2248
        %v2250 = vsel %vm1114, %v2222, -inf
        %2251 = vmax.xlane.f32.xlu0 %v2250
        %v2252 = vpop.xlane.xlu0 %2251
        %v2253 = vsel %vm1114, %v2225, -inf
        %2254 = vmax.xlane.f32.xlu0 %v2253
        %v2255 = vpop.xlane.xlu0 %2254
        %v2256 = vsel %vm1114, %v2230, -inf
        %2257 = vmax.xlane.f32.xlu0 %v2256
        %v2258 = vpop.xlane.xlu0 %2257
        %v2259 = vsel %vm1114, %v2233, -inf
        %2260 = vmax.xlane.f32.xlu0 %v2259
        %v2261 = vpop.xlane.xlu0 %2260
        %v2262 = vsel %vm1114, %v2238, -inf
        %2263 = vmax.xlane.f32.xlu0 %v2262
        %v2264 = vpop.xlane.xlu0 %2263
        %v2265 = vsel %vm1114, %v2241, -inf
        %2266 = vmax.xlane.f32.xlu0 %v2265
        %v2267 = vpop.xlane.xlu0 %2266
        %v2268 = vsub.f32 %v2214, %v2246
        %v2269 = vsub.f32 %v2217, %v2249
        %v2270 = vsub.f32 %v2222, %v2252
        %v2271 = vsub.f32 %v2225, %v2255
        %v2272 = vsub.f32 %v2230, %v2258
        %v2273 = vsub.f32 %v2233, %v2261
        %v2274 = vsub.f32 %v2238, %v2264
        %v2275 = vsub.f32 %v2241, %v2267
        %v2276 = vmul.f32 %v2268, 1.442695
        %v2277 = vpow.pop %v2276
        %v2278 = vmul.f32 %v2269, 1.442695
        %v2279 = vpow.pop %v2278
        %v2280 = vmul.f32 %v2270, 1.442695
        %v2281 = vpow.pop %v2280
        %v2282 = vmul.f32 %v2271, 1.442695
        %v2283 = vpow.pop %v2282
        %v2284 = vmul.f32 %v2272, 1.442695
        %v2285 = vpow.pop %v2284
        %v2286 = vmul.f32 %v2273, 1.442695
        %v2287 = vpow.pop %v2286
        %v2288 = vmul.f32 %v2274, 1.442695
        %v2289 = vpow.pop %v2288
        %v2290 = vmul.f32 %v2275, 1.442695
        %v2291 = vpow.pop %v2290
        %v2292 = vsel %vm1114, %v2277, 0.0
        %2293 = vadd.xlane.f32.xlu0 %v2292
        %v2294 = vpop.xlane.xlu0 %2293
        %v2295 = vsel %vm1114, %v2279, 0.0
        %2296 = vadd.xlane.f32.xlu0 %v2295
        %v2297 = vpop.xlane.xlu0 %2296
        %v2298 = vsel %vm1114, %v2281, 0.0
        %2299 = vadd.xlane.f32.xlu0 %v2298
        %v2300 = vpop.xlane.xlu0 %2299
        %v2301 = vsel %vm1114, %v2283, 0.0
        %2302 = vadd.xlane.f32.xlu0 %v2301
        %v2303 = vpop.xlane.xlu0 %2302
        %v2304 = vsel %vm1114, %v2285, 0.0
        %2305 = vadd.xlane.f32.xlu0 %v2304
        %v2306 = vpop.xlane.xlu0 %2305
        %v2307 = vsel %vm1114, %v2287, 0.0
        %2308 = vadd.xlane.f32.xlu0 %v2307
        %v2309 = vpop.xlane.xlu0 %2308
        %v2310 = vsel %vm1114, %v2289, 0.0
        %2311 = vadd.xlane.f32.xlu0 %v2310
        %v2312 = vpop.xlane.xlu0 %2311
        %v2313 = vsel %vm1114, %v2291, 0.0
        %2314 = vadd.xlane.f32.xlu0 %v2313
        %v2315 = vpop.xlane.xlu0 %2314
        %v2316 = vrcp.pop %v2294
        %v2317 = vrcp.pop %v2297
        %v2318 = vrcp.pop %v2300
        %v2319 = vrcp.pop %v2303
        %v2320 = vrcp.pop %v2306
        %v2321 = vrcp.pop %v2309
        %v2322 = vrcp.pop %v2312
        %v2323 = vrcp.pop %v2315
        %v2324 = vmul.f32 %v2277, %v2316
        %v2325 = vmul.f32 %v2279, %v2317
        %v2326 = vmul.f32 %v2281, %v2318
        %v2327 = vmul.f32 %v2283, %v2319
        %v2328 = vmul.f32 %v2285, %v2320
        %v2329 = vmul.f32 %v2287, %v2321
        %v2330 = vmul.f32 %v2289, %v2322
        %v2331 = vmul.f32 %v2291, %v2323
        %v2332 = vpack.c.bf16 %v2325, %v2324
        %v2333 = vpack.c.bf16 %v2327, %v2326
        %v2334 = vpack.c.bf16 %v2329, %v2328
        %v2335 = vpack.c.bf16 %v2331, %v2330
        %v2336 = vmul.f32 %v1546, %v2154
        %v2337 = vmul.f32 %v1549, %v2154
        %v2338 = vmul.f32 %v1554, %v2154
        %v2339 = vmul.f32 %v1557, %v2154
        %v2340 = vmul.f32 %v1562, %v2154
        %v2341 = vmul.f32 %v1565, %v2154
        %v2342 = vmul.f32 %v1570, %v2154
        %v2343 = vmul.f32 %v1573, %v2154
        %v2344 = vpack.c.bf16 %v2337, %v2336
        %v2345 = vpack.c.bf16 %v2339, %v2338
        %v2346 = vpack.c.bf16 %v2341, %v2340
        %v2347 = vpack.c.bf16 %v2343, %v2342
        %v2349 = vsel %vm1114, %v2332, 0
        %v2352 = vsel %vm1114, %v2333, 0
        %v2355 = vsel %vm1114, %v2334, 0
        %v2358 = vsel %vm1114, %v2335, 0
        %2360 = vmatprep.subr.bf16.mxu0 0
        %2361 = vmatpush1.bf16.msra.mxu0 %v2344
        %2362 = vmatprep.subr.bf16.mxu0 0
        %2363 = vmatpush1.bf16.msra.mxu0 %v2345
        %2364 = vmatprep.subr.bf16.mxu0 0
        %2365 = vmatpush1.bf16.msra.mxu0 %v2346
        %2366 = vmatprep.subr.bf16.mxu0 0
        %2367 = vmatpush1.bf16.msra.mxu0 %v2347
        %2368 = vmatprep.subr.bf16.mxu0 0
        %2369 = vmatpush1.bf16.msra.mxu0 0
        %2370 = vmatprep.subr.bf16.mxu0 0
        %2371 = vmatpush1.bf16.msra.mxu0 0
        %2372 = vmatprep.subr.bf16.mxu0 0
        %2373 = vmatpush1.bf16.msra.mxu0 0
        %2374 = vmatprep.subr.bf16.mxu0 0
        %2375 = vmatpush1.bf16.msra.mxu0 0
        %2376 = vmatprep.subr.bf16.mxu0 0
        %2377 = vmatpush1.bf16.msra.mxu0 0
        %2378 = vmatprep.subr.bf16.mxu0 0
        %2379 = vmatpush1.bf16.msra.mxu0 0
        %2380 = vmatprep.subr.bf16.mxu0 0
        %2381 = vmatpush1.bf16.msra.mxu0 0
        %2382 = vmatprep.subr.bf16.mxu0 0
        %2383 = vmatpush1.bf16.msra.mxu0 0
        %2384 = vmatprep.subr.bf16.mxu0 0
        %2385 = vmatpush1.bf16.msra.mxu0 0
        %2386 = vmatprep.subr.bf16.mxu0 0
        %2387 = vmatpush1.bf16.msra.mxu0 0
        %2388 = vmatprep.subr.bf16.mxu0 0
        %2389 = vmatpush1.bf16.msra.mxu0 0
        %2390 = vmatprep.subr.bf16.mxu0 0
        %2391 = vmatpush1.bf16.msra.mxu0 0
        %2392 = vmatprep.mubr.bf16.mxu0 0
        %2393 = vmatmul.mubr.bf16.gmra.mrb[0].mxu0 %v2349
        %v2394 = vpop.f32.mrb[0].mxu0
        %v2395 = vadd.f32 0.0, %v2394
        %v2396 = vpop.f32.mrb[0].mxu0
        %v2397 = vpop.f32.mrb[0].mxu0
        %v2398 = vadd.f32 0.0, %v2397
        %v2399 = vpop.f32.mrb[0].mxu0
        %2400 = vmatprep.mubr.bf16.mxu0 0
        %2401 = vmatmul.mubr.bf16.gmra.mrb[0].mxu0 %v2352
        %v2402 = vpop.f32.mrb[0].mxu0
        %v2403 = vadd.f32 0.0, %v2402
        %v2404 = vpop.f32.mrb[0].mxu0
        %v2405 = vpop.f32.mrb[0].mxu0
        %v2406 = vadd.f32 0.0, %v2405
        %v2407 = vpop.f32.mrb[0].mxu0
        %2408 = vmatprep.mubr.bf16.mxu0 0
        %2409 = vmatmul.mubr.bf16.gmra.mrb[0].mxu0 %v2355
        %v2410 = vpop.f32.mrb[0].mxu0
        %v2411 = vadd.f32 0.0, %v2410
        %v2412 = vpop.f32.mrb[0].mxu0
        %v2413 = vpop.f32.mrb[0].mxu0
        %v2414 = vadd.f32 0.0, %v2413
        %v2415 = vpop.f32.mrb[0].mxu0
        %2416 = vmatprep.mubr.bf16.mxu0 0
        %2417 = vmatmul.mubr.bf16.gmra.mrb[0].mxu0 %v2358
        %v2418 = vpop.f32.mrb[0].mxu0
        %v2419 = vadd.f32 0.0, %v2418
        %v2420 = vpop.f32.mrb[0].mxu0
        %v2421 = vpop.f32.mrb[0].mxu0
        %v2422 = vadd.f32 0.0, %v2421
        %v2423 = vpop.f32.mrb[0].mxu0
        %2424 = vdwg.mxu0
        %v2425 = vadd.f32 %v2120, %v2395
        %v2426 = vadd.f32 %v2123, %v2398
        %v2427 = vadd.f32 %v2128, %v2403
        %v2428 = vadd.f32 %v2131, %v2406
        %v2429 = vadd.f32 %v2136, %v2411
        %v2430 = vadd.f32 %v2139, %v2414
        %v2431 = vadd.f32 %v2144, %v2419
        %v2432 = vadd.f32 %v2147, %v2422
        %vm2433 = vcmp.ge.s32.totalorder %v1111, 48
        %vm2434 = vcmp.lt.s32.totalorder %v1111, 64
        %vm2435 = vmand %vm2433, %vm2434
        %v2436 = vsel %vm2435, 1, 0
        %v2437 = vcvt.s32.f32 %v2436
        %v2438 = vmul.f32 %v1576, %v2437
        %v2439 = vmul.f32 %v1577, %v2437
        %v2440 = vmul.f32 %v1578, %v2437
        %v2441 = vmul.f32 %v1579, %v2437
        %v2442 = vmul.f32 %v1580, %v2437
        %v2443 = vmul.f32 %v1581, %v2437
        %v2444 = vmul.f32 %v1582, %v2437
        %v2445 = vmul.f32 %v1583, %v2437
        %v2446 = vpack.c.bf16 %v2439, %v2438
        %v2447 = vpack.c.bf16 %v2441, %v2440
        %v2448 = vpack.c.bf16 %v2443, %v2442
        %v2449 = vpack.c.bf16 %v2445, %v2444
        %v2451 = vsel %vm1114, %v2446, 0
        %v2454 = vsel %vm1114, %v2447, 0
        %v2457 = vsel %vm1114, %v2448, 0
        %v2460 = vsel %vm1114, %v2449, 0
        %2462 = vmatprep.subr.bf16.mxu0 0
        %2463 = vmatpush1.bf16.xpose.msra.mxu0 %v1618
        %2464 = vmatprep.subr.bf16.mxu0 0
        %2465 = vmatpush1.bf16.xpose.msra.mxu0 %v1621
        %2466 = vmatprep.subr.bf16.mxu0 0
        %2467 = vmatpush1.bf16.xpose.msra.mxu0 %v1624
        %2468 = vmatprep.subr.bf16.mxu0 0
        %2469 = vmatpush1.bf16.xpose.msra.mxu0 %v1627
        %2470 = vmatprep.subr.bf16.mxu0 0
        %2471 = vmatpush1.bf16.xpose.msra.mxu0 0
        %2472 = vmatprep.subr.bf16.mxu0 0
        %2473 = vmatpush1.bf16.xpose.msra.mxu0 0
        %2474 = vmatprep.subr.bf16.mxu0 0
        %2475 = vmatpush1.bf16.xpose.msra.mxu0 0
        %2476 = vmatprep.subr.bf16.mxu0 0
        %2477 = vmatpush1.bf16.xpose.msra.mxu0 0
        %2478 = vmatprep.subr.bf16.mxu0 0
        %2479 = vmatpush1.bf16.xpose.msra.mxu0 0
        %2480 = vmatprep.subr.bf16.mxu0 0
        %2481 = vmatpush1.bf16.xpose.msra.mxu0 0
        %2482 = vmatprep.subr.bf16.mxu0 0
        %2483 = vmatpush1.bf16.xpose.msra.mxu0 0
        %2484 = vmatprep.subr.bf16.mxu0 0
        %2485 = vmatpush1.bf16.xpose.msra.mxu0 0
        %2486 = vmatprep.subr.bf16.mxu0 0
        %2487 = vmatpush1.bf16.xpose.msra.mxu0 0
        %2488 = vmatprep.subr.bf16.mxu0 0
        %2489 = vmatpush1.bf16.xpose.msra.mxu0 0
        %2490 = vmatprep.subr.bf16.mxu0 0
        %2491 = vmatpush1.bf16.xpose.msra.mxu0 0
        %2492 = vmatprep.subr.bf16.mxu0 0
        %2493 = vmatpush1.bf16.xpose.msra.mxu0 0
        %2494 = vmatprep.mubr.bf16.mxu0 0
        %2495 = vmatmul.mubr.bf16.gmra.mrb[0].mxu0 %v2451
        %v2496 = vpop.f32.mrb[0].mxu0
        %v2497 = vadd.f32 %v1102, %v2496
        %v2498 = vpop.f32.mrb[0].mxu0
        %v2499 = vpop.f32.mrb[0].mxu0
        %v2500 = vadd.f32 %v1103, %v2499
        %v2501 = vpop.f32.mrb[0].mxu0
        %2502 = vmatprep.mubr.bf16.mxu0 0
        %2503 = vmatmul.mubr.bf16.gmra.mrb[0].mxu0 %v2454
        %v2504 = vpop.f32.mrb[0].mxu0
        %v2505 = vadd.f32 %v1104, %v2504
        %v2506 = vpop.f32.mrb[0].mxu0
        %v2507 = vpop.f32.mrb[0].mxu0
        %v2508 = vadd.f32 %v1105, %v2507
        %v2509 = vpop.f32.mrb[0].mxu0
        %2510 = vmatprep.mubr.bf16.mxu0 0
        %2511 = vmatmul.mubr.bf16.gmra.mrb[0].mxu0 %v2457
        %v2512 = vpop.f32.mrb[0].mxu0
        %v2513 = vadd.f32 %v1106, %v2512
        %v2514 = vpop.f32.mrb[0].mxu0
        %v2515 = vpop.f32.mrb[0].mxu0
        %v2516 = vadd.f32 %v1107, %v2515
        %v2517 = vpop.f32.mrb[0].mxu0
        %2518 = vmatprep.mubr.bf16.mxu0 0
        %2519 = vmatmul.mubr.bf16.gmra.mrb[0].mxu0 %v2460
        %v2520 = vpop.f32.mrb[0].mxu0
        %v2521 = vadd.f32 %v1108, %v2520
        %v2522 = vpop.f32.mrb[0].mxu0
        %v2523 = vpop.f32.mrb[0].mxu0
        %v2524 = vadd.f32 %v1109, %v2523
        %v2525 = vpop.f32.mrb[0].mxu0
        %2526 = vdwg.mxu0
        %v2527 = vsel %vm1114, %v2497, -inf
        %2528 = vmax.xlane.f32.xlu0 %v2527
        %v2529 = vpop.xlane.xlu0 %2528
        %v2530 = vsel %vm1114, %v2500, -inf
        %2531 = vmax.xlane.f32.xlu0 %v2530
        %v2532 = vpop.xlane.xlu0 %2531
        %v2533 = vsel %vm1114, %v2505, -inf
        %2534 = vmax.xlane.f32.xlu0 %v2533
        %v2535 = vpop.xlane.xlu0 %2534
        %v2536 = vsel %vm1114, %v2508, -inf
        %2537 = vmax.xlane.f32.xlu0 %v2536
        %v2538 = vpop.xlane.xlu0 %2537
        %v2539 = vsel %vm1114, %v2513, -inf
        %2540 = vmax.xlane.f32.xlu0 %v2539
        %v2541 = vpop.xlane.xlu0 %2540
        %v2542 = vsel %vm1114, %v2516, -inf
        %2543 = vmax.xlane.f32.xlu0 %v2542
        %v2544 = vpop.xlane.xlu0 %2543
        %v2545 = vsel %vm1114, %v2521, -inf
        %2546 = vmax.xlane.f32.xlu0 %v2545
        %v2547 = vpop.xlane.xlu0 %2546
        %v2548 = vsel %vm1114, %v2524, -inf
        %2549 = vmax.xlane.f32.xlu0 %v2548
        %v2550 = vpop.xlane.xlu0 %2549
        %v2551 = vsub.f32 %v2497, %v2529
        %v2552 = vsub.f32 %v2500, %v2532
        %v2553 = vsub.f32 %v2505, %v2535
        %v2554 = vsub.f32 %v2508, %v2538
        %v2555 = vsub.f32 %v2513, %v2541
        %v2556 = vsub.f32 %v2516, %v2544
        %v2557 = vsub.f32 %v2521, %v2547
        %v2558 = vsub.f32 %v2524, %v2550
        %v2559 = vmul.f32 %v2551, 1.442695
        %v2560 = vpow.pop %v2559
        %v2561 = vmul.f32 %v2552, 1.442695
        %v2562 = vpow.pop %v2561
        %v2563 = vmul.f32 %v2553, 1.442695
        %v2564 = vpow.pop %v2563
        %v2565 = vmul.f32 %v2554, 1.442695
        %v2566 = vpow.pop %v2565
        %v2567 = vmul.f32 %v2555, 1.442695
        %v2568 = vpow.pop %v2567
        %v2569 = vmul.f32 %v2556, 1.442695
        %v2570 = vpow.pop %v2569
        %v2571 = vmul.f32 %v2557, 1.442695
        %v2572 = vpow.pop %v2571
        %v2573 = vmul.f32 %v2558, 1.442695
        %v2574 = vpow.pop %v2573
        %v2575 = vsel %vm1114, %v2560, 0.0
        %2576 = vadd.xlane.f32.xlu0 %v2575
        %v2577 = vpop.xlane.xlu0 %2576
        %v2578 = vsel %vm1114, %v2562, 0.0
        %2579 = vadd.xlane.f32.xlu0 %v2578
        %v2580 = vpop.xlane.xlu0 %2579
        %v2581 = vsel %vm1114, %v2564, 0.0
        %2582 = vadd.xlane.f32.xlu0 %v2581
        %v2583 = vpop.xlane.xlu0 %2582
        %v2584 = vsel %vm1114, %v2566, 0.0
        %2585 = vadd.xlane.f32.xlu0 %v2584
        %v2586 = vpop.xlane.xlu0 %2585
        %v2587 = vsel %vm1114, %v2568, 0.0
        %2588 = vadd.xlane.f32.xlu0 %v2587
        %v2589 = vpop.xlane.xlu0 %2588
        %v2590 = vsel %vm1114, %v2570, 0.0
        %2591 = vadd.xlane.f32.xlu0 %v2590
        %v2592 = vpop.xlane.xlu0 %2591
        %v2593 = vsel %vm1114, %v2572, 0.0
        %2594 = vadd.xlane.f32.xlu0 %v2593
        %v2595 = vpop.xlane.xlu0 %2594
        %v2596 = vsel %vm1114, %v2574, 0.0
        %2597 = vadd.xlane.f32.xlu0 %v2596
        %v2598 = vpop.xlane.xlu0 %2597
        %v2599 = vrcp.pop %v2577
        %v2600 = vrcp.pop %v2580
        %v2601 = vrcp.pop %v2583
        %v2602 = vrcp.pop %v2586
        %v2603 = vrcp.pop %v2589
        %v2604 = vrcp.pop %v2592
        %v2605 = vrcp.pop %v2595
        %v2606 = vrcp.pop %v2598
        %v2607 = vmul.f32 %v2560, %v2599
        %v2608 = vmul.f32 %v2562, %v2600
        %v2609 = vmul.f32 %v2564, %v2601
        %v2610 = vmul.f32 %v2566, %v2602
        %v2611 = vmul.f32 %v2568, %v2603
        %v2612 = vmul.f32 %v2570, %v2604
        %v2613 = vmul.f32 %v2572, %v2605
        %v2614 = vmul.f32 %v2574, %v2606
        %v2615 = vpack.c.bf16 %v2608, %v2607
        %v2616 = vpack.c.bf16 %v2610, %v2609
        %v2617 = vpack.c.bf16 %v2612, %v2611
        %v2618 = vpack.c.bf16 %v2614, %v2613
        %v2619 = vmul.f32 %v1546, %v2437
        %v2620 = vmul.f32 %v1549, %v2437
        %v2621 = vmul.f32 %v1554, %v2437
        %v2622 = vmul.f32 %v1557, %v2437
        %v2623 = vmul.f32 %v1562, %v2437
        %v2624 = vmul.f32 %v1565, %v2437
        %v2625 = vmul.f32 %v1570, %v2437
        %v2626 = vmul.f32 %v1573, %v2437
        %v2627 = vpack.c.bf16 %v2620, %v2619
        %v2628 = vpack.c.bf16 %v2622, %v2621
        %v2629 = vpack.c.bf16 %v2624, %v2623
        %v2630 = vpack.c.bf16 %v2626, %v2625
        %v2632 = vsel %vm1114, %v2615, 0
        %v2635 = vsel %vm1114, %v2616, 0
        %v2638 = vsel %vm1114, %v2617, 0
        %v2641 = vsel %vm1114, %v2618, 0
        %2643 = vmatprep.subr.bf16.mxu0 0
        %2644 = vmatpush1.bf16.msra.mxu0 %v2627
        %2645 = vmatprep.subr.bf16.mxu0 0
        %2646 = vmatpush1.bf16.msra.mxu0 %v2628
        %2647 = vmatprep.subr.bf16.mxu0 0
        %2648 = vmatpush1.bf16.msra.mxu0 %v2629
        %2649 = vmatprep.subr.bf16.mxu0 0
        %2650 = vmatpush1.bf16.msra.mxu0 %v2630
        %2651 = vmatprep.subr.bf16.mxu0 0
        %2652 = vmatpush1.bf16.msra.mxu0 0
        %2653 = vmatprep.subr.bf16.mxu0 0
        %2654 = vmatpush1.bf16.msra.mxu0 0
        %2655 = vmatprep.subr.bf16.mxu0 0
        %2656 = vmatpush1.bf16.msra.mxu0 0
        %2657 = vmatprep.subr.bf16.mxu0 0
        %2658 = vmatpush1.bf16.msra.mxu0 0
        %2659 = vmatprep.subr.bf16.mxu0 0
        %2660 = vmatpush1.bf16.msra.mxu0 0
        %2661 = vmatprep.subr.bf16.mxu0 0
        %2662 = vmatpush1.bf16.msra.mxu0 0
        %2663 = vmatprep.subr.bf16.mxu0 0
        %2664 = vmatpush1.bf16.msra.mxu0 0
        %2665 = vmatprep.subr.bf16.mxu0 0
        %2666 = vmatpush1.bf16.msra.mxu0 0
        %2667 = vmatprep.subr.bf16.mxu0 0
        %2668 = vmatpush1.bf16.msra.mxu0 0
        %2669 = vmatprep.subr.bf16.mxu0 0
        %2670 = vmatpush1.bf16.msra.mxu0 0
        %2671 = vmatprep.subr.bf16.mxu0 0
        %2672 = vmatpush1.bf16.msra.mxu0 0
        %2673 = vmatprep.subr.bf16.mxu0 0
        %2674 = vmatpush1.bf16.msra.mxu0 0
        %2675 = vmatprep.mubr.bf16.mxu0 0
        %2676 = vmatmul.mubr.bf16.gmra.mrb[0].mxu0 %v2632
        %v2677 = vpop.f32.mrb[0].mxu0
        %v2678 = vadd.f32 0.0, %v2677
        %v2679 = vpop.f32.mrb[0].mxu0
        %v2680 = vpop.f32.mrb[0].mxu0
        %v2681 = vadd.f32 0.0, %v2680
        %v2682 = vpop.f32.mrb[0].mxu0
        %2683 = vmatprep.mubr.bf16.mxu0 0
        %2684 = vmatmul.mubr.bf16.gmra.mrb[0].mxu0 %v2635
        %v2685 = vpop.f32.mrb[0].mxu0
        %v2686 = vadd.f32 0.0, %v2685
        %v2687 = vpop.f32.mrb[0].mxu0
        %v2688 = vpop.f32.mrb[0].mxu0
        %v2689 = vadd.f32 0.0, %v2688
        %v2690 = vpop.f32.mrb[0].mxu0
        %2691 = vmatprep.mubr.bf16.mxu0 0
        %2692 = vmatmul.mubr.bf16.gmra.mrb[0].mxu0 %v2638
        %v2693 = vpop.f32.mrb[0].mxu0
        %v2694 = vadd.f32 0.0, %v2693
        %v2695 = vpop.f32.mrb[0].mxu0
        %v2696 = vpop.f32.mrb[0].mxu0
        %v2697 = vadd.f32 0.0, %v2696
        %v2698 = vpop.f32.mrb[0].mxu0
        %2699 = vmatprep.mubr.bf16.mxu0 0
        %2700 = vmatmul.mubr.bf16.gmra.mrb[0].mxu0 %v2641
        %v2701 = vpop.f32.mrb[0].mxu0
        %v2702 = vadd.f32 0.0, %v2701
        %v2703 = vpop.f32.mrb[0].mxu0
        %v2704 = vpop.f32.mrb[0].mxu0
        %v2705 = vadd.f32 0.0, %v2704
        %v2706 = vpop.f32.mrb[0].mxu0
        %2707 = vdwg.mxu0
        %v2708 = vadd.f32 %v2425, %v2678
        %v2709 = vadd.f32 %v2426, %v2681
        %v2710 = vadd.f32 %v2427, %v2686
        %v2711 = vadd.f32 %v2428, %v2689
        %v2712 = vadd.f32 %v2429, %v2694
        %v2713 = vadd.f32 %v2430, %v2697
        %v2714 = vadd.f32 %v2431, %v2702
        %v2715 = vadd.f32 %v2432, %v2705
        %v2716 = vpack.c.bf16 %v2709, %v2708
        %v2717 = vpack.c.bf16 %v2711, %v2710
        %v2718 = vpack.c.bf16 %v2713, %v2712
        %v2719 = vpack.c.bf16 %v2715, %v2714
        %v2720 = vld [vmem:[%s988] sm:$0xf]
        %v2721 = vld [vmem:[%s988 + $0x4] sm:$0xf]
        %v2722 = vld [vmem:[%s988 + $0x8] sm:$0xf]
        %v2723 = vld [vmem:[%s988 + $0xc] sm:$0xf]
        %v2724 = vld [vmem:[%s988 + $0x10] sm:$0xf]
        %v2725 = vld [vmem:[%s988 + $0x14] sm:$0xf]
        %v2726 = vld [vmem:[%s988 + $0x18] sm:$0xf]
        %v2727 = vld [vmem:[%s988 + $0x1c] sm:$0xf]
        %v2728 = vld [vmem:[%s866] sm:$0x1]
        %v2730 = vlaneseq
        %v2731 = vshrl.u32 %v2730, 7
        %v2732 = vsub.s32 0, %v2731
        %v2733 = vrot.slane %v2728, %v2732
        %v2743 = vunpack.c.l.b16 %v2720
        %v2744 = vunpack.c.l.b16 %v2721
        %v2745 = vunpack.c.l.b16 %v2722
        %v2746 = vunpack.c.l.b16 %v2723
        %v2747 = vunpack.c.l.b16 %v2724
        %v2748 = vunpack.c.l.b16 %v2725
        %v2749 = vunpack.c.l.b16 %v2726
        %v2750 = vunpack.c.l.b16 %v2727
        %v2751 = vpack.c.b16 %v2744, %v2743
        %v2752 = vpack.c.b16 %v2746, %v2745
        %v2753 = vpack.c.b16 %v2748, %v2747
        %v2754 = vpack.c.b16 %v2750, %v2749
        %v2760 = vsel %vm1114, %v2716, 0
        %v2763 = vsel %vm1114, %v2717, 0
        %v2766 = vsel %vm1114, %v2718, 0
        %v2769 = vsel %vm1114, %v2719, 0
        %2771 = vmatprep.subr.bf16.mxu0 0
        %2772 = vmatpush1.bf16.msra.mxu0 %v2751
        %2773 = vmatprep.subr.bf16.mxu0 0
        %2774 = vmatpush1.bf16.msra.mxu0 %v2752
        %2775 = vmatprep.subr.bf16.mxu0 0
        %2776 = vmatpush1.bf16.msra.mxu0 %v2753
        %2777 = vmatprep.subr.bf16.mxu0 0
        %2778 = vmatpush1.bf16.msra.mxu0 %v2754
        %2779 = vmatprep.subr.bf16.mxu0 0
        %2780 = vmatpush1.bf16.msra.mxu0 0
        %2781 = vmatprep.subr.bf16.mxu0 0
        %2782 = vmatpush1.bf16.msra.mxu0 0
        %2783 = vmatprep.subr.bf16.mxu0 0
        %2784 = vmatpush1.bf16.msra.mxu0 0
        %2785 = vmatprep.subr.bf16.mxu0 0
        %2786 = vmatpush1.bf16.msra.mxu0 0
        %2787 = vmatprep.subr.bf16.mxu0 0
        %2788 = vmatpush1.bf16.msra.mxu0 0
        %2789 = vmatprep.subr.bf16.mxu0 0
        %2790 = vmatpush1.bf16.msra.mxu0 0
        %2791 = vmatprep.subr.bf16.mxu0 0
        %2792 = vmatpush1.bf16.msra.mxu0 0
        %2793 = vmatprep.subr.bf16.mxu0 0
        %2794 = vmatpush1.bf16.msra.mxu0 0
        %2795 = vmatprep.subr.bf16.mxu0 0
        %2796 = vmatpush1.bf16.msra.mxu0 0
        %2797 = vmatprep.subr.bf16.mxu0 0
        %2798 = vmatpush1.bf16.msra.mxu0 0
        %2799 = vmatprep.subr.bf16.mxu0 0
        %2800 = vmatpush1.bf16.msra.mxu0 0
        %2801 = vmatprep.subr.bf16.mxu0 0
        %2802 = vmatpush1.bf16.msra.mxu0 0
        %2803 = vmatprep.mubr.bf16.mxu0 0
        %2804 = vmatmul.mubr.bf16.gmra.mrb[0].mxu0 %v2760
        %v2805 = vpop.f32.mrb[0].mxu0
        %v2806 = vadd.f32 %v2733, %v2805
        %v2807 = vpop.f32.mrb[0].mxu0
        %v2808 = vpop.f32.mrb[0].mxu0
        %v2809 = vadd.f32 %v2733, %v2808
        %v2810 = vpop.f32.mrb[0].mxu0
        %2811 = vmatprep.mubr.bf16.mxu0 0
        %2812 = vmatmul.mubr.bf16.gmra.mrb[0].mxu0 %v2763
        %v2813 = vpop.f32.mrb[0].mxu0
        %v2814 = vadd.f32 %v2733, %v2813
        %v2815 = vpop.f32.mrb[0].mxu0
        %v2816 = vpop.f32.mrb[0].mxu0
        %v2817 = vadd.f32 %v2733, %v2816
        %v2818 = vpop.f32.mrb[0].mxu0
        %2819 = vmatprep.mubr.bf16.mxu0 0
        %2820 = vmatmul.mubr.bf16.gmra.mrb[0].mxu0 %v2766
        %v2821 = vpop.f32.mrb[0].mxu0
        %v2822 = vadd.f32 %v2733, %v2821
        %v2823 = vpop.f32.mrb[0].mxu0
        %v2824 = vpop.f32.mrb[0].mxu0
        %v2825 = vadd.f32 %v2733, %v2824
        %v2826 = vpop.f32.mrb[0].mxu0
        %2827 = vmatprep.mubr.bf16.mxu0 0
        %2828 = vmatmul.mubr.bf16.gmra.mrb[0].mxu0 %v2769
        %v2829 = vpop.f32.mrb[0].mxu0
        %v2830 = vadd.f32 %v2733, %v2829
        %v2831 = vpop.f32.mrb[0].mxu0
        %v2832 = vpop.f32.mrb[0].mxu0
        %v2833 = vadd.f32 %v2733, %v2832
        %v2834 = vpop.f32.mrb[0].mxu0
        %2835 = vdwg.mxu0
        %v2836 = vadd.f32 %v1094, %v2806
        %v2837 = vadd.f32 %v1095, %v2809
        %v2838 = vadd.f32 %v1096, %v2814
        %v2839 = vadd.f32 %v1097, %v2817
        %v2840 = vadd.f32 %v1098, %v2822
        %v2841 = vadd.f32 %v1099, %v2825
        %v2842 = vadd.f32 %v1100, %v2830
        %v2843 = vadd.f32 %v1101, %v2833
        %v2844 = vld [vmem:[%s991] sm:$0x1]
        %v2845 = vld [vmem:[%s994] sm:$0x1]
        %v2846 = vsel %vm1114, %v2836, 0.0
        %2847 = vadd.xlane.f32.xlu0 %v2846
        %v2848 = vpop.xlane.xlu0 %2847
        %v2849 = vsel %vm1114, %v2837, 0.0
        %2850 = vadd.xlane.f32.xlu0 %v2849
        %v2851 = vpop.xlane.xlu0 %2850
        %v2852 = vsel %vm1114, %v2838, 0.0
        %2853 = vadd.xlane.f32.xlu0 %v2852
        %v2854 = vpop.xlane.xlu0 %2853
        %v2855 = vsel %vm1114, %v2839, 0.0
        %2856 = vadd.xlane.f32.xlu0 %v2855
        %v2857 = vpop.xlane.xlu0 %2856
        %v2858 = vsel %vm1114, %v2840, 0.0
        %2859 = vadd.xlane.f32.xlu0 %v2858
        %v2860 = vpop.xlane.xlu0 %2859
        %v2861 = vsel %vm1114, %v2841, 0.0
        %2862 = vadd.xlane.f32.xlu0 %v2861
        %v2863 = vpop.xlane.xlu0 %2862
        %v2864 = vsel %vm1114, %v2842, 0.0
        %2865 = vadd.xlane.f32.xlu0 %v2864
        %v2866 = vpop.xlane.xlu0 %2865
        %v2867 = vsel %vm1114, %v2843, 0.0
        %2868 = vadd.xlane.f32.xlu0 %v2867
        %v2869 = vpop.xlane.xlu0 %2868
        %v2870 = vmul.f32 %v2848, %v1139
        %v2871 = vmul.f32 %v2851, %v1139
        %v2872 = vmul.f32 %v2854, %v1139
        %v2873 = vmul.f32 %v2857, %v1139
        %v2874 = vmul.f32 %v2860, %v1139
        %v2875 = vmul.f32 %v2863, %v1139
        %v2876 = vmul.f32 %v2866, %v1139
        %v2877 = vmul.f32 %v2869, %v1139
        %v2878 = vsub.f32 %v2836, %v2870
        %v2879 = vsub.f32 %v2837, %v2871
        %v2880 = vsub.f32 %v2838, %v2872
        %v2881 = vsub.f32 %v2839, %v2873
        %v2882 = vsub.f32 %v2840, %v2874
        %v2883 = vsub.f32 %v2841, %v2875
        %v2884 = vsub.f32 %v2842, %v2876
        %v2885 = vsub.f32 %v2843, %v2877
        %v2886 = vmul.f32 %v2878, %v2878
        %v2887 = vmul.f32 %v2879, %v2879
        %v2888 = vmul.f32 %v2880, %v2880
        %v2889 = vmul.f32 %v2881, %v2881
        %v2890 = vmul.f32 %v2882, %v2882
        %v2891 = vmul.f32 %v2883, %v2883
        %v2892 = vmul.f32 %v2884, %v2884
        %v2893 = vmul.f32 %v2885, %v2885
        %v2894 = vsel %vm1114, %v2886, 0.0
        %2895 = vadd.xlane.f32.xlu0 %v2894
        %v2896 = vpop.xlane.xlu0 %2895
        %v2897 = vsel %vm1114, %v2887, 0.0
        %2898 = vadd.xlane.f32.xlu0 %v2897
        %v2899 = vpop.xlane.xlu0 %2898
        %v2900 = vsel %vm1114, %v2888, 0.0
        %2901 = vadd.xlane.f32.xlu0 %v2900
        %v2902 = vpop.xlane.xlu0 %2901
        %v2903 = vsel %vm1114, %v2889, 0.0
        %2904 = vadd.xlane.f32.xlu0 %v2903
        %v2905 = vpop.xlane.xlu0 %2904
        %v2906 = vsel %vm1114, %v2890, 0.0
        %2907 = vadd.xlane.f32.xlu0 %v2906
        %v2908 = vpop.xlane.xlu0 %2907
        %v2909 = vsel %vm1114, %v2891, 0.0
        %2910 = vadd.xlane.f32.xlu0 %v2909
        %v2911 = vpop.xlane.xlu0 %2910
        %v2912 = vsel %vm1114, %v2892, 0.0
        %2913 = vadd.xlane.f32.xlu0 %v2912
        %v2914 = vpop.xlane.xlu0 %2913
        %v2915 = vsel %vm1114, %v2893, 0.0
        %2916 = vadd.xlane.f32.xlu0 %v2915
        %v2917 = vpop.xlane.xlu0 %2916
        %v2918 = vmul.f32 %v2896, %v1139
        %v2919 = vmul.f32 %v2899, %v1139
        %v2920 = vmul.f32 %v2902, %v1139
        %v2921 = vmul.f32 %v2905, %v1139
        %v2922 = vmul.f32 %v2908, %v1139
        %v2923 = vmul.f32 %v2911, %v1139
        %v2924 = vmul.f32 %v2914, %v1139
        %v2925 = vmul.f32 %v2917, %v1139
        %v2926 = vadd.f32 %v2918, 1e-05
        %v2927 = vadd.f32 %v2919, 1e-05
        %v2928 = vadd.f32 %v2920, 1e-05
        %v2929 = vadd.f32 %v2921, 1e-05
        %v2930 = vadd.f32 %v2922, 1e-05
        %v2931 = vadd.f32 %v2923, 1e-05
        %v2932 = vadd.f32 %v2924, 1e-05
        %v2933 = vadd.f32 %v2925, 1e-05
        %v2934 = vrsqrt.pop %v2926
        %v2935 = vrsqrt.pop %v2927
        %v2936 = vrsqrt.pop %v2928
        %v2937 = vrsqrt.pop %v2929
        %v2938 = vrsqrt.pop %v2930
        %v2939 = vrsqrt.pop %v2931
        %v2940 = vrsqrt.pop %v2932
        %v2941 = vrsqrt.pop %v2933
        %v2942 = vmul.f32 %v2878, %v2934
        %v2943 = vmul.f32 %v2879, %v2935
        %v2944 = vmul.f32 %v2880, %v2936
        %v2945 = vmul.f32 %v2881, %v2937
        %v2946 = vmul.f32 %v2882, %v2938
        %v2947 = vmul.f32 %v2883, %v2939
        %v2948 = vmul.f32 %v2884, %v2940
        %v2949 = vmul.f32 %v2885, %v2941
        %v2951 = vlaneseq
        %v2952 = vshrl.u32 %v2951, 7
        %v2953 = vsub.s32 0, %v2952
        %v2954 = vrot.slane %v2844, %v2953
        %v2956 = vmul.f32 %v2942, %v2954
        %v2957 = vmul.f32 %v2943, %v2954
        %v2958 = vmul.f32 %v2944, %v2954
        %v2959 = vmul.f32 %v2945, %v2954
        %v2960 = vmul.f32 %v2946, %v2954
        %v2961 = vmul.f32 %v2947, %v2954
        %v2962 = vmul.f32 %v2948, %v2954
        %v2963 = vmul.f32 %v2949, %v2954
        %v2965 = vlaneseq
        %v2966 = vshrl.u32 %v2965, 7
        %v2967 = vsub.s32 0, %v2966
        %v2968 = vrot.slane %v2845, %v2967
        %v2970 = vadd.f32 %v2956, %v2968
        %v2971 = vadd.f32 %v2957, %v2968
        %v2972 = vadd.f32 %v2958, %v2968
        %v2973 = vadd.f32 %v2959, %v2968
        %v2974 = vadd.f32 %v2960, %v2968
        %v2975 = vadd.f32 %v2961, %v2968
        %v2976 = vadd.f32 %v2962, %v2968
        %v2977 = vadd.f32 %v2963, %v2968
        %v2978 = vpack.c.bf16 %v2971, %v2970
        %v2979 = vpack.c.bf16 %v2973, %v2972
        %v2980 = vpack.c.bf16 %v2975, %v2974
        %v2981 = vpack.c.bf16 %v2977, %v2976
        %v2982 = vld [vmem:[%s999] sm:$0xff]
        %v2983 = vld [vmem:[%s999 + $0x8] sm:$0xff]
        %v2984 = vld [vmem:[%s999 + $0x10] sm:$0xff]
        %v2985 = vld [vmem:[%s999 + $0x18] sm:$0xff]
        %v2986 = vld [vmem:[%s999 + $0x20] sm:$0xff]
        %v2987 = vld [vmem:[%s999 + $0x28] sm:$0xff]
        %v2988 = vld [vmem:[%s999 + $0x30] sm:$0xff]
        %v2989 = vld [vmem:[%s999 + $0x38] sm:$0xff]
        %v2990 = vld [vmem:[%s1003] sm:$0x3]
        %v2992 = vlaneseq
        %v2993 = vshrl.u32 %v2992, 7
        %v2994 = vsub.s32 0, %v2993
        %v2995 = vrot.slane %v2990, %v2994
        %v2996 = vlaneseq
        %v2997 = vshrl.u32 %v2996, 7
        %v2998 = vsub.s32 1, %v2997
        %v2999 = vrot.slane %v2990, %v2998
        %v3010 = vunpack.c.l.b16 %v2982
        %v3011 = vunpack.c.h.b16 %v2982
        %v3012 = vunpack.c.l.b16 %v2983
        %v3013 = vunpack.c.h.b16 %v2983
        %v3014 = vunpack.c.l.b16 %v2984
        %v3015 = vunpack.c.h.b16 %v2984
        %v3016 = vunpack.c.l.b16 %v2985
        %v3017 = vunpack.c.h.b16 %v2985
        %v3018 = vunpack.c.l.b16 %v2986
        %v3019 = vunpack.c.h.b16 %v2986
        %v3020 = vunpack.c.l.b16 %v2987
        %v3021 = vunpack.c.h.b16 %v2987
        %v3022 = vunpack.c.l.b16 %v2988
        %v3023 = vunpack.c.h.b16 %v2988
        %v3024 = vunpack.c.l.b16 %v2989
        %v3025 = vunpack.c.h.b16 %v2989
        %v3026 = vpack.c.b16 %v3012, %v3010
        %v3027 = vpack.c.b16 %v3013, %v3011
        %v3028 = vpack.c.b16 %v3016, %v3014
        %v3029 = vpack.c.b16 %v3017, %v3015
        %v3030 = vpack.c.b16 %v3020, %v3018
        %v3031 = vpack.c.b16 %v3021, %v3019
        %v3032 = vpack.c.b16 %v3024, %v3022
        %v3033 = vpack.c.b16 %v3025, %v3023
        %v3043 = vsel %vm1114, %v2978, 0
        %v3046 = vsel %vm1114, %v2979, 0
        %v3049 = vsel %vm1114, %v2980, 0
        %v3052 = vsel %vm1114, %v2981, 0
        %3054 = vmatprep.subr.bf16.mxu0 %v3027
        %3055 = vmatpush1.bf16.msra.mxu0 %v3026
        %3056 = vmatprep.subr.bf16.mxu0 %v3029
        %3057 = vmatpush1.bf16.msra.mxu0 %v3028
        %3058 = vmatprep.subr.bf16.mxu0 %v3031
        %3059 = vmatpush1.bf16.msra.mxu0 %v3030
        %3060 = vmatprep.subr.bf16.mxu0 %v3033
        %3061 = vmatpush1.bf16.msra.mxu0 %v3032
        %3062 = vmatprep.subr.bf16.mxu0 0
        %3063 = vmatpush1.bf16.msra.mxu0 0
        %3064 = vmatprep.subr.bf16.mxu0 0
        %3065 = vmatpush1.bf16.msra.mxu0 0
        %3066 = vmatprep.subr.bf16.mxu0 0
        %3067 = vmatpush1.bf16.msra.mxu0 0
        %3068 = vmatprep.subr.bf16.mxu0 0
        %3069 = vmatpush1.bf16.msra.mxu0 0
        %3070 = vmatprep.subr.bf16.mxu0 0
        %3071 = vmatpush1.bf16.msra.mxu0 0
        %3072 = vmatprep.subr.bf16.mxu0 0
        %3073 = vmatpush1.bf16.msra.mxu0 0
        %3074 = vmatprep.subr.bf16.mxu0 0
        %3075 = vmatpush1.bf16.msra.mxu0 0
        %3076 = vmatprep.subr.bf16.mxu0 0
        %3077 = vmatpush1.bf16.msra.mxu0 0
        %3078 = vmatprep.subr.bf16.mxu0 0
        %3079 = vmatpush1.bf16.msra.mxu0 0
        %3080 = vmatprep.subr.bf16.mxu0 0
        %3081 = vmatpush1.bf16.msra.mxu0 0
        %3082 = vmatprep.subr.bf16.mxu0 0
        %3083 = vmatpush1.bf16.msra.mxu0 0
        %3084 = vmatprep.subr.bf16.mxu0 0
        %3085 = vmatpush1.bf16.msra.mxu0 0
        %3086 = vmatprep.mubr.bf16.mxu0 0
        %3087 = vmatmul.mubr.bf16.gmra.mrb[0].mxu0 %v3043
        %v3088 = vpop.f32.mrb[0].mxu0
        %v3089 = vadd.f32 %v2995, %v3088
        %v3090 = vpop.f32.mrb[0].mxu0
        %v3091 = vadd.f32 %v2999, %v3090
        %v3092 = vpop.f32.mrb[0].mxu0
        %v3093 = vadd.f32 %v2995, %v3092
        %v3094 = vpop.f32.mrb[0].mxu0
        %v3095 = vadd.f32 %v2999, %v3094
        %3096 = vmatprep.mubr.bf16.mxu0 0
        %3097 = vmatmul.mubr.bf16.gmra.mrb[0].mxu0 %v3046
        %v3098 = vpop.f32.mrb[0].mxu0
        %v3099 = vadd.f32 %v2995, %v3098
        %v3100 = vpop.f32.mrb[0].mxu0
        %v3101 = vadd.f32 %v2999, %v3100
        %v3102 = vpop.f32.mrb[0].mxu0
        %v3103 = vadd.f32 %v2995, %v3102
        %v3104 = vpop.f32.mrb[0].mxu0
        %v3105 = vadd.f32 %v2999, %v3104
        %3106 = vmatprep.mubr.bf16.mxu0 0
        %3107 = vmatmul.mubr.bf16.gmra.mrb[0].mxu0 %v3049
        %v3108 = vpop.f32.mrb[0].mxu0
        %v3109 = vadd.f32 %v2995, %v3108
        %v3110 = vpop.f32.mrb[0].mxu0
        %v3111 = vadd.f32 %v2999, %v3110
        %v3112 = vpop.f32.mrb[0].mxu0
        %v3113 = vadd.f32 %v2995, %v3112
        %v3114 = vpop.f32.mrb[0].mxu0
        %v3115 = vadd.f32 %v2999, %v3114
        %3116 = vmatprep.mubr.bf16.mxu0 0
        %3117 = vmatmul.mubr.bf16.gmra.mrb[0].mxu0 %v3052
        %v3118 = vpop.f32.mrb[0].mxu0
        %v3119 = vadd.f32 %v2995, %v3118
        %v3120 = vpop.f32.mrb[0].mxu0
        %v3121 = vadd.f32 %v2999, %v3120
        %v3122 = vpop.f32.mrb[0].mxu0
        %v3123 = vadd.f32 %v2995, %v3122
        %v3124 = vpop.f32.mrb[0].mxu0
        %v3125 = vadd.f32 %v2999, %v3124
        %3126 = vdwg.mxu0
        %v3127 = vmul.f32 %v3089, 1.702
        %v3128 = vmul.f32 %v3091, 1.702
        %v3129 = vmul.f32 %v3093, 1.702
        %v3130 = vmul.f32 %v3095, 1.702
        %v3131 = vmul.f32 %v3099, 1.702
        %v3132 = vmul.f32 %v3101, 1.702
        %v3133 = vmul.f32 %v3103, 1.702
        %v3134 = vmul.f32 %v3105, 1.702
        %v3135 = vmul.f32 %v3109, 1.702
        %v3136 = vmul.f32 %v3111, 1.702
        %v3137 = vmul.f32 %v3113, 1.702
        %v3138 = vmul.f32 %v3115, 1.702
        %v3139 = vmul.f32 %v3119, 1.702
        %v3140 = vmul.f32 %v3121, 1.702
        %v3141 = vmul.f32 %v3123, 1.702
        %v3142 = vmul.f32 %v3125, 1.702
        %v3143 = vxor.u32 %v3127, 2147483648
        %v3144 = vxor.u32 %v3128, 2147483648
        %v3145 = vxor.u32 %v3129, 2147483648
        %v3146 = vxor.u32 %v3130, 2147483648
        %v3147 = vxor.u32 %v3131, 2147483648
        %v3148 = vxor.u32 %v3132, 2147483648
        %v3149 = vxor.u32 %v3133, 2147483648
        %v3150 = vxor.u32 %v3134, 2147483648
        %v3151 = vxor.u32 %v3135, 2147483648
        %v3152 = vxor.u32 %v3136, 2147483648
        %v3153 = vxor.u32 %v3137, 2147483648
        %v3154 = vxor.u32 %v3138, 2147483648
        %v3155 = vxor.u32 %v3139, 2147483648
        %v3156 = vxor.u32 %v3140, 2147483648
        %v3157 = vxor.u32 %v3141, 2147483648
        %v3158 = vxor.u32 %v3142, 2147483648
        %v3159 = vmul.f32 %v3143, 1.442695
        %v3160 = vpow.pop %v3159
        %v3161 = vmul.f32 %v3144, 1.442695
        %v3162 = vpow.pop %v3161
        %v3163 = vmul.f32 %v3145, 1.442695
        %v3164 = vpow.pop %v3163
        %v3165 = vmul.f32 %v3146, 1.442695
        %v3166 = vpow.pop %v3165
        %v3167 = vmul.f32 %v3147, 1.442695
        %v3168 = vpow.pop %v3167
        %v3169 = vmul.f32 %v3148, 1.442695
        %v3170 = vpow.pop %v3169
        %v3171 = vmul.f32 %v3149, 1.442695
        %v3172 = vpow.pop %v3171
        %v3173 = vmul.f32 %v3150, 1.442695
        %v3174 = vpow.pop %v3173
        %v3175 = vmul.f32 %v3151, 1.442695
        %v3176 = vpow.pop %v3175
        %v3177 = vmul.f32 %v3152, 1.442695
        %v3178 = vpow.pop %v3177
        %v3179 = vmul.f32 %v3153, 1.442695
        %v3180 = vpow.pop %v3179
        %v3181 = vmul.f32 %v3154, 1.442695
        %v3182 = vpow.pop %v3181
        %v3183 = vmul.f32 %v3155, 1.442695
        %v3184 = vpow.pop %v3183
        %v3185 = vmul.f32 %v3156, 1.442695
        %v3186 = vpow.pop %v3185
        %v3187 = vmul.f32 %v3157, 1.442695
        %v3188 = vpow.pop %v3187
        %v3189 = vmul.f32 %v3158, 1.442695
        %v3190 = vpow.pop %v3189
        %v3191 = vadd.f32 %v3160, 1.0
        %v3192 = vadd.f32 %v3162, 1.0
        %v3193 = vadd.f32 %v3164, 1.0
        %v3194 = vadd.f32 %v3166, 1.0
        %v3195 = vadd.f32 %v3168, 1.0
        %v3196 = vadd.f32 %v3170, 1.0
        %v3197 = vadd.f32 %v3172, 1.0
        %v3198 = vadd.f32 %v3174, 1.0
        %v3199 = vadd.f32 %v3176, 1.0
        %v3200 = vadd.f32 %v3178, 1.0
        %v3201 = vadd.f32 %v3180, 1.0
        %v3202 = vadd.f32 %v3182, 1.0
        %v3203 = vadd.f32 %v3184, 1.0
        %v3204 = vadd.f32 %v3186, 1.0
        %v3205 = vadd.f32 %v3188, 1.0
        %v3206 = vadd.f32 %v3190, 1.0
        %v3207 = vrcp.pop %v3191
        %v3208 = vmul.f32 1.0, %v3207
        %v3209 = vrcp.pop %v3192
        %v3210 = vmul.f32 1.0, %v3209
        %v3211 = vrcp.pop %v3193
        %v3212 = vmul.f32 1.0, %v3211
        %v3213 = vrcp.pop %v3194
        %v3214 = vmul.f32 1.0, %v3213
        %v3215 = vrcp.pop %v3195
        %v3216 = vmul.f32 1.0, %v3215
        %v3217 = vrcp.pop %v3196
        %v3218 = vmul.f32 1.0, %v3217
        %v3219 = vrcp.pop %v3197
        %v3220 = vmul.f32 1.0, %v3219
        %v3221 = vrcp.pop %v3198
        %v3222 = vmul.f32 1.0, %v3221
        %v3223 = vrcp.pop %v3199
        %v3224 = vmul.f32 1.0, %v3223
        %v3225 = vrcp.pop %v3200
        %v3226 = vmul.f32 1.0, %v3225
        %v3227 = vrcp.pop %v3201
        %v3228 = vmul.f32 1.0, %v3227
        %v3229 = vrcp.pop %v3202
        %v3230 = vmul.f32 1.0, %v3229
        %v3231 = vrcp.pop %v3203
        %v3232 = vmul.f32 1.0, %v3231
        %v3233 = vrcp.pop %v3204
        %v3234 = vmul.f32 1.0, %v3233
        %v3235 = vrcp.pop %v3205
        %v3236 = vmul.f32 1.0, %v3235
        %v3237 = vrcp.pop %v3206
        %v3238 = vmul.f32 1.0, %v3237
        %v3239 = vmul.f32 %v3089, %v3208
        %v3240 = vmul.f32 %v3091, %v3210
        %v3241 = vmul.f32 %v3093, %v3212
        %v3242 = vmul.f32 %v3095, %v3214
        %v3243 = vmul.f32 %v3099, %v3216
        %v3244 = vmul.f32 %v3101, %v3218
        %v3245 = vmul.f32 %v3103, %v3220
        %v3246 = vmul.f32 %v3105, %v3222
        %v3247 = vmul.f32 %v3109, %v3224
        %v3248 = vmul.f32 %v3111, %v3226
        %v3249 = vmul.f32 %v3113, %v3228
        %v3250 = vmul.f32 %v3115, %v3230
        %v3251 = vmul.f32 %v3119, %v3232
        %v3252 = vmul.f32 %v3121, %v3234
        %v3253 = vmul.f32 %v3123, %v3236
        %v3254 = vmul.f32 %v3125, %v3238
        %v3255 = vpack.c.bf16 %v3241, %v3239
        %v3256 = vpack.c.bf16 %v3242, %v3240
        %v3257 = vpack.c.bf16 %v3245, %v3243
        %v3258 = vpack.c.bf16 %v3246, %v3244
        %v3259 = vpack.c.bf16 %v3249, %v3247
        %v3260 = vpack.c.bf16 %v3250, %v3248
        %v3261 = vpack.c.bf16 %v3253, %v3251
        %v3262 = vpack.c.bf16 %v3254, %v3252
        %v3263 = vld [vmem:[%s1008] sm:$0xf]
        %v3264 = vld [vmem:[%s1008 + $0x4] sm:$0xf]
        %v3265 = vld [vmem:[%s1008 + $0x8] sm:$0xf]
        %v3266 = vld [vmem:[%s1008 + $0xc] sm:$0xf]
        %v3267 = vld [vmem:[%s1008 + $0x10] sm:$0xf]
        %v3268 = vld [vmem:[%s1008 + $0x14] sm:$0xf]
        %v3269 = vld [vmem:[%s1008 + $0x18] sm:$0xf]
        %v3270 = vld [vmem:[%s1008 + $0x1c] sm:$0xf]
        %v3271 = vld [vmem:[%s1008 + $0x20] sm:$0xf]
        %v3272 = vld [vmem:[%s1008 + $0x24] sm:$0xf]
        %v3273 = vld [vmem:[%s1008 + $0x28] sm:$0xf]
        %v3274 = vld [vmem:[%s1008 + $0x2c] sm:$0xf]
        %v3275 = vld [vmem:[%s1008 + $0x30] sm:$0xf]
        %v3276 = vld [vmem:[%s1008 + $0x34] sm:$0xf]
        %v3277 = vld [vmem:[%s1008 + $0x38] sm:$0xf]
        %v3278 = vld [vmem:[%s1008 + $0x3c] sm:$0xf]
        %v3279 = vld [vmem:[%s1008 + $0x40] sm:$0xf]
        %v3280 = vld [vmem:[%s1008 + $0x44] sm:$0xf]
        %v3281 = vld [vmem:[%s1008 + $0x48] sm:$0xf]
        %v3282 = vld [vmem:[%s1008 + $0x4c] sm:$0xf]
        %v3283 = vld [vmem:[%s1008 + $0x50] sm:$0xf]
        %v3284 = vld [vmem:[%s1008 + $0x54] sm:$0xf]
        %v3285 = vld [vmem:[%s1008 + $0x58] sm:$0xf]
        %v3286 = vld [vmem:[%s1008 + $0x5c] sm:$0xf]
        %v3287 = vld [vmem:[%s1008 + $0x60] sm:$0xf]
        %v3288 = vld [vmem:[%s1008 + $0x64] sm:$0xf]
        %v3289 = vld [vmem:[%s1008 + $0x68] sm:$0xf]
        %v3290 = vld [vmem:[%s1008 + $0x6c] sm:$0xf]
        %v3291 = vld [vmem:[%s1008 + $0x70] sm:$0xf]
        %v3292 = vld [vmem:[%s1008 + $0x74] sm:$0xf]
        %v3293 = vld [vmem:[%s1008 + $0x78] sm:$0xf]
        %v3294 = vld [vmem:[%s1008 + $0x7c] sm:$0xf]
        %v3295 = vld [vmem:[%s1011] sm:$0x1]
        %v3297 = vlaneseq
        %v3298 = vshrl.u32 %v3297, 7
        %v3299 = vsub.s32 0, %v3298
        %v3300 = vrot.slane %v3295, %v3299
        %v3334 = vunpack.c.l.b16 %v3263
        %v3335 = vunpack.c.l.b16 %v3264
        %v3336 = vunpack.c.l.b16 %v3265
        %v3337 = vunpack.c.l.b16 %v3266
        %v3338 = vunpack.c.l.b16 %v3267
        %v3339 = vunpack.c.l.b16 %v3268
        %v3340 = vunpack.c.l.b16 %v3269
        %v3341 = vunpack.c.l.b16 %v3270
        %v3342 = vunpack.c.l.b16 %v3271
        %v3343 = vunpack.c.l.b16 %v3272
        %v3344 = vunpack.c.l.b16 %v3273
        %v3345 = vunpack.c.l.b16 %v3274
        %v3346 = vunpack.c.l.b16 %v3275
        %v3347 = vunpack.c.l.b16 %v3276
        %v3348 = vunpack.c.l.b16 %v3277
        %v3349 = vunpack.c.l.b16 %v3278
        %v3350 = vunpack.c.l.b16 %v3279
        %v3351 = vunpack.c.l.b16 %v3280
        %v3352 = vunpack.c.l.b16 %v3281
        %v3353 = vunpack.c.l.b16 %v3282
        %v3354 = vunpack.c.l.b16 %v3283
        %v3355 = vunpack.c.l.b16 %v3284
        %v3356 = vunpack.c.l.b16 %v3285
        %v3357 = vunpack.c.l.b16 %v3286
        %v3358 = vunpack.c.l.b16 %v3287
        %v3359 = vunpack.c.l.b16 %v3288
        %v3360 = vunpack.c.l.b16 %v3289
        %v3361 = vunpack.c.l.b16 %v3290
        %v3362 = vunpack.c.l.b16 %v3291
        %v3363 = vunpack.c.l.b16 %v3292
        %v3364 = vunpack.c.l.b16 %v3293
        %v3365 = vunpack.c.l.b16 %v3294
        %v3366 = vpack.c.b16 %v3335, %v3334
        %v3367 = vpack.c.b16 %v3337, %v3336
        %v3368 = vpack.c.b16 %v3339, %v3338
        %v3369 = vpack.c.b16 %v3341, %v3340
        %v3370 = vpack.c.b16 %v3343, %v3342
        %v3371 = vpack.c.b16 %v3345, %v3344
        %v3372 = vpack.c.b16 %v3347, %v3346
        %v3373 = vpack.c.b16 %v3349, %v3348
        %v3374 = vpack.c.b16 %v3351, %v3350
        %v3375 = vpack.c.b16 %v3353, %v3352
        %v3376 = vpack.c.b16 %v3355, %v3354
        %v3377 = vpack.c.b16 %v3357, %v3356
        %v3378 = vpack.c.b16 %v3359, %v3358
        %v3379 = vpack.c.b16 %v3361, %v3360
        %v3380 = vpack.c.b16 %v3363, %v3362
        %v3381 = vpack.c.b16 %v3365, %v3364
        %3398 = vmatprep.subr.bf16.mxu0 0
        %3399 = vmatpush1.bf16.msra.mxu0 %v3366
        %3400 = vmatprep.subr.bf16.mxu0 0
        %3401 = vmatpush1.bf16.msra.mxu0 %v3367
        %3402 = vmatprep.subr.bf16.mxu0 0
        %3403 = vmatpush1.bf16.msra.mxu0 %v3368
        %3404 = vmatprep.subr.bf16.mxu0 0
        %3405 = vmatpush1.bf16.msra.mxu0 %v3369
        %3406 = vmatprep.subr.bf16.mxu0 0
        %3407 = vmatpush1.bf16.msra.mxu0 %v3370
        %3408 = vmatprep.subr.bf16.mxu0 0
        %3409 = vmatpush1.bf16.msra.mxu0 %v3371
        %3410 = vmatprep.subr.bf16.mxu0 0
        %3411 = vmatpush1.bf16.msra.mxu0 %v3372
        %3412 = vmatprep.subr.bf16.mxu0 0
        %3413 = vmatpush1.bf16.msra.mxu0 %v3373
        %3414 = vmatprep.subr.bf16.mxu0 0
        %3415 = vmatpush1.bf16.msra.mxu0 %v3374
        %3416 = vmatprep.subr.bf16.mxu0 0
        %3417 = vmatpush1.bf16.msra.mxu0 %v3375
        %3418 = vmatprep.subr.bf16.mxu0 0
        %3419 = vmatpush1.bf16.msra.mxu0 %v3376
        %3420 = vmatprep.subr.bf16.mxu0 0
        %3421 = vmatpush1.bf16.msra.mxu0 %v3377
        %3422 = vmatprep.subr.bf16.mxu0 0
        %3423 = vmatpush1.bf16.msra.mxu0 %v3378
        %3424 = vmatprep.subr.bf16.mxu0 0
        %3425 = vmatpush1.bf16.msra.mxu0 %v3379
        %3426 = vmatprep.subr.bf16.mxu0 0
        %3427 = vmatpush1.bf16.msra.mxu0 %v3380
        %3428 = vmatprep.subr.bf16.mxu0 0
        %3429 = vmatpush1.bf16.msra.mxu0 %v3381
        %3430 = vmatprep.mubr.bf16.mxu0 %v3256
        %3431 = vmatmul.mubr.bf16.gmra.mrb[0].mxu0 %v3255
        %v3432 = vpop.f32.mrb[0].mxu0
        %v3433 = vadd.f32 %v3300, %v3432
        %v3434 = vpop.f32.mrb[0].mxu0
        %v3435 = vpop.f32.mrb[0].mxu0
        %v3436 = vadd.f32 %v3300, %v3435
        %v3437 = vpop.f32.mrb[0].mxu0
        %3438 = vmatprep.mubr.bf16.mxu0 %v3258
        %3439 = vmatmul.mubr.bf16.gmra.mrb[0].mxu0 %v3257
        %v3440 = vpop.f32.mrb[0].mxu0
        %v3441 = vadd.f32 %v3300, %v3440
        %v3442 = vpop.f32.mrb[0].mxu0
        %v3443 = vpop.f32.mrb[0].mxu0
        %v3444 = vadd.f32 %v3300, %v3443
        %v3445 = vpop.f32.mrb[0].mxu0
        %3446 = vmatprep.mubr.bf16.mxu0 %v3260
        %3447 = vmatmul.mubr.bf16.gmra.mrb[0].mxu0 %v3259
        %v3448 = vpop.f32.mrb[0].mxu0
        %v3449 = vadd.f32 %v3300, %v3448
        %v3450 = vpop.f32.mrb[0].mxu0
        %v3451 = vpop.f32.mrb[0].mxu0
        %v3452 = vadd.f32 %v3300, %v3451
        %v3453 = vpop.f32.mrb[0].mxu0
        %3454 = vmatprep.mubr.bf16.mxu0 %v3262
        %3455 = vmatmul.mubr.bf16.gmra.mrb[0].mxu0 %v3261
        %v3456 = vpop.f32.mrb[0].mxu0
        %v3457 = vadd.f32 %v3300, %v3456
        %v3458 = vpop.f32.mrb[0].mxu0
        %v3459 = vpop.f32.mrb[0].mxu0
        %v3460 = vadd.f32 %v3300, %v3459
        %v3461 = vpop.f32.mrb[0].mxu0
        %3462 = vdwg.mxu0
        %v3463 = vadd.f32 %v2836, %v3433
        %v3464 = vadd.f32 %v2837, %v3436
        %v3465 = vadd.f32 %v2838, %v3441
        %v3466 = vadd.f32 %v2839, %v3444
        %v3467 = vadd.f32 %v2840, %v3449
        %v3468 = vadd.f32 %v2841, %v3452
        %v3469 = vadd.f32 %v2842, %v3457
        %v3470 = vadd.f32 %v2843, %v3460
        %3471 = vst.msk [vmem:[#allocation2] sm:$0xff] %vm1114, %v3463
        %3472 = vst.msk [vmem:[#allocation2 + $0x8] sm:$0xff] %vm1114, %v3464
        %3473 = vst.msk [vmem:[#allocation2 + $0x10] sm:$0xff] %vm1114, %v3465
        %3474 = vst.msk [vmem:[#allocation2 + $0x18] sm:$0xff] %vm1114, %v3466
        %3475 = vst.msk [vmem:[#allocation2 + $0x20] sm:$0xff] %vm1114, %v3467
        %3476 = vst.msk [vmem:[#allocation2 + $0x28] sm:$0xff] %vm1114, %v3468
        %3477 = vst.msk [vmem:[#allocation2 + $0x30] sm:$0xff] %vm1114, %v3469
        %3478 = vst.msk [vmem:[#allocation2 + $0x38] sm:$0xff] %vm1114, %v3470
        %p3479 = scmp.eq.s32.totalorder %s52, 1
        // Predicated region
        $region137: #{prompt_learner_forward.1} parent=99 // pred_check
          %p3480 = pneg %p3479
        $region138: #{prompt_learner_forward.1} parent=99 // pred_check_branch
          %3482 = sbr.rel (%p3480) target = $region140
        $region139: #{prompt_learner_forward.1} parent=99 // pred_region
          %v3483 = vlaneseq
          %v3484 = vshrl.u32 %v3483, 7
          %vm3485 = vcmp.eq.s32.totalorder %v3484, 0
          %s3486 = sld [smem:[#allocation5]]
          %v3487 = vstv %s3486
          %v3488 = vsel %vm3485, %v3487, 0
          %vm3489 = vcmp.eq.s32.totalorder %v3484, 1
          %s3490 = sld [smem:[#allocation5 + $0x1]]
          %s3491 = sadd.s32 %s3490, 32
          %v3492 = vstv %s3491
          %v3493 = vsel %vm3489, %v3492, %v3488
          %vm3494 = vcmp.eq.s32.totalorder %v1111, %v3493
          %v3495 = vsel %vm3494, 1, 0
          %v3496 = vcvt.s32.f32 %v3495
          %v3498 = vsel %vm1114, %v3496, 0
          %3500 = vmatprep.subr.mxu0 0.0
          %3501 = vmatpush1.msra.mxu0 %v3463
          %3502 = vmatprep.subr.mxu0 0.0
          %3503 = vmatpush1.msra.mxu0 %v3464
          %3504 = vmatprep.subr.mxu0 0.0
          %3505 = vmatpush1.msra.mxu0 %v3465
          %3506 = vmatprep.subr.mxu0 0.0
          %3507 = vmatpush1.msra.mxu0 %v3466
          %3508 = vmatprep.subr.mxu0 0.0
          %3509 = vmatpush1.msra.mxu0 %v3467
          %3510 = vmatprep.subr.mxu0 0.0
          %3511 = vmatpush1.msra.mxu0 %v3468
          %3512 = vmatprep.subr.mxu0 0.0
          %3513 = vmatpush1.msra.mxu0 %v3469
          %3514 = vmatprep.subr.mxu0 0.0
          %3515 = vmatpush1.msra.mxu0 %v3470
          %3516 = vmatprep.subr.mxu0 0.0
          %3517 = vmatpush1.msra.mxu0 0.0
          %3518 = vmatprep.subr.mxu0 0.0
          %3519 = vmatpush1.msra.mxu0 0.0
          %3520 = vmatprep.subr.mxu0 0.0
          %3521 = vmatpush1.msra.mxu0 0.0
          %3522 = vmatprep.subr.mxu0 0.0
          %3523 = vmatpush1.msra.mxu0 0.0
          %3524 = vmatprep.subr.mxu0 0.0
          %3525 = vmatpush1.msra.mxu0 0.0
          %3526 = vmatprep.subr.mxu0 0.0
          %3527 = vmatpush1.msra.mxu0 0.0
          %3528 = vmatprep.subr.mxu0 0.0
          %3529 = vmatpush1.msra.mxu0 0.0
          %3530 = vmatprep.subr.mxu0 0.0
          %3531 = vmatpush1.msra.mxu0 0.0
          %3532 = vmatprep.subr.mxu0 0.0
          %3533 = vmatpush1.msra.mxu0 0.0
          %3534 = vmatprep.subr.mxu0 0.0
          %3535 = vmatpush1.msra.mxu0 0.0
          %3536 = vmatprep.subr.mxu0 0.0
          %3537 = vmatpush1.msra.mxu0 0.0
          %3538 = vmatprep.subr.mxu0 0.0
          %3539 = vmatpush1.msra.mxu0 0.0
          %3540 = vmatprep.subr.mxu0 0.0
          %3541 = vmatpush1.msra.mxu0 0.0
          %3542 = vmatprep.subr.mxu0 0.0
          %3543 = vmatpush1.msra.mxu0 0.0
          %3544 = vmatprep.subr.mxu0 0.0
          %3545 = vmatpush1.msra.mxu0 0.0
          %3546 = vmatprep.subr.mxu0 0.0
          %3547 = vmatpush1.msra.mxu0 0.0
          %3548 = vmatprep.subr.mxu0 0.0
          %3549 = vmatpush1.msra.mxu0 0.0
          %3550 = vmatprep.subr.mxu0 0.0
          %3551 = vmatpush1.msra.mxu0 0.0
          %3552 = vmatprep.subr.mxu0 0.0
          %3553 = vmatpush1.msra.mxu0 0.0
          %3554 = vmatprep.subr.mxu0 0.0
          %3555 = vmatpush1.msra.mxu0 0.0
          %3556 = vmatprep.subr.mxu0 0.0
          %3557 = vmatpush1.msra.mxu0 0.0
          %3558 = vmatprep.subr.mxu0 0.0
          %3559 = vmatpush1.msra.mxu0 0.0
          %3560 = vmatprep.subr.mxu0 0.0
          %3561 = vmatpush1.msra.mxu0 0.0
          %3562 = vmatprep.subr.mxu0 0.0
          %3563 = vmatpush1.msra.mxu0 0.0
          %3564 = vmatprep.mubr.f32.mxu0 0.0
          %3565 = vmatmul.mubr.f32.gmra.mrb[0].mxu0 %v3498
          %v3566 = vpop.f32.mrb[0].mxu0
          %v3567 = vadd.f32 0.0, %v3566
          %v3568 = vpop.f32.mrb[0].mxu0
          %3569 = vdwg.mxu0
          %v3570 = vld [vmem:[%s18] sm:$0x1]
          %v3571 = vld [vmem:[%s19] sm:$0x1]
          %vm3572 = vcmask 517120
          %v3573 = vsel %vm3572, %v3567, 0.0
          %3574 = vadd.xlane.f32.xlu0 %v3573
          %v3575 = vpop.xlane.xlu0 %3574
          %v3576 = vmul.f32 %v3575, %v1139
          %v3577 = vsub.f32 %v3567, %v3576
          %v3578 = vmul.f32 %v3577, %v3577
          %v3579 = vsel %vm3572, %v3578, 0.0
          %3580 = vadd.xlane.f32.xlu0 %v3579
          %v3581 = vpop.xlane.xlu0 %3580
          %v3582 = vmul.f32 %v3581, %v1139
          %v3583 = vadd.f32 %v3582, 1e-05
          %v3584 = vrsqrt.pop %v3583
          %v3585 = vmul.f32 %v3577, %v3584
          %v3587 = vlaneseq
          %v3588 = vshrl.u32 %v3587, 7
          %v3589 = vsub.s32 0, %v3588
          %v3590 = vrot.slane %v3570, %v3589
          %v3592 = vmul.f32 %v3585, %v3590
          %v3594 = vlaneseq
          %v3595 = vshrl.u32 %v3594, 7
          %v3596 = vsub.s32 0, %v3595
          %v3597 = vrot.slane %v3571, %v3596
          %v3599 = vadd.f32 %v3592, %v3597
          %v3600 = vpack.c.bf16 %v3599, %v3599
          %v3601 = vld [vmem:[%s20] sm:$0xf]
          %v3602 = vld [vmem:[%s20 + $0x4] sm:$0xf]
          %v3603 = vld [vmem:[%s20 + $0x8] sm:$0xf]
          %v3604 = vld [vmem:[%s20 + $0xc] sm:$0xf]
          %v3605 = vld [vmem:[%s20 + $0x10] sm:$0xf]
          %v3606 = vld [vmem:[%s20 + $0x14] sm:$0xf]
          %v3607 = vld [vmem:[%s20 + $0x18] sm:$0xf]
          %v3608 = vld [vmem:[%s20 + $0x1c] sm:$0xf]
          %v3617 = vunpack.c.l.b16 %v3601
          %v3618 = vunpack.c.l.b16 %v3602
          %v3619 = vunpack.c.l.b16 %v3603
          %v3620 = vunpack.c.l.b16 %v3604
          %v3621 = vunpack.c.l.b16 %v3605
          %v3622 = vunpack.c.l.b16 %v3606
          %v3623 = vunpack.c.l.b16 %v3607
          %v3624 = vunpack.c.l.b16 %v3608
          %v3625 = vpack.c.b16 %v3618, %v3617
          %v3626 = vpack.c.b16 %v3620, %v3619
          %v3627 = vpack.c.b16 %v3622, %v3621
          %v3628 = vpack.c.b16 %v3624, %v3623
          %v3634 = vsel %vm1114, %v3600, 0
          %3636 = vmatprep.subr.bf16.mxu0 0
          %3637 = vmatpush1.bf16.msra.mxu0 %v3625
          %3638 = vmatprep.subr.bf16.mxu0 0
          %3639 = vmatpush1.bf16.msra.mxu0 %v3626
          %3640 = vmatprep.subr.bf16.mxu0 0
          %3641 = vmatpush1.bf16.msra.mxu0 %v3627
          %3642 = vmatprep.subr.bf16.mxu0 0
          %3643 = vmatpush1.bf16.msra.mxu0 %v3628
          %3644 = vmatprep.subr.bf16.mxu0 0
          %3645 = vmatpush1.bf16.msra.mxu0 0
          %3646 = vmatprep.subr.bf16.mxu0 0
          %3647 = vmatpush1.bf16.msra.mxu0 0
          %3648 = vmatprep.subr.bf16.mxu0 0
          %3649 = vmatpush1.bf16.msra.mxu0 0
          %3650 = vmatprep.subr.bf16.mxu0 0
          %3651 = vmatpush1.bf16.msra.mxu0 0
          %3652 = vmatprep.subr.bf16.mxu0 0
          %3653 = vmatpush1.bf16.msra.mxu0 0
          %3654 = vmatprep.subr.bf16.mxu0 0
          %3655 = vmatpush1.bf16.msra.mxu0 0
          %3656 = vmatprep.subr.bf16.mxu0 0
          %3657 = vmatpush1.bf16.msra.mxu0 0
          %3658 = vmatprep.subr.bf16.mxu0 0
          %3659 = vmatpush1.bf16.msra.mxu0 0
          %3660 = vmatprep.subr.bf16.mxu0 0
          %3661 = vmatpush1.bf16.msra.mxu0 0
          %3662 = vmatprep.subr.bf16.mxu0 0
          %3663 = vmatpush1.bf16.msra.mxu0 0
          %3664 = vmatprep.subr.bf16.mxu0 0
          %3665 = vmatpush1.bf16.msra.mxu0 0
          %3666 = vmatprep.subr.bf16.mxu0 0
          %3667 = vmatpush1.bf16.msra.mxu0 0
          %3668 = vmatprep.mubr.bf16.mxu0 0
          %3669 = vmatmul.mubr.bf16.gmra.mrb[0].mxu0 %v3634
          %v3670 = vpop.f32.mrb[0].mxu0
          %v3671 = vadd.f32 0.0, %v3670
          %v3672 = vpop.f32.mrb[0].mxu0
          %v3673 = vpop.f32.mrb[0].mxu0
          %v3674 = vpop.f32.mrb[0].mxu0
          %3675 = vdwg.mxu0
          %3676 = vst.msk [vmem:[#allocation20] sm:$0x3] %vm3572, %v3671
        $region140: #{prompt_learner_forward.1} parent=99 // pred_fallthru
          _
        // Predicated region
        $region141: #{prompt_learner_forward.1} parent=99 // pred_check
          %p3677 = pneg %p565
        $region142: #{prompt_learner_forward.1} parent=99 // pred_check_branch
          %3679 = sbr.rel (%p3677) target = $region144
        $region143: #{prompt_learner_forward.1} parent=99 // pred_region
          %s3681 = ssub.s32 32, 32
          %3682 = vsyncadd [#allocation8], %s3681
          %s3684 = sshll.u32 [#allocation20], 4
          %s3685 = int_to_ptr.vmem [resolvable:$true] %s3684
          %3687 = dma.vmem_to_hbm [thread:$0]  %s3685, 32, %s21, [#allocation8]
        $region144: #{prompt_learner_forward.1} parent=99 // pred_fallthru
          _
        // Predicated region
        $region145: #{prompt_learner_forward.1} parent=99 // pred_check
          %p3688 = pneg %p565
        $region146: #{prompt_learner_forward.1} parent=99 // pred_check_branch
          %3690 = sbr.rel (%p3688) target = $region148
        $region147: #{prompt_learner_forward.1} parent=99 // pred_region
          %3691 = dma.done [#allocation8], 32
        $region148: #{prompt_learner_forward.1} parent=99 // pred_fallthru
          _
      $region100: #{prompt_learner_forward.1} parent=5 // pred_fallthru
        _
      %p3692 = scmp.le.s32.totalorder 2, %s47
      // Predicated region
      $region149: #{prompt_learner_forward.1} parent=5 // pred_check
        %p3693 = pneg %p3692
      $region150: #{prompt_learner_forward.1} parent=5 // pred_check_branch
        %3695 = sbr.rel (%p3693) target = $region152
      $region151: #{prompt_learner_forward.1} parent=5 // pred_region
        %s3696 = ssub.s32 %s47, 2
      $region152: #{prompt_learner_forward.1} parent=5 // pred_fallthru
        _
    $region6: #{prompt_learner_forward.1} parent=1 // loop_footer
      %s51 = sadd.s32 1, %s47
    $region7: #{prompt_learner_forward.1} parent=1 // loop_footer_branch
      %46 = sbr.rel target = $region3
    $region8: #{prompt_learner_forward.1} parent=1 // loop_exit
      _
    %3697 = vsyncpa [#allocation7], 1
    %s3698 = scalar_lea.sflag [#allocation7], 1
    %3699 = vsyncpa %s3698, 1
    %3700 = vsyncpa [#allocation10], 1
    %s3701 = scalar_lea.sflag [#allocation10], 1
    %3702 = vsyncpa %s3701, 1
    %3703 = vsyncpa [#allocation13], 1
    %s3704 = scalar_lea.sflag [#allocation13], 1
    %3705 = vsyncpa %s3704, 1
    %3706 = vsyncpa [#allocation16], 1
    %s3707 = scalar_lea.sflag [#allocation16], 1
    %3708 = vsyncpa %s3707, 1
    %3709 = vsyncpa [#allocation19], 1
    %s3710 = scalar_lea.sflag [#allocation19], 1
    %3711 = vsyncpa %s3710, 1
    %3712 = vsyncpa [#allocation8], 1
    %s3713 = scalar_lea.sflag [#allocation8], 1
    %3714 = vsyncpa %s3713, 1

</llo_original>
